<compile_context>
chip_gen: v7x
topology: tpu7x:2x2x1
jax: 0.10.0
libtpu: 0.0.40
codegen_flags: <defaults>
</compile_context>

<pallas_src>
import jax
import jax.numpy as jnp
from jax import lax
from jax.experimental import pallas as pl
from jax.experimental.pallas import tpu as pltpu


# --------------------------------------------------------------------------- #
# Fused forward kernel
# --------------------------------------------------------------------------- #
def _convnet_kernel(x_ref,                       # (28, nb, 28)   input, rows = H
                    cw1_ref, cb1_ref,            # (5, 28, 144), (1, 144)
                    pe1_ref, po1_ref,            # (144, 72), (144, 72)
                    cw2_ref, cb2_ref,            # (3, 72, 144), (1, 144)
                    pe2_ref, po2_ref,            # (144, 72), (144, 72)
                    fw1_ref, fb1_ref,            # (6, 72, 120), (1, 120)
                    fw2_ref, fb2_ref,            # (120, 10), (1, 10)
                    out_ref):                    # (nb, 10)
    f32 = jnp.float32
    nb = x_ref.shape[1]
    x = x_ref[...]                               # (28, nb, 28)  [h, n, w]

    # ---- conv1: 5x5 valid, 1 -> 6 channels, + bias + ReLU ------------------
    # rows = (oh, n), packed cols = ow*6 + c ;  one banded matmul per kernel row
    acc1 = jnp.zeros((24 * nb, 144), f32)
    for i in range(5):
        xs = x[i:i + 24].reshape(24 * nb, 28)
        acc1 = acc1 + jnp.dot(xs, cw1_ref[i], preferred_element_type=f32)
    a1 = jnp.maximum(acc1 + cb1_ref[...], 0.0)   # (24*nb, 144)

    # ---- maxpool 2x2 (24x24 -> 12x12), fully in-register -------------------
    pw = jnp.maximum(jnp.dot(a1, pe1_ref[...], preferred_element_type=f32),
                     jnp.dot(a1, po1_ref[...], preferred_element_type=f32))
    p1 = jnp.max(pw.reshape(12, 2, nb, 72), axis=1)          # (12, nb, 72)

    # ---- conv2: 3x3, pad=1, 6 -> 12 channels, + bias + ReLU ----------------
    # Height pad = two explicit zero rows; width pad is folded into cw2.
    zrow = jnp.zeros((1, nb, 72), f32)
    xh = jnp.concatenate([zrow, p1, zrow], axis=0)           # (14, nb, 72)
    acc2 = jnp.zeros((12 * nb, 144), f32)
    for i in range(3):
        xs = xh[i:i + 12].reshape(12 * nb, 72)
        acc2 = acc2 + jnp.dot(xs, cw2_ref[i], preferred_element_type=f32)
    a2 = jnp.maximum(acc2 + cb2_ref[...], 0.0)               # (12*nb, 144)

    # ---- maxpool 2x2 (12x12 -> 6x6) ----------------------------------------
    pw2 = jnp.maximum(jnp.dot(a2, pe2_ref[...], preferred_element_type=f32),
                      jnp.dot(a2, po2_ref[...], preferred_element_type=f32))
    p2 = jnp.max(pw2.reshape(6, 2, nb, 72), axis=1)          # (6, nb, 72)

    # ---- fc1 (432 -> 120) + ReLU -------------------------------------------
    # fc1 weights are pre-permuted so the packed (h, w*12+c) order matches
    # PyTorch's NCHW flatten.
    h = jnp.zeros((nb, 120), f32)
    for r in range(6):
        h = h + jnp.dot(p2[r], fw1_ref[r], preferred_element_type=f32)
    h = jnp.maximum(h + fb1_ref[...], 0.0)                   # (nb, 120)

    # ---- out (120 -> 10) -----------------------------------------------------
    logits = jnp.dot(h, fw2_ref[...], preferred_element_type=f32) + fb2_ref[...]
    out_ref[...] = logits.astype(out_ref.dtype)


# --------------------------------------------------------------------------- #
# One-time weight preparation (plain JAX, outside the kernel)
# --------------------------------------------------------------------------- #
def prepare_params(params):
    """Re-pack the PyTorch-layout parameters into the kernel's matmul layout."""
    f32 = jnp.float32
    w1 = params["conv1_w"].astype(f32)       # (6, 1, 5, 5)
    b1 = params["conv1_b"].astype(f32)       # (6,)
    w2 = params["conv2_w"].astype(f32)       # (12, 6, 3, 3)
    b2 = params["conv2_b"].astype(f32)       # (12,)
    wf = params["fc1_w"].astype(f32)         # (120, 432)
    bf = params["fc1_b"].astype(f32)         # (120,)
    wo = params["out_w"].astype(f32)         # (10, 120)
    bo = params["out_b"].astype(f32)         # (10,)

    # conv1 as 5 banded matmuls along W:  B1[i, w, ow*6+c] = w1[c,0,i,w-ow]
    w_in = jnp.arange(28)[:, None]
    ow = jnp.arange(24)[None, :]
    delta = w_in - ow                                         # (28, 24)
    valid = ((delta >= 0) & (delta < 5)).astype(f32)
    dcl = jnp.clip(delta, 0, 4)
    w1t = jnp.transpose(w1[:, 0], (1, 2, 0))                  # (5, 5, 6) [i, j, c]
    B1 = w1t[:, dcl, :] * valid[None, :, :, None]             # (5, 28, 24, 6)
    B1 = B1.reshape(5, 28, 24 * 6)
    b1p = jnp.tile(b1, 24).reshape(1, 144)                    # col = ow*6 + c

    # 2x2 pooling along the packed-width axis: even/odd column selection mats.
    def pool_mats(npos, nch):
        p = jnp.arange(npos)[:, None]
        k = jnp.arange(npos // 2)[None, :]
        even = (p == 2 * k).astype(f32)
        odd = (p == 2 * k + 1).astype(f32)
        eye = jnp.eye(nch, dtype=f32)
        E = jnp.einsum("pk,cd->pckd", even, eye).reshape(npos * nch, (npos // 2) * nch)
        O = jnp.einsum("pk,cd->pckd", odd, eye).reshape(npos * nch, (npos // 2) * nch)
        return E, O

    E1, O1 = pool_mats(24, 6)                                 # (144, 72)
    E2, O2 = pool_mats(12, 12)                                # (144, 72)

    # conv2 (3x3, pad=1) as 3 block-banded matmuls (one per kernel row); the
    # width shift/padding lives inside the weight matrix:
    #   B2[i, wi*6+ci, ow*12+co] = w2[co, ci, i, wi-ow+1]   if |wi-ow| <= 1
    wi = jnp.arange(12)[:, None]
    ow12 = jnp.arange(12)[None, :]
    d2 = wi - ow12 + 1                                        # (12, 12)
    valid2 = ((d2 >= 0) & (d2 < 3)).astype(f32)
    d2c = jnp.clip(d2, 0, 2)
    w2t = jnp.transpose(w2, (2, 3, 1, 0))                     # (3, 3, 6, 12) [i, j, ci, co]
    B2 = w2t[:, d2c] * valid2[None, :, :, None, None]         # (3, 12, 12, 6, 12)
    B2 = jnp.transpose(B2, (0, 1, 3, 2, 4)).reshape(3, 72, 144)
    b2p = jnp.tile(b2, 12).reshape(1, 144)                    # col = ow*12 + co

    # fc1: permute columns so the kernel's (h, ow*12+co) feature order matches
    # PyTorch's NCHW flatten index co*36 + h*6 + ow.
    Wf = wf.reshape(120, 12, 6, 6).transpose(2, 3, 1, 0).reshape(6, 72, 120)
    bfp = bf.reshape(1, 120)
    Wo = wo.T                                                 # (120, 10)
    bop = bo.reshape(1, 10)

    return dict(cw1=B1, cb1=b1p, pe1=E1, po1=O1,
                cw2=B2, cb2=b2p, pe2=E2, po2=O2,
                fw1=Wf, fb1=bfp, fw2=Wo, fb2=bop)


# --------------------------------------------------------------------------- #
# Forward wrapper: one fused pallas_call, grid over the batch dimension
# --------------------------------------------------------------------------- #
def convnetwork_forward(x_nchw, prepped, *, block_n=16):
    assert block_n % 8 == 0
    N = x_nchw.shape[0]
    # (N, 1, 28, 28) -> (28, N, 28): rows = image height, lanes = image width.
    x_hnw = jnp.transpose(x_nchw[:, 0], (1, 0, 2))

    if N <= block_n:
        nb, n_pad = N, N                       # single grid step, full batch block
    else:
        nb = block_n
        n_pad = ((N + nb - 1) // nb) * nb      # nb is a multiple of 8 -> legal tiling
        if n_pad != N:
            x_hnw = jnp.pad(x_hnw, ((0, 0), (0, n_pad - N), (0, 0)))

    p = prepped
    full = lambda arr: pl.BlockSpec(arr.shape, (lambda i: (0,) * arr.ndim))

    out = pl.pallas_call(
        _convnet_kernel,
        out_shape=jax.ShapeDtypeStruct((n_pad, 10), jnp.float32),
        grid=(n_pad // nb,),
        in_specs=[
            pl.BlockSpec((28, nb, 28), lambda i: (0, i, 0)),
            full(p["cw1"]), full(p["cb1"]), full(p["pe1"]), full(p["po1"]),
            full(p["cw2"]), full(p["cb2"]), full(p["pe2"]), full(p["po2"]),
            full(p["fw1"]), full(p["fb1"]), full(p["fw2"]), full(p["fb2"]),
        ],
        out_specs=pl.BlockSpec((nb, 10), lambda i: (i, 0)),
        compiler_params=pltpu.CompilerParams(
            dimension_semantics=("parallel",)),
    )(x_hnw,
      p["cw1"], p["cb1"], p["pe1"], p["po1"],
      p["cw2"], p["cb2"], p["pe2"], p["po2"],
      p["fw1"], p["fb1"], p["fw2"], p["fb2"])
    return out[:N]


# --------------------------------------------------------------------------- #
# Deterministic synthetic parameters (PyTorch-layout) and pure-JAX reference
# --------------------------------------------------------------------------- #
def init_params(key):
    ks = jax.random.split(key, 8)

    def unif(k, shape, fan_in):
        bound = 1.0 / jnp.sqrt(jnp.float32(fan_in))
        return jax.random.uniform(k, shape, jnp.float32, -bound, bound)

    return {
        "conv1_w": unif(ks[0], (6, 1, 5, 5), 1 * 5 * 5),
        "conv1_b": unif(ks[1], (6,), 1 * 5 * 5),
        "conv2_w": unif(ks[2], (12, 6, 3, 3), 6 * 3 * 3),
        "conv2_b": unif(ks[3], (12,), 6 * 3 * 3),
        "fc1_w":   unif(ks[4], (120, 12 * 6 * 6), 12 * 6 * 6),
        "fc1_b":   unif(ks[5], (120,), 12 * 6 * 6),
        "out_w":   unif(ks[6], (10, 120), 120),
        "out_b":   unif(ks[7], (10,), 120),
    }


def reference_forward(x_nchw, params):
    """Pure-JAX (XLA) reference with identical PyTorch semantics."""
    dn1 = lax.conv_dimension_numbers(x_nchw.shape, params["conv1_w"].shape,
                                     ("NCHW", "OIHW", "NCHW"))
    y = lax.conv_general_dilated(x_nchw, params["conv1_w"], (1, 1), "VALID",
                                 dimension_numbers=dn1)
    y = jnp.maximum(y + params["conv1_b"][None, :, None, None], 0.0)
    y = lax.reduce_window(y, -jnp.inf, lax.max, (1, 1, 2, 2), (1, 1, 2, 2), "VALID")

    dn2 = lax.conv_dimension_numbers(y.shape, params["conv2_w"].shape,
                                     ("NCHW", "OIHW", "NCHW"))
    y = lax.conv_general_dilated(y, params["conv2_w"], (1, 1), ((1, 1), (1, 1)),
                                 dimension_numbers=dn2)
    y = jnp.maximum(y + params["conv2_b"][None, :, None, None], 0.0)
    y = lax.reduce_window(y, -jnp.inf, lax.max, (1, 1, 2, 2), (1, 1, 2, 2), "VALID")

    feat = y.reshape(y.shape[0], -1)
    h = jnp.maximum(feat @ params["fc1_w"].T + params["fc1_b"], 0.0)
    return h @ params["out_w"].T + params["out_b"]


if __name__ == "__main__":
    key = jax.random.PRNGKey(0)
    kx, kp = jax.random.split(key)

    # fc1 expects 12*6*6 features => the module implies (N, 1, 28, 28) inputs.
    x = jax.random.normal(kx, (2, 1, 28, 28), jnp.float32)
    params = init_params(kp)
    prepped = prepare_params(params)            # one-time weight re-packing

    fwd = jax.jit(convnetwork_forward)
    out = jax.block_until_ready(fwd(x, prepped))
    assert out.shape == (2, 10), out.shape

    ref = reference_forward(x, params)
    # tolerance covers MXU bf16-pass rounding on both sides
    assert jnp.allclose(out, ref, rtol=2e-2, atol=2e-2), "mismatch vs JAX reference"

    print("KERNEL_OK")
</pallas_src>

<mosaic_0001>
module attributes {stable_mosaic.version = 11 : i64} {
  func.func @_convnet_kernel(%arg0: i32, %arg1: memref<28x2x28xf32, #tpu.memory_space<vmem>>, %arg2: memref<5x28x144xf32, #tpu.memory_space<vmem>>, %arg3: memref<1x144xf32, #tpu.memory_space<vmem>>, %arg4: memref<144x72xf32, #tpu.memory_space<vmem>>, %arg5: memref<144x72xf32, #tpu.memory_space<vmem>>, %arg6: memref<3x72x144xf32, #tpu.memory_space<vmem>>, %arg7: memref<1x144xf32, #tpu.memory_space<vmem>>, %arg8: memref<144x72xf32, #tpu.memory_space<vmem>>, %arg9: memref<144x72xf32, #tpu.memory_space<vmem>>, %arg10: memref<6x72x120xf32, #tpu.memory_space<vmem>>, %arg11: memref<1x120xf32, #tpu.memory_space<vmem>>, %arg12: memref<120x10xf32, #tpu.memory_space<vmem>>, %arg13: memref<1x10xf32, #tpu.memory_space<vmem>>, %arg14: memref<2x10xf32, #tpu.memory_space<vmem>>) attributes {dimension_semantics = [#tpu.dimension_semantics<parallel>], iteration_bounds = array<i64: 1>, scalar_prefetch = 0 : i64, scratch_operands = 0 : i64, tpu.core_type = #tpu.core_type<tc>, window_params = [{transform_indices = @transform_0, window_bounds = array<i64: 28, 2, 28>}, {pipeline_mode = #tpu.pipeline_mode<synchronous>, transform_indices = @transform_1, window_bounds = array<i64: 5, 28, 144>}, {pipeline_mode = #tpu.pipeline_mode<synchronous>, transform_indices = @transform_2, window_bounds = array<i64: 1, 144>}, {pipeline_mode = #tpu.pipeline_mode<synchronous>, transform_indices = @transform_3, window_bounds = array<i64: 144, 72>}, {pipeline_mode = #tpu.pipeline_mode<synchronous>, transform_indices = @transform_4, window_bounds = array<i64: 144, 72>}, {pipeline_mode = #tpu.pipeline_mode<synchronous>, transform_indices = @transform_5, window_bounds = array<i64: 3, 72, 144>}, {pipeline_mode = #tpu.pipeline_mode<synchronous>, transform_indices = @transform_6, window_bounds = array<i64: 1, 144>}, {pipeline_mode = #tpu.pipeline_mode<synchronous>, transform_indices = @transform_7, window_bounds = array<i64: 144, 72>}, {pipeline_mode = #tpu.pipeline_mode<synchronous>, transform_indices = @transform_8, window_bounds = array<i64: 144, 72>}, {pipeline_mode = #tpu.pipeline_mode<synchronous>, transform_indices = @transform_9, window_bounds = array<i64: 6, 72, 120>}, {pipeline_mode = #tpu.pipeline_mode<synchronous>, transform_indices = @transform_10, window_bounds = array<i64: 1, 120>}, {pipeline_mode = #tpu.pipeline_mode<synchronous>, transform_indices = @transform_11, window_bounds = array<i64: 120, 10>}, {pipeline_mode = #tpu.pipeline_mode<synchronous>, transform_indices = @transform_12, window_bounds = array<i64: 1, 10>}, {transform_indices = @transform_13, window_bounds = array<i64: 2, 10>}]} {
    %c0 = arith.constant 0 : index
    %c0_0 = arith.constant 0 : index
    %c0_1 = arith.constant 0 : index
    %0 = vector.load %arg1[%c0, %c0_0, %c0_1] : memref<28x2x28xf32, #tpu.memory_space<vmem>>, vector<28x2x28xf32>
    %cst = arith.constant 0.000000e+00 : f32
    %1 = vector.broadcast %cst : f32 to vector<48x144xf32>
    %2 = vector.extract_strided_slice %0 {offsets = [0, 0, 0], sizes = [24, 2, 28], strides = [1, 1, 1]} : vector<28x2x28xf32> to vector<24x2x28xf32>
    %3 = vector.shape_cast %2 : vector<24x2x28xf32> to vector<48x28xf32>
    %c0_2 = arith.constant 0 : index
    %c0_3 = arith.constant 0 : index
    %c0_4 = arith.constant 0 : index
    %4 = vector.load %arg2[%c0_2, %c0_3, %c0_4] : memref<5x28x144xf32, #tpu.memory_space<vmem>>, vector<1x28x144xf32>
    %5 = vector.shape_cast %4 : vector<1x28x144xf32> to vector<28x144xf32>
    %cst_5 = arith.constant dense<0.000000e+00> : vector<48x144xf32>
    %6 = tpu.matmul %3, %5, %cst_5 {dimension_numbers = #tpu.dot_dimension_numbers<[1], [0], [0], [1], [0, 0, 1, 1], [], []>} : vector<48x28xf32>, vector<28x144xf32>, vector<48x144xf32> -> vector<48x144xf32>
    %7 = arith.addf %1, %6 : vector<48x144xf32>
    %8 = vector.extract_strided_slice %0 {offsets = [1, 0, 0], sizes = [24, 2, 28], strides = [1, 1, 1]} : vector<28x2x28xf32> to vector<24x2x28xf32>
    %9 = vector.shape_cast %8 : vector<24x2x28xf32> to vector<48x28xf32>
    %c1 = arith.constant 1 : index
    %c0_6 = arith.constant 0 : index
    %c0_7 = arith.constant 0 : index
    %10 = vector.load %arg2[%c1, %c0_6, %c0_7] : memref<5x28x144xf32, #tpu.memory_space<vmem>>, vector<1x28x144xf32>
    %11 = vector.shape_cast %10 : vector<1x28x144xf32> to vector<28x144xf32>
    %cst_8 = arith.constant dense<0.000000e+00> : vector<48x144xf32>
    %12 = tpu.matmul %9, %11, %cst_8 {dimension_numbers = #tpu.dot_dimension_numbers<[1], [0], [0], [1], [0, 0, 1, 1], [], []>} : vector<48x28xf32>, vector<28x144xf32>, vector<48x144xf32> -> vector<48x144xf32>
    %13 = arith.addf %7, %12 : vector<48x144xf32>
    %14 = vector.extract_strided_slice %0 {offsets = [2, 0, 0], sizes = [24, 2, 28], strides = [1, 1, 1]} : vector<28x2x28xf32> to vector<24x2x28xf32>
    %15 = vector.shape_cast %14 : vector<24x2x28xf32> to vector<48x28xf32>
    %c2 = arith.constant 2 : index
    %c0_9 = arith.constant 0 : index
    %c0_10 = arith.constant 0 : index
    %16 = vector.load %arg2[%c2, %c0_9, %c0_10] : memref<5x28x144xf32, #tpu.memory_space<vmem>>, vector<1x28x144xf32>
    %17 = vector.shape_cast %16 : vector<1x28x144xf32> to vector<28x144xf32>
    %cst_11 = arith.constant dense<0.000000e+00> : vector<48x144xf32>
    %18 = tpu.matmul %15, %17, %cst_11 {dimension_numbers = #tpu.dot_dimension_numbers<[1], [0], [0], [1], [0, 0, 1, 1], [], []>} : vector<48x28xf32>, vector<28x144xf32>, vector<48x144xf32> -> vector<48x144xf32>
    %19 = arith.addf %13, %18 : vector<48x144xf32>
    %20 = vector.extract_strided_slice %0 {offsets = [3, 0, 0], sizes = [24, 2, 28], strides = [1, 1, 1]} : vector<28x2x28xf32> to vector<24x2x28xf32>
    %21 = vector.shape_cast %20 : vector<24x2x28xf32> to vector<48x28xf32>
    %c3 = arith.constant 3 : index
    %c0_12 = arith.constant 0 : index
    %c0_13 = arith.constant 0 : index
    %22 = vector.load %arg2[%c3, %c0_12, %c0_13] : memref<5x28x144xf32, #tpu.memory_space<vmem>>, vector<1x28x144xf32>
    %23 = vector.shape_cast %22 : vector<1x28x144xf32> to vector<28x144xf32>
    %cst_14 = arith.constant dense<0.000000e+00> : vector<48x144xf32>
    %24 = tpu.matmul %21, %23, %cst_14 {dimension_numbers = #tpu.dot_dimension_numbers<[1], [0], [0], [1], [0, 0, 1, 1], [], []>} : vector<48x28xf32>, vector<28x144xf32>, vector<48x144xf32> -> vector<48x144xf32>
    %25 = arith.addf %19, %24 : vector<48x144xf32>
    %26 = vector.extract_strided_slice %0 {offsets = [4, 0, 0], sizes = [24, 2, 28], strides = [1, 1, 1]} : vector<28x2x28xf32> to vector<24x2x28xf32>
    %27 = vector.shape_cast %26 : vector<24x2x28xf32> to vector<48x28xf32>
    %c4 = arith.constant 4 : index
    %c0_15 = arith.constant 0 : index
    %c0_16 = arith.constant 0 : index
    %28 = vector.load %arg2[%c4, %c0_15, %c0_16] : memref<5x28x144xf32, #tpu.memory_space<vmem>>, vector<1x28x144xf32>
    %29 = vector.shape_cast %28 : vector<1x28x144xf32> to vector<28x144xf32>
    %cst_17 = arith.constant dense<0.000000e+00> : vector<48x144xf32>
    %30 = tpu.matmul %27, %29, %cst_17 {dimension_numbers = #tpu.dot_dimension_numbers<[1], [0], [0], [1], [0, 0, 1, 1], [], []>} : vector<48x28xf32>, vector<28x144xf32>, vector<48x144xf32> -> vector<48x144xf32>
    %31 = arith.addf %25, %30 : vector<48x144xf32>
    %c0_18 = arith.constant 0 : index
    %c0_19 = arith.constant 0 : index
    %32 = vector.load %arg3[%c0_18, %c0_19] : memref<1x144xf32, #tpu.memory_space<vmem>>, vector<1x144xf32>
    %33 = vector.broadcast %32 : vector<1x144xf32> to vector<48x144xf32>
    %34 = arith.addf %31, %33 : vector<48x144xf32>
    %cst_20 = arith.constant 0.000000e+00 : f32
    %35 = vector.broadcast %cst_20 : f32 to vector<48x144xf32>
    %36 = arith.maximumf %34, %35 : vector<48x144xf32>
    %c0_21 = arith.constant 0 : index
    %c0_22 = arith.constant 0 : index
    %37 = vector.load %arg4[%c0_21, %c0_22] : memref<144x72xf32, #tpu.memory_space<vmem>>, vector<144x72xf32>
    %cst_23 = arith.constant dense<0.000000e+00> : vector<48x72xf32>
    %38 = tpu.matmul %36, %37, %cst_23 {dimension_numbers = #tpu.dot_dimension_numbers<[1], [0], [0], [1], [0, 0, 1, 1], [], []>} : vector<48x144xf32>, vector<144x72xf32>, vector<48x72xf32> -> vector<48x72xf32>
    %c0_24 = arith.constant 0 : index
    %c0_25 = arith.constant 0 : index
    %39 = vector.load %arg5[%c0_24, %c0_25] : memref<144x72xf32, #tpu.memory_space<vmem>>, vector<144x72xf32>
    %cst_26 = arith.constant dense<0.000000e+00> : vector<48x72xf32>
    %40 = tpu.matmul %36, %39, %cst_26 {dimension_numbers = #tpu.dot_dimension_numbers<[1], [0], [0], [1], [0, 0, 1, 1], [], []>} : vector<48x144xf32>, vector<144x72xf32>, vector<48x72xf32> -> vector<48x72xf32>
    %41 = arith.maximumf %38, %40 : vector<48x72xf32>
    %42 = vector.shape_cast %41 : vector<48x72xf32> to vector<12x2x2x72xf32>
    %cst_27 = arith.constant dense<0xFF800000> : vector<12x2x72xf32>
    %43 = vector.multi_reduction <maximumf>, %42, %cst_27 [1] : vector<12x2x2x72xf32> to vector<12x2x72xf32>
    %cst_28 = arith.constant 0.000000e+00 : f32
    %44 = vector.broadcast %cst_28 : f32 to vector<1x2x72xf32>
    %45 = tpu.concatenate %44, %43, %44 in 0 : vector<1x2x72xf32>, vector<12x2x72xf32>, vector<1x2x72xf32> -> vector<14x2x72xf32>
    %cst_29 = arith.constant 0.000000e+00 : f32
    %46 = vector.broadcast %cst_29 : f32 to vector<24x144xf32>
    %47 = vector.extract_strided_slice %45 {offsets = [0, 0, 0], sizes = [12, 2, 72], strides = [1, 1, 1]} : vector<14x2x72xf32> to vector<12x2x72xf32>
    %48 = vector.shape_cast %47 : vector<12x2x72xf32> to vector<24x72xf32>
    %c0_30 = arith.constant 0 : index
    %c0_31 = arith.constant 0 : index
    %c0_32 = arith.constant 0 : index
    %49 = vector.load %arg6[%c0_30, %c0_31, %c0_32] : memref<3x72x144xf32, #tpu.memory_space<vmem>>, vector<1x72x144xf32>
    %50 = vector.shape_cast %49 : vector<1x72x144xf32> to vector<72x144xf32>
    %cst_33 = arith.constant dense<0.000000e+00> : vector<24x144xf32>
    %51 = tpu.matmul %48, %50, %cst_33 {dimension_numbers = #tpu.dot_dimension_numbers<[1], [0], [0], [1], [0, 0, 1, 1], [], []>} : vector<24x72xf32>, vector<72x144xf32>, vector<24x144xf32> -> vector<24x144xf32>
    %52 = arith.addf %46, %51 : vector<24x144xf32>
    %53 = vector.extract_strided_slice %45 {offsets = [1, 0, 0], sizes = [12, 2, 72], strides = [1, 1, 1]} : vector<14x2x72xf32> to vector<12x2x72xf32>
    %54 = vector.shape_cast %53 : vector<12x2x72xf32> to vector<24x72xf32>
    %c1_34 = arith.constant 1 : index
    %c0_35 = arith.constant 0 : index
    %c0_36 = arith.constant 0 : index
    %55 = vector.load %arg6[%c1_34, %c0_35, %c0_36] : memref<3x72x144xf32, #tpu.memory_space<vmem>>, vector<1x72x144xf32>
    %56 = vector.shape_cast %55 : vector<1x72x144xf32> to vector<72x144xf32>
    %cst_37 = arith.constant dense<0.000000e+00> : vector<24x144xf32>
    %57 = tpu.matmul %54, %56, %cst_37 {dimension_numbers = #tpu.dot_dimension_numbers<[1], [0], [0], [1], [0, 0, 1, 1], [], []>} : vector<24x72xf32>, vector<72x144xf32>, vector<24x144xf32> -> vector<24x144xf32>
    %58 = arith.addf %52, %57 : vector<24x144xf32>
    %59 = vector.extract_strided_slice %45 {offsets = [2, 0, 0], sizes = [12, 2, 72], strides = [1, 1, 1]} : vector<14x2x72xf32> to vector<12x2x72xf32>
    %60 = vector.shape_cast %59 : vector<12x2x72xf32> to vector<24x72xf32>
    %c2_38 = arith.constant 2 : index
    %c0_39 = arith.constant 0 : index
    %c0_40 = arith.constant 0 : index
    %61 = vector.load %arg6[%c2_38, %c0_39, %c0_40] : memref<3x72x144xf32, #tpu.memory_space<vmem>>, vector<1x72x144xf32>
    %62 = vector.shape_cast %61 : vector<1x72x144xf32> to vector<72x144xf32>
    %cst_41 = arith.constant dense<0.000000e+00> : vector<24x144xf32>
    %63 = tpu.matmul %60, %62, %cst_41 {dimension_numbers = #tpu.dot_dimension_numbers<[1], [0], [0], [1], [0, 0, 1, 1], [], []>} : vector<24x72xf32>, vector<72x144xf32>, vector<24x144xf32> -> vector<24x144xf32>
    %64 = arith.addf %58, %63 : vector<24x144xf32>
    %c0_42 = arith.constant 0 : index
    %c0_43 = arith.constant 0 : index
    %65 = vector.load %arg7[%c0_42, %c0_43] : memref<1x144xf32, #tpu.memory_space<vmem>>, vector<1x144xf32>
    %66 = vector.broadcast %65 : vector<1x144xf32> to vector<24x144xf32>
    %67 = arith.addf %64, %66 : vector<24x144xf32>
    %cst_44 = arith.constant 0.000000e+00 : f32
    %68 = vector.broadcast %cst_44 : f32 to vector<24x144xf32>
    %69 = arith.maximumf %67, %68 : vector<24x144xf32>
    %c0_45 = arith.constant 0 : index
    %c0_46 = arith.constant 0 : index
    %70 = vector.load %arg8[%c0_45, %c0_46] : memref<144x72xf32, #tpu.memory_space<vmem>>, vector<144x72xf32>
    %cst_47 = arith.constant dense<0.000000e+00> : vector<24x72xf32>
    %71 = tpu.matmul %69, %70, %cst_47 {dimension_numbers = #tpu.dot_dimension_numbers<[1], [0], [0], [1], [0, 0, 1, 1], [], []>} : vector<24x144xf32>, vector<144x72xf32>, vector<24x72xf32> -> vector<24x72xf32>
    %c0_48 = arith.constant 0 : index
    %c0_49 = arith.constant 0 : index
    %72 = vector.load %arg9[%c0_48, %c0_49] : memref<144x72xf32, #tpu.memory_space<vmem>>, vector<144x72xf32>
    %cst_50 = arith.constant dense<0.000000e+00> : vector<24x72xf32>
    %73 = tpu.matmul %69, %72, %cst_50 {dimension_numbers = #tpu.dot_dimension_numbers<[1], [0], [0], [1], [0, 0, 1, 1], [], []>} : vector<24x144xf32>, vector<144x72xf32>, vector<24x72xf32> -> vector<24x72xf32>
    %74 = arith.maximumf %71, %73 : vector<24x72xf32>
    %75 = vector.shape_cast %74 : vector<24x72xf32> to vector<6x2x2x72xf32>
    %cst_51 = arith.constant dense<0xFF800000> : vector<6x2x72xf32>
    %76 = vector.multi_reduction <maximumf>, %75, %cst_51 [1] : vector<6x2x2x72xf32> to vector<6x2x72xf32>
    %cst_52 = arith.constant 0.000000e+00 : f32
    %77 = vector.broadcast %cst_52 : f32 to vector<2x120xf32>
    %78 = vector.extract_strided_slice %76 {offsets = [0, 0, 0], sizes = [1, 2, 72], strides = [1, 1, 1]} : vector<6x2x72xf32> to vector<1x2x72xf32>
    %79 = vector.shape_cast %78 : vector<1x2x72xf32> to vector<2x72xf32>
    %c0_53 = arith.constant 0 : index
    %c0_54 = arith.constant 0 : index
    %c0_55 = arith.constant 0 : index
    %80 = vector.load %arg10[%c0_53, %c0_54, %c0_55] : memref<6x72x120xf32, #tpu.memory_space<vmem>>, vector<1x72x120xf32>
    %81 = vector.shape_cast %80 : vector<1x72x120xf32> to vector<72x120xf32>
    %cst_56 = arith.constant dense<0.000000e+00> : vector<2x120xf32>
    %82 = tpu.matmul %79, %81, %cst_56 {dimension_numbers = #tpu.dot_dimension_numbers<[1], [0], [0], [1], [0, 0, 1, 1], [], []>} : vector<2x72xf32>, vector<72x120xf32>, vector<2x120xf32> -> vector<2x120xf32>
    %83 = arith.addf %77, %82 : vector<2x120xf32>
    %84 = vector.extract_strided_slice %76 {offsets = [1, 0, 0], sizes = [1, 2, 72], strides = [1, 1, 1]} : vector<6x2x72xf32> to vector<1x2x72xf32>
    %85 = vector.shape_cast %84 : vector<1x2x72xf32> to vector<2x72xf32>
    %c1_57 = arith.constant 1 : index
    %c0_58 = arith.constant 0 : index
    %c0_59 = arith.constant 0 : index
    %86 = vector.load %arg10[%c1_57, %c0_58, %c0_59] : memref<6x72x120xf32, #tpu.memory_space<vmem>>, vector<1x72x120xf32>
    %87 = vector.shape_cast %86 : vector<1x72x120xf32> to vector<72x120xf32>
    %cst_60 = arith.constant dense<0.000000e+00> : vector<2x120xf32>
    %88 = tpu.matmul %85, %87, %cst_60 {dimension_numbers = #tpu.dot_dimension_numbers<[1], [0], [0], [1], [0, 0, 1, 1], [], []>} : vector<2x72xf32>, vector<72x120xf32>, vector<2x120xf32> -> vector<2x120xf32>
    %89 = arith.addf %83, %88 : vector<2x120xf32>
    %90 = vector.extract_strided_slice %76 {offsets = [2, 0, 0], sizes = [1, 2, 72], strides = [1, 1, 1]} : vector<6x2x72xf32> to vector<1x2x72xf32>
    %91 = vector.shape_cast %90 : vector<1x2x72xf32> to vector<2x72xf32>
    %c2_61 = arith.constant 2 : index
    %c0_62 = arith.constant 0 : index
    %c0_63 = arith.constant 0 : index
    %92 = vector.load %arg10[%c2_61, %c0_62, %c0_63] : memref<6x72x120xf32, #tpu.memory_space<vmem>>, vector<1x72x120xf32>
    %93 = vector.shape_cast %92 : vector<1x72x120xf32> to vector<72x120xf32>
    %cst_64 = arith.constant dense<0.000000e+00> : vector<2x120xf32>
    %94 = tpu.matmul %91, %93, %cst_64 {dimension_numbers = #tpu.dot_dimension_numbers<[1], [0], [0], [1], [0, 0, 1, 1], [], []>} : vector<2x72xf32>, vector<72x120xf32>, vector<2x120xf32> -> vector<2x120xf32>
    %95 = arith.addf %89, %94 : vector<2x120xf32>
    %96 = vector.extract_strided_slice %76 {offsets = [3, 0, 0], sizes = [1, 2, 72], strides = [1, 1, 1]} : vector<6x2x72xf32> to vector<1x2x72xf32>
    %97 = vector.shape_cast %96 : vector<1x2x72xf32> to vector<2x72xf32>
    %c3_65 = arith.constant 3 : index
    %c0_66 = arith.constant 0 : index
    %c0_67 = arith.constant 0 : index
    %98 = vector.load %arg10[%c3_65, %c0_66, %c0_67] : memref<6x72x120xf32, #tpu.memory_space<vmem>>, vector<1x72x120xf32>
    %99 = vector.shape_cast %98 : vector<1x72x120xf32> to vector<72x120xf32>
    %cst_68 = arith.constant dense<0.000000e+00> : vector<2x120xf32>
    %100 = tpu.matmul %97, %99, %cst_68 {dimension_numbers = #tpu.dot_dimension_numbers<[1], [0], [0], [1], [0, 0, 1, 1], [], []>} : vector<2x72xf32>, vector<72x120xf32>, vector<2x120xf32> -> vector<2x120xf32>
    %101 = arith.addf %95, %100 : vector<2x120xf32>
    %102 = vector.extract_strided_slice %76 {offsets = [4, 0, 0], sizes = [1, 2, 72], strides = [1, 1, 1]} : vector<6x2x72xf32> to vector<1x2x72xf32>
    %103 = vector.shape_cast %102 : vector<1x2x72xf32> to vector<2x72xf32>
    %c4_69 = arith.constant 4 : index
    %c0_70 = arith.constant 0 : index
    %c0_71 = arith.constant 0 : index
    %104 = vector.load %arg10[%c4_69, %c0_70, %c0_71] : memref<6x72x120xf32, #tpu.memory_space<vmem>>, vector<1x72x120xf32>
    %105 = vector.shape_cast %104 : vector<1x72x120xf32> to vector<72x120xf32>
    %cst_72 = arith.constant dense<0.000000e+00> : vector<2x120xf32>
    %106 = tpu.matmul %103, %105, %cst_72 {dimension_numbers = #tpu.dot_dimension_numbers<[1], [0], [0], [1], [0, 0, 1, 1], [], []>} : vector<2x72xf32>, vector<72x120xf32>, vector<2x120xf32> -> vector<2x120xf32>
    %107 = arith.addf %101, %106 : vector<2x120xf32>
    %108 = vector.extract_strided_slice %76 {offsets = [5, 0, 0], sizes = [1, 2, 72], strides = [1, 1, 1]} : vector<6x2x72xf32> to vector<1x2x72xf32>
    %109 = vector.shape_cast %108 : vector<1x2x72xf32> to vector<2x72xf32>
    %c5 = arith.constant 5 : index
    %c0_73 = arith.constant 0 : index
    %c0_74 = arith.constant 0 : index
    %110 = vector.load %arg10[%c5, %c0_73, %c0_74] : memref<6x72x120xf32, #tpu.memory_space<vmem>>, vector<1x72x120xf32>
    %111 = vector.shape_cast %110 : vector<1x72x120xf32> to vector<72x120xf32>
    %cst_75 = arith.constant dense<0.000000e+00> : vector<2x120xf32>
    %112 = tpu.matmul %109, %111, %cst_75 {dimension_numbers = #tpu.dot_dimension_numbers<[1], [0], [0], [1], [0, 0, 1, 1], [], []>} : vector<2x72xf32>, vector<72x120xf32>, vector<2x120xf32> -> vector<2x120xf32>
    %113 = arith.addf %107, %112 : vector<2x120xf32>
    %c0_76 = arith.constant 0 : index
    %c0_77 = arith.constant 0 : index
    %114 = vector.load %arg11[%c0_76, %c0_77] : memref<1x120xf32, #tpu.memory_space<vmem>>, vector<1x120xf32>
    %115 = vector.broadcast %114 : vector<1x120xf32> to vector<2x120xf32>
    %116 = arith.addf %113, %115 : vector<2x120xf32>
    %cst_78 = arith.constant 0.000000e+00 : f32
    %117 = vector.broadcast %cst_78 : f32 to vector<2x120xf32>
    %118 = arith.maximumf %116, %117 : vector<2x120xf32>
    %c0_79 = arith.constant 0 : index
    %c0_80 = arith.constant 0 : index
    %119 = vector.load %arg12[%c0_79, %c0_80] : memref<120x10xf32, #tpu.memory_space<vmem>>, vector<120x10xf32>
    %cst_81 = arith.constant dense<0.000000e+00> : vector<2x10xf32>
    %120 = tpu.matmul %118, %119, %cst_81 {dimension_numbers = #tpu.dot_dimension_numbers<[1], [0], [0], [1], [0, 0, 1, 1], [], []>} : vector<2x120xf32>, vector<120x10xf32>, vector<2x10xf32> -> vector<2x10xf32>
    %c0_82 = arith.constant 0 : index
    %c0_83 = arith.constant 0 : index
    %121 = vector.load %arg13[%c0_82, %c0_83] : memref<1x10xf32, #tpu.memory_space<vmem>>, vector<1x10xf32>
    %122 = vector.broadcast %121 : vector<1x10xf32> to vector<2x10xf32>
    %123 = arith.addf %120, %122 : vector<2x10xf32>
    %c0_84 = arith.constant 0 : index
    %c0_85 = arith.constant 0 : index
    %124 = vector.load %arg14[%c0_84, %c0_85] : memref<2x10xf32, #tpu.memory_space<vmem>>, vector<2x10xf32>
    tpu.vector_store %arg14[%c0_84, %c0_85], %123 {strides = array<i32>} : memref<2x10xf32, #tpu.memory_space<vmem>>, vector<2x10xf32>,
    return
  }
  func.func @transform_0(%arg0: i32) -> (i32, i32, i32) {
    %c0_i32 = arith.constant 0 : i32
    %c0_i32_0 = arith.constant 0 : i32
    %c0_i32_1 = arith.constant 0 : i32
    return %c0_i32, %arg0, %c0_i32_0 : i32, i32, i32
  }
  func.func @transform_1(%arg0: i32) -> (i32, i32, i32) {
    %c0_i32 = arith.constant 0 : i32
    %c0_i32_0 = arith.constant 0 : i32
    %c0_i32_1 = arith.constant 0 : i32
    %c0_i32_2 = arith.constant 0 : i32
    return %c0_i32, %c0_i32_0, %c0_i32_1 : i32, i32, i32
  }
  func.func @transform_2(%arg0: i32) -> (i32, i32) {
    %c0_i32 = arith.constant 0 : i32
    %c0_i32_0 = arith.constant 0 : i32
    %c0_i32_1 = arith.constant 0 : i32
    return %c0_i32, %c0_i32_0 : i32, i32
  }
  func.func @transform_3(%arg0: i32) -> (i32, i32) {
    %c0_i32 = arith.constant 0 : i32
    %c0_i32_0 = arith.constant 0 : i32
    %c0_i32_1 = arith.constant 0 : i32
    return %c0_i32, %c0_i32_0 : i32, i32
  }
  func.func @transform_4(%arg0: i32) -> (i32, i32) {
    %c0_i32 = arith.constant 0 : i32
    %c0_i32_0 = arith.constant 0 : i32
    %c0_i32_1 = arith.constant 0 : i32
    return %c0_i32, %c0_i32_0 : i32, i32
  }
  func.func @transform_5(%arg0: i32) -> (i32, i32, i32) {
    %c0_i32 = arith.constant 0 : i32
    %c0_i32_0 = arith.constant 0 : i32
    %c0_i32_1 = arith.constant 0 : i32
    %c0_i32_2 = arith.constant 0 : i32
    return %c0_i32, %c0_i32_0, %c0_i32_1 : i32, i32, i32
  }
  func.func @transform_6(%arg0: i32) -> (i32, i32) {
    %c0_i32 = arith.constant 0 : i32
    %c0_i32_0 = arith.constant 0 : i32
    %c0_i32_1 = arith.constant 0 : i32
    return %c0_i32, %c0_i32_0 : i32, i32
  }
  func.func @transform_7(%arg0: i32) -> (i32, i32) {
    %c0_i32 = arith.constant 0 : i32
    %c0_i32_0 = arith.constant 0 : i32
    %c0_i32_1 = arith.constant 0 : i32
    return %c0_i32, %c0_i32_0 : i32, i32
  }
  func.func @transform_8(%arg0: i32) -> (i32, i32) {
    %c0_i32 = arith.constant 0 : i32
    %c0_i32_0 = arith.constant 0 : i32
    %c0_i32_1 = arith.constant 0 : i32
    return %c0_i32, %c0_i32_0 : i32, i32
  }
  func.func @transform_9(%arg0: i32) -> (i32, i32, i32) {
    %c0_i32 = arith.constant 0 : i32
    %c0_i32_0 = arith.constant 0 : i32
    %c0_i32_1 = arith.constant 0 : i32
    %c0_i32_2 = arith.constant 0 : i32
    return %c0_i32, %c0_i32_0, %c0_i32_1 : i32, i32, i32
  }
  func.func @transform_10(%arg0: i32) -> (i32, i32) {
    %c0_i32 = arith.constant 0 : i32
    %c0_i32_0 = arith.constant 0 : i32
    %c0_i32_1 = arith.constant 0 : i32
    return %c0_i32, %c0_i32_0 : i32, i32
  }
  func.func @transform_11(%arg0: i32) -> (i32, i32) {
    %c0_i32 = arith.constant 0 : i32
    %c0_i32_0 = arith.constant 0 : i32
    %c0_i32_1 = arith.constant 0 : i32
    return %c0_i32, %c0_i32_0 : i32, i32
  }
  func.func @transform_12(%arg0: i32) -> (i32, i32) {
    %c0_i32 = arith.constant 0 : i32
    %c0_i32_0 = arith.constant 0 : i32
    %c0_i32_1 = arith.constant 0 : i32
    return %c0_i32, %c0_i32_0 : i32, i32
  }
  func.func @transform_13(%arg0: i32) -> (i32, i32) {
    %c0_i32 = arith.constant 0 : i32
    %c0_i32_0 = arith.constant 0 : i32
    return %arg0, %c0_i32 : i32, i32
  }
}

</mosaic_0001>

<llo_original>
// kernel: convnetwork_forward.1
$region0: #{convnetwork_forward.1}
  #allocation0 [shape = 'u32[]', space=smem, size = 0x4, offset = 0x4, fixed_abs, tag = 'smem constant byte address 0x4 - core index']
  #allocation1 [shape = 'u32[144,128]{1,0:T(1,128)}', space=vmem, size = 0x12000, scoped, tag = 'internal scratch']
  %s0 = inlined_call_operand.vmem [shape: f32[28,2,28], index: 0, kind: input, shape index: {}]
  %s1 = inlined_call_operand.hbm [shape: f32[5,28,144], index: 1, kind: input, shape index: {}]
  %s2 = inlined_call_operand.hbm [shape: f32[1,144], index: 2, kind: input, shape index: {}]
  %s3 = inlined_call_operand.vmem [shape: f32[144,72], index: 3, kind: input, shape index: {}]
  %s4 = inlined_call_operand.vmem [shape: f32[144,72], index: 4, kind: input, shape index: {}]
  %s5 = inlined_call_operand.hbm [shape: f32[3,72,144], index: 5, kind: input, shape index: {}]
  %s6 = inlined_call_operand.hbm [shape: f32[1,144], index: 6, kind: input, shape index: {}]
  %s7 = inlined_call_operand.hbm [shape: f32[144,72], index: 7, kind: input, shape index: {}]
  %s8 = inlined_call_operand.hbm [shape: f32[144,72], index: 8, kind: input, shape index: {}]
  %s9 = inlined_call_operand.hbm [shape: f32[6,72,120], index: 9, kind: input, shape index: {}]
  %s10 = inlined_call_operand.vmem [shape: f32[1,120], index: 10, kind: input, shape index: {}]
  %s11 = inlined_call_operand.vmem [shape: f32[120,10], index: 11, kind: input, shape index: {}]
  %s12 = inlined_call_operand.hbm [shape: f32[1,10], index: 12, kind: input, shape index: {}]
  %s13 = inlined_call_operand.hbm [shape: f32[2,10], index: 13, kind: output, shape index: {}]
  %s14 = sld [smem:[#allocation0]]
  $region94: #{convnetwork_forward.1} parent=0
    _
  %s16 = ssub.s32 1, %s14
  %s17 = scalar_select 0, %s16, %s14
  $region1: #{convnetwork_forward.1} parent=0
    #allocation2 [shape = 'u8[163840]{0}', space=vmem, size = 0x28000, scoped, tag = 'input window, operand 1, single buffered']
    #allocation3 [shape = 's32[1]{0}', space=sflag, size = 0x4, scoped, tag = 'scoped memory for convnetwork_forward.1']
    #allocation4 [shape = 's32[1]{0}', space=sflag, size = 0x4, scoped, tag = 'scoped memory for convnetwork_forward.1']
    #allocation5 [shape = 'u8[1024]{0}', space=vmem, size = 0x400, scoped, tag = 'input window, operand 2, single buffered']
    #allocation6 [shape = 's32[1]{0}', space=sflag, size = 0x4, scoped, tag = 'scoped memory for convnetwork_forward.1']
    #allocation7 [shape = 'u8[221184]{0}', space=vmem, size = 0x36000, scoped, tag = 'input window, operand 5, single buffered']
    #allocation8 [shape = 'u8[1024]{0}', space=vmem, size = 0x400, scoped, tag = 'input window, operand 6, single buffered']
    #allocation9 [shape = 's32[1]{0}', space=sflag, size = 0x4, scoped, tag = 'scoped memory for convnetwork_forward.1']
    #allocation10 [shape = 'u8[73728]{0}', space=vmem, size = 0x12000, scoped, tag = 'input window, operand 7, single buffered']
    #allocation11 [shape = 'u8[73728]{0}', space=vmem, size = 0x12000, scoped, tag = 'input window, operand 8, single buffered']
    #allocation12 [shape = 's32[1]{0}', space=sflag, size = 0x4, scoped, tag = 'scoped memory for convnetwork_forward.1']
    #allocation13 [shape = 'u8[221184]{0}', space=vmem, size = 0x36000, scoped, tag = 'input window, operand 9, single buffered']
    #allocation14 [shape = 'u8[512]{0}', space=vmem, size = 0x400, scoped, tag = 'input window, operand 12, single buffered']
    #allocation15 [shape = 's32[1]{0}', space=sflag, size = 0x4, scoped, tag = 'scoped memory for convnetwork_forward.1']
    #allocation16 [shape = 'u8[1024]{0}', space=vmem, size = 0x400, scoped, tag = 'output window, operand 0, single buffered']
    %18 = vsyncpa [#allocation3], 0
    %19 = vsyncpa [#allocation6], 0
    %20 = vsyncpa [#allocation9], 0
    %21 = vsyncpa [#allocation12], 0
    %22 = vsyncpa [#allocation15], 0
    %23 = vsyncpa [#allocation4], 0
    // Predicated region
    $region2: #{convnetwork_forward.1} parent=1 // pred_check
      _
    $region3: #{convnetwork_forward.1} parent=1 // pred_check_branch
      %25 = sbr.rel (0) target = $region5
    $region4: #{convnetwork_forward.1} parent=1 // pred_region
      _
    $region5: #{convnetwork_forward.1} parent=1 // pred_fallthru
      _
    // Predicated region
    $region6: #{convnetwork_forward.1} parent=1 // pred_check
      _
    $region7: #{convnetwork_forward.1} parent=1 // pred_check_branch
      %27 = sbr.rel (0) target = $region9
    $region8: #{convnetwork_forward.1} parent=1 // pred_region
      %s29 = ssub.s32 5120, 5120
      %30 = vsyncadd [#allocation3], %s29
      %s31 = sshll.u32 [#allocation2], 4
      %s32 = int_to_ptr.vmem [resolvable:$true] %s31
      %37 = dma.hbm_to_vmem [thread:$0]  %s1, 5120, %s32, [#allocation3], 256, 256, 16
    $region9: #{convnetwork_forward.1} parent=1 // pred_fallthru
      _
    // Predicated region
    $region10: #{convnetwork_forward.1} parent=1 // pred_check
      _
    $region11: #{convnetwork_forward.1} parent=1 // pred_check_branch
      %39 = sbr.rel (0) target = $region13
    $region12: #{convnetwork_forward.1} parent=1 // pred_region
      %s41 = ssub.s32 32, 32
      %42 = vsyncadd [#allocation6], %s41
      %s44 = sshll.u32 [#allocation5], 4
      %s45 = int_to_ptr.vmem [resolvable:$true] %s44
      %47 = dma.hbm_to_vmem [thread:$0]  %s2, 32, %s45, [#allocation6]
    $region13: #{convnetwork_forward.1} parent=1 // pred_fallthru
      _
    // Predicated region
    $region14: #{convnetwork_forward.1} parent=1 // pred_check
      _
    $region15: #{convnetwork_forward.1} parent=1 // pred_check_branch
      %49 = sbr.rel (0) target = $region17
    $region16: #{convnetwork_forward.1} parent=1 // pred_region
      _
    $region17: #{convnetwork_forward.1} parent=1 // pred_fallthru
      _
    // Predicated region
    $region18: #{convnetwork_forward.1} parent=1 // pred_check
      _
    $region19: #{convnetwork_forward.1} parent=1 // pred_check_branch
      %51 = sbr.rel (0) target = $region21
    $region20: #{convnetwork_forward.1} parent=1 // pred_region
      _
    $region21: #{convnetwork_forward.1} parent=1 // pred_fallthru
      _
    // Predicated region
    $region22: #{convnetwork_forward.1} parent=1 // pred_check
      _
    $region23: #{convnetwork_forward.1} parent=1 // pred_check_branch
      %53 = sbr.rel (0) target = $region25
    $region24: #{convnetwork_forward.1} parent=1 // pred_region
      %s55 = ssub.s32 6912, 6912
      %56 = vsyncadd [#allocation6], %s55
      %s57 = sshll.u32 [#allocation7], 4
      %s58 = int_to_ptr.vmem [resolvable:$true] %s57
      %63 = dma.hbm_to_vmem [thread:$0]  %s5, 6912, %s58, [#allocation6], 256, 256, 16
    $region25: #{convnetwork_forward.1} parent=1 // pred_fallthru
      _
    // Predicated region
    $region26: #{convnetwork_forward.1} parent=1 // pred_check
      _
    $region27: #{convnetwork_forward.1} parent=1 // pred_check_branch
      %65 = sbr.rel (0) target = $region29
    $region28: #{convnetwork_forward.1} parent=1 // pred_region
      %s67 = ssub.s32 32, 32
      %68 = vsyncadd [#allocation9], %s67
      %s70 = sshll.u32 [#allocation8], 4
      %s71 = int_to_ptr.vmem [resolvable:$true] %s70
      %73 = dma.hbm_to_vmem [thread:$0]  %s6, 32, %s71, [#allocation9]
    $region29: #{convnetwork_forward.1} parent=1 // pred_fallthru
      _
    // Predicated region
    $region30: #{convnetwork_forward.1} parent=1 // pred_check
      _
    $region31: #{convnetwork_forward.1} parent=1 // pred_check_branch
      %75 = sbr.rel (0) target = $region33
    $region32: #{convnetwork_forward.1} parent=1 // pred_region
      %s77 = ssub.s32 2304, 2304
      %78 = vsyncadd [#allocation9], %s77
      %s79 = sshll.u32 [#allocation10], 4
      %s80 = int_to_ptr.vmem [resolvable:$true] %s79
      %85 = dma.hbm_to_vmem [thread:$0]  %s7, 2304, %s80, [#allocation9], 128, 128, 8
    $region33: #{convnetwork_forward.1} parent=1 // pred_fallthru
      _
    // Predicated region
    $region34: #{convnetwork_forward.1} parent=1 // pred_check
      _
    $region35: #{convnetwork_forward.1} parent=1 // pred_check_branch
      %87 = sbr.rel (0) target = $region37
    $region36: #{convnetwork_forward.1} parent=1 // pred_region
      %s89 = ssub.s32 2304, 2304
      %90 = vsyncadd [#allocation12], %s89
      %s91 = sshll.u32 [#allocation11], 4
      %s92 = int_to_ptr.vmem [resolvable:$true] %s91
      %97 = dma.hbm_to_vmem [thread:$0]  %s8, 2304, %s92, [#allocation12], 128, 128, 8
    $region37: #{convnetwork_forward.1} parent=1 // pred_fallthru
      _
    // Predicated region
    $region38: #{convnetwork_forward.1} parent=1 // pred_check
      _
    $region39: #{convnetwork_forward.1} parent=1 // pred_check_branch
      %99 = sbr.rel (0) target = $region41
    $region40: #{convnetwork_forward.1} parent=1 // pred_region
      %s101 = ssub.s32 6912, 6912
      %102 = vsyncadd [#allocation12], %s101
      %s103 = sshll.u32 [#allocation13], 4
      %s104 = int_to_ptr.vmem [resolvable:$true] %s103
      %109 = dma.hbm_to_vmem [thread:$0]  %s9, 6912, %s104, [#allocation12], 128, 128, 8
    $region41: #{convnetwork_forward.1} parent=1 // pred_fallthru
      _
    // Predicated region
    $region42: #{convnetwork_forward.1} parent=1 // pred_check
      _
    $region43: #{convnetwork_forward.1} parent=1 // pred_check_branch
      %111 = sbr.rel (0) target = $region45
    $region44: #{convnetwork_forward.1} parent=1 // pred_region
      _
    $region45: #{convnetwork_forward.1} parent=1 // pred_fallthru
      _
    // Predicated region
    $region46: #{convnetwork_forward.1} parent=1 // pred_check
      _
    $region47: #{convnetwork_forward.1} parent=1 // pred_check_branch
      %113 = sbr.rel (0) target = $region49
    $region48: #{convnetwork_forward.1} parent=1 // pred_region
      _
    $region49: #{convnetwork_forward.1} parent=1 // pred_fallthru
      _
    // Predicated region
    $region50: #{convnetwork_forward.1} parent=1 // pred_check
      _
    $region51: #{convnetwork_forward.1} parent=1 // pred_check_branch
      %115 = sbr.rel (0) target = $region53
    $region52: #{convnetwork_forward.1} parent=1 // pred_region
      %s117 = ssub.s32 16, 16
      %118 = vsyncadd [#allocation15], %s117
      %s120 = sshll.u32 [#allocation14], 4
      %s121 = int_to_ptr.vmem [resolvable:$true] %s120
      %123 = dma.hbm_to_vmem [thread:$0]  %s12, 16, %s121, [#allocation15]
    $region53: #{convnetwork_forward.1} parent=1 // pred_fallthru
      _
    // Predicated region
    $region54: #{convnetwork_forward.1} parent=1 // pred_check
      _
    $region55: #{convnetwork_forward.1} parent=1 // pred_check_branch
      %125 = sbr.rel (0) target = $region57
    $region56: #{convnetwork_forward.1} parent=1 // pred_region
      %126 = dma.done [#allocation3], 5120
    $region57: #{convnetwork_forward.1} parent=1 // pred_fallthru
      _
    // Predicated region
    $region58: #{convnetwork_forward.1} parent=1 // pred_check
      _
    $region59: #{convnetwork_forward.1} parent=1 // pred_check_branch
      %128 = sbr.rel (0) target = $region61
    $region60: #{convnetwork_forward.1} parent=1 // pred_region
      %129 = dma.done [#allocation6], 32
    $region61: #{convnetwork_forward.1} parent=1 // pred_fallthru
      _
    // Predicated region
    $region62: #{convnetwork_forward.1} parent=1 // pred_check
      _
    $region63: #{convnetwork_forward.1} parent=1 // pred_check_branch
      %131 = sbr.rel (0) target = $region65
    $region64: #{convnetwork_forward.1} parent=1 // pred_region
      %132 = dma.done [#allocation6], 6912
    $region65: #{convnetwork_forward.1} parent=1 // pred_fallthru
      _
    // Predicated region
    $region66: #{convnetwork_forward.1} parent=1 // pred_check
      _
    $region67: #{convnetwork_forward.1} parent=1 // pred_check_branch
      %134 = sbr.rel (0) target = $region69
    $region68: #{convnetwork_forward.1} parent=1 // pred_region
      %135 = dma.done [#allocation9], 32
    $region69: #{convnetwork_forward.1} parent=1 // pred_fallthru
      _
    // Predicated region
    $region70: #{convnetwork_forward.1} parent=1 // pred_check
      _
    $region71: #{convnetwork_forward.1} parent=1 // pred_check_branch
      %137 = sbr.rel (0) target = $region73
    $region72: #{convnetwork_forward.1} parent=1 // pred_region
      %138 = dma.done [#allocation9], 2304
    $region73: #{convnetwork_forward.1} parent=1 // pred_fallthru
      _
    // Predicated region
    $region74: #{convnetwork_forward.1} parent=1 // pred_check
      _
    $region75: #{convnetwork_forward.1} parent=1 // pred_check_branch
      %140 = sbr.rel (0) target = $region77
    $region76: #{convnetwork_forward.1} parent=1 // pred_region
      %141 = dma.done [#allocation12], 2304
    $region77: #{convnetwork_forward.1} parent=1 // pred_fallthru
      _
    // Predicated region
    $region78: #{convnetwork_forward.1} parent=1 // pred_check
      _
    $region79: #{convnetwork_forward.1} parent=1 // pred_check_branch
      %143 = sbr.rel (0) target = $region81
    $region80: #{convnetwork_forward.1} parent=1 // pred_region
      %144 = dma.done [#allocation12], 6912
    $region81: #{convnetwork_forward.1} parent=1 // pred_fallthru
      _
    // Predicated region
    $region82: #{convnetwork_forward.1} parent=1 // pred_check
      _
    $region83: #{convnetwork_forward.1} parent=1 // pred_check_branch
      %146 = sbr.rel (0) target = $region85
    $region84: #{convnetwork_forward.1} parent=1 // pred_region
      %147 = dma.done [#allocation15], 16
    $region85: #{convnetwork_forward.1} parent=1 // pred_fallthru
      _
    %v148 = vld [vmem:[%s0] sm:$0x3]
    %v149 = vld [vmem:[%s0 + $0x2] sm:$0x3]
    %v150 = vld [vmem:[%s0 + $0x4] sm:$0x3]
    %v151 = vld [vmem:[%s0 + $0x6] sm:$0x3]
    %v152 = vld [vmem:[%s0 + $0x8] sm:$0x3]
    %v153 = vld [vmem:[%s0 + $0xa] sm:$0x3]
    %v154 = vld [vmem:[%s0 + $0xc] sm:$0x3]
    %v155 = vld [vmem:[%s0 + $0xe] sm:$0x3]
    %v156 = vld [vmem:[%s0 + $0x10] sm:$0x3]
    %v157 = vld [vmem:[%s0 + $0x12] sm:$0x3]
    %v158 = vld [vmem:[%s0 + $0x14] sm:$0x3]
    %v159 = vld [vmem:[%s0 + $0x16] sm:$0x3]
    %v160 = vld [vmem:[%s0 + $0x18] sm:$0x3]
    %v161 = vld [vmem:[%s0 + $0x1a] sm:$0x3]
    %v162 = vld [vmem:[%s0 + $0x1c] sm:$0x3]
    %v163 = vld [vmem:[%s0 + $0x1e] sm:$0x3]
    %v164 = vld [vmem:[%s0 + $0x20] sm:$0x3]
    %v165 = vld [vmem:[%s0 + $0x22] sm:$0x3]
    %v166 = vld [vmem:[%s0 + $0x24] sm:$0x3]
    %v167 = vld [vmem:[%s0 + $0x26] sm:$0x3]
    %v168 = vld [vmem:[%s0 + $0x28] sm:$0x3]
    %v169 = vld [vmem:[%s0 + $0x2a] sm:$0x3]
    %v170 = vld [vmem:[%s0 + $0x2c] sm:$0x3]
    %v171 = vld [vmem:[%s0 + $0x2e] sm:$0x3]
    %v172 = vld [vmem:[%s0 + $0x30] sm:$0x3]
    %v173 = vld [vmem:[%s0 + $0x32] sm:$0x3]
    %v174 = vld [vmem:[%s0 + $0x34] sm:$0x3]
    %v175 = vld [vmem:[%s0 + $0x36] sm:$0x3]
    %v176 = vld [vmem:[#allocation2] sm:$0xff]
    %v177 = vld [vmem:[#allocation2 + $0x8] sm:$0xff]
    %v178 = vld [vmem:[#allocation2 + $0x10] sm:$0xff]
    %v179 = vld [vmem:[#allocation2 + $0x18] sm:$0xff]
    %v180 = vld [vmem:[#allocation2 + $0x20] sm:$0xff]
    %v181 = vld [vmem:[#allocation2 + $0x28] sm:$0xff]
    %v182 = vld [vmem:[#allocation2 + $0x30] sm:$0xf]
    %v183 = vld [vmem:[#allocation2 + $0x38] sm:$0xf]
    %s184 = scalar_lea.vmem [#allocation2], 64
    %v185 = vld [vmem:[%s184] sm:$0xff]
    %v186 = vld [vmem:[%s184 + $0x8] sm:$0xff]
    %v187 = vld [vmem:[%s184 + $0x10] sm:$0xff]
    %v188 = vld [vmem:[%s184 + $0x18] sm:$0xff]
    %v189 = vld [vmem:[%s184 + $0x20] sm:$0xff]
    %v190 = vld [vmem:[%s184 + $0x28] sm:$0xff]
    %v191 = vld [vmem:[%s184 + $0x30] sm:$0xf]
    %v192 = vld [vmem:[%s184 + $0x38] sm:$0xf]
    %v217 = vcombine.low %v149, %v150
    %v218 = vcombine.low %v151, %v152
    %v220 = vunpack.c.l.s4 1983009808
    %v221 = vunpack.c.0.s8 %v220
    %v222 = vlaneseq
    %v223 = vshrl.u32 %v222, 7
    %v224 = vsub.s32 %v221, %v223
    %v225 = vrot.slane %v217, %v224
    %v227 = vunpack.c.l.s4 1983009808
    %v228 = vunpack.c.0.s8 %v227
    %v229 = vlaneseq
    %v230 = vshrl.u32 %v229, 7
    %v231 = vsub.s32 %v228, %v230
    %v232 = vrot.slane %v218, %v231
    %v233 = vcombine.low %v225, %v232
    %v234 = vcombine.low %v153, %v154
    %v235 = vcombine.low %v155, %v156
    %v237 = vunpack.c.l.s4 1983009808
    %v238 = vunpack.c.0.s8 %v237
    %v239 = vlaneseq
    %v240 = vshrl.u32 %v239, 7
    %v241 = vsub.s32 %v238, %v240
    %v242 = vrot.slane %v234, %v241
    %v244 = vunpack.c.l.s4 1983009808
    %v245 = vunpack.c.0.s8 %v244
    %v246 = vlaneseq
    %v247 = vshrl.u32 %v246, 7
    %v248 = vsub.s32 %v245, %v247
    %v249 = vrot.slane %v235, %v248
    %v250 = vcombine.low %v242, %v249
    %v251 = vcombine.low %v157, %v158
    %v252 = vcombine.low %v159, %v160
    %v254 = vunpack.c.l.s4 1983009808
    %v255 = vunpack.c.0.s8 %v254
    %v256 = vlaneseq
    %v257 = vshrl.u32 %v256, 7
    %v258 = vsub.s32 %v255, %v257
    %v259 = vrot.slane %v251, %v258
    %v261 = vunpack.c.l.s4 1983009808
    %v262 = vunpack.c.0.s8 %v261
    %v263 = vlaneseq
    %v264 = vshrl.u32 %v263, 7
    %v265 = vsub.s32 %v262, %v264
    %v266 = vrot.slane %v252, %v265
    %v267 = vcombine.low %v259, %v266
    %v268 = vcombine.low %v161, %v162
    %v269 = vcombine.low %v163, %v164
    %v271 = vunpack.c.l.s4 1983009808
    %v272 = vunpack.c.0.s8 %v271
    %v273 = vlaneseq
    %v274 = vshrl.u32 %v273, 7
    %v275 = vsub.s32 %v272, %v274
    %v276 = vrot.slane %v268, %v275
    %v278 = vunpack.c.l.s4 1983009808
    %v279 = vunpack.c.0.s8 %v278
    %v280 = vlaneseq
    %v281 = vshrl.u32 %v280, 7
    %v282 = vsub.s32 %v279, %v281
    %v283 = vrot.slane %v269, %v282
    %v284 = vcombine.low %v276, %v283
    %v285 = vcombine.low %v165, %v166
    %v286 = vcombine.low %v167, %v168
    %v288 = vunpack.c.l.s4 1983009808
    %v289 = vunpack.c.0.s8 %v288
    %v290 = vlaneseq
    %v291 = vshrl.u32 %v290, 7
    %v292 = vsub.s32 %v289, %v291
    %v293 = vrot.slane %v285, %v292
    %v295 = vunpack.c.l.s4 1983009808
    %v296 = vunpack.c.0.s8 %v295
    %v297 = vlaneseq
    %v298 = vshrl.u32 %v297, 7
    %v299 = vsub.s32 %v296, %v298
    %v300 = vrot.slane %v286, %v299
    %v301 = vcombine.low %v293, %v300
    %v302 = vcombine.low %v169, %v170
    %v303 = vcombine.low %v171, %v172
    %v305 = vunpack.c.l.s4 1983009808
    %v306 = vunpack.c.0.s8 %v305
    %v307 = vlaneseq
    %v308 = vshrl.u32 %v307, 7
    %v309 = vsub.s32 %v306, %v308
    %v310 = vrot.slane %v302, %v309
    %v312 = vunpack.c.l.s4 1983009808
    %v313 = vunpack.c.0.s8 %v312
    %v314 = vlaneseq
    %v315 = vshrl.u32 %v314, 7
    %v316 = vsub.s32 %v313, %v315
    %v317 = vrot.slane %v303, %v316
    %v318 = vcombine.low %v310, %v317
    %vm319 = vcmask 228352
    %v320 = vsel %vm319, %v233, 0
    %v322 = vsel %vm319, %v250, 0
    %v324 = vsel %vm319, %v267, 0
    %v326 = vsel %vm319, %v284, 0
    %v328 = vsel %vm319, %v301, 0
    %v330 = vsel %vm319, %v318, 0
    %vm332 = vcmask 1043456
    %v334 = vsel %vm332, %v191, 0
    %v337 = vsel %vm332, %v192, 0
    %339 = vmatprep.subr.mxu0 %v186
    %340 = vmatpush1.msra.mxu0 %v185
    %341 = vmatprep.subr.mxu0 %v188
    %342 = vmatpush1.msra.mxu0 %v187
    %343 = vmatprep.subr.mxu0 %v190
    %344 = vmatpush1.msra.mxu0 %v189
    %345 = vmatprep.subr.mxu0 %v337
    %346 = vmatpush1.msra.mxu0 %v334
    %347 = vmatprep.subr.mxu0 0.0
    %348 = vmatpush1.msra.mxu0 0.0
    %349 = vmatprep.subr.mxu0 0.0
    %350 = vmatpush1.msra.mxu0 0.0
    %351 = vmatprep.subr.mxu0 0.0
    %352 = vmatpush1.msra.mxu0 0.0
    %353 = vmatprep.subr.mxu0 0.0
    %354 = vmatpush1.msra.mxu0 0.0
    %355 = vmatprep.subr.mxu0 0.0
    %356 = vmatpush1.msra.mxu0 0.0
    %357 = vmatprep.subr.mxu0 0.0
    %358 = vmatpush1.msra.mxu0 0.0
    %359 = vmatprep.subr.mxu0 0.0
    %360 = vmatpush1.msra.mxu0 0.0
    %361 = vmatprep.subr.mxu0 0.0
    %362 = vmatpush1.msra.mxu0 0.0
    %363 = vmatprep.subr.mxu0 0.0
    %364 = vmatpush1.msra.mxu0 0.0
    %365 = vmatprep.subr.mxu0 0.0
    %366 = vmatpush1.msra.mxu0 0.0
    %367 = vmatprep.subr.mxu0 0.0
    %368 = vmatpush1.msra.mxu0 0.0
    %369 = vmatprep.subr.mxu0 0.0
    %370 = vmatpush1.msra.mxu0 0.0
    %371 = vmatprep.subr.mxu0 0.0
    %372 = vmatpush1.msra.mxu0 0.0
    %373 = vmatprep.subr.mxu0 0.0
    %374 = vmatpush1.msra.mxu0 0.0
    %375 = vmatprep.subr.mxu0 0.0
    %376 = vmatpush1.msra.mxu0 0.0
    %377 = vmatprep.subr.mxu0 0.0
    %378 = vmatpush1.msra.mxu0 0.0
    %379 = vmatprep.subr.mxu0 0.0
    %380 = vmatpush1.msra.mxu0 0.0
    %381 = vmatprep.subr.mxu0 0.0
    %382 = vmatpush1.msra.mxu0 0.0
    %383 = vmatprep.subr.mxu0 0.0
    %384 = vmatpush1.msra.mxu0 0.0
    %385 = vmatprep.subr.mxu0 0.0
    %386 = vmatpush1.msra.mxu0 0.0
    %387 = vmatprep.subr.mxu0 0.0
    %388 = vmatpush1.msra.mxu0 0.0
    %389 = vmatprep.subr.mxu0 0.0
    %390 = vmatpush1.msra.mxu0 0.0
    %391 = vmatprep.subr.mxu0 0.0
    %392 = vmatpush1.msra.mxu0 0.0
    %393 = vmatprep.subr.mxu0 0.0
    %394 = vmatpush1.msra.mxu0 0.0
    %395 = vmatprep.subr.mxu0 0.0
    %396 = vmatpush1.msra.mxu0 0.0
    %397 = vmatprep.subr.mxu0 0.0
    %398 = vmatpush1.msra.mxu0 0.0
    %399 = vmatprep.subr.mxu0 0.0
    %400 = vmatpush1.msra.mxu0 0.0
    %401 = vmatprep.subr.mxu0 0.0
    %402 = vmatpush1.msra.mxu0 0.0
    %403 = vmatprep.mubr.f32.mxu0 0.0
    %404 = vmatmul.mubr.f32.gmra.mrb[0].mxu0 %v320
    %v405 = vpop.f32.mrb[0].mxu0
    %v406 = vadd.f32 0.0, %v405
    %v407 = vpop.f32.mrb[0].mxu0
    %v408 = vadd.f32 0.0, %v407
    %409 = vmatprep.mubr.f32.mxu0 0.0
    %410 = vmatmul.mubr.f32.gmra.mrb[0].mxu0 %v322
    %v411 = vpop.f32.mrb[0].mxu0
    %v412 = vadd.f32 0.0, %v411
    %v413 = vpop.f32.mrb[0].mxu0
    %v414 = vadd.f32 0.0, %v413
    %415 = vmatprep.mubr.f32.mxu0 0.0
    %416 = vmatmul.mubr.f32.gmra.mrb[0].mxu0 %v324
    %v417 = vpop.f32.mrb[0].mxu0
    %v418 = vadd.f32 0.0, %v417
    %v419 = vpop.f32.mrb[0].mxu0
    %v420 = vadd.f32 0.0, %v419
    %421 = vmatprep.mubr.f32.mxu0 0.0
    %422 = vmatmul.mubr.f32.gmra.mrb[0].mxu0 %v326
    %v423 = vpop.f32.mrb[0].mxu0
    %v424 = vadd.f32 0.0, %v423
    %v425 = vpop.f32.mrb[0].mxu0
    %v426 = vadd.f32 0.0, %v425
    %427 = vmatprep.mubr.f32.mxu0 0.0
    %428 = vmatmul.mubr.f32.gmra.mrb[0].mxu0 %v328
    %v429 = vpop.f32.mrb[0].mxu0
    %v430 = vadd.f32 0.0, %v429
    %v431 = vpop.f32.mrb[0].mxu0
    %v432 = vadd.f32 0.0, %v431
    %433 = vmatprep.mubr.f32.mxu0 0.0
    %434 = vmatmul.mubr.f32.gmra.mrb[0].mxu0 %v330
    %v435 = vpop.f32.mrb[0].mxu0
    %v436 = vadd.f32 0.0, %v435
    %v437 = vpop.f32.mrb[0].mxu0
    %v438 = vadd.f32 0.0, %v437
    %439 = vdwg.mxu0
    %v441 = vcombine.low %v148, %v149
    %v442 = vcombine.low %v150, %v151
    %v444 = vunpack.c.l.s4 1983009808
    %v445 = vunpack.c.0.s8 %v444
    %v446 = vlaneseq
    %v447 = vshrl.u32 %v446, 7
    %v448 = vsub.s32 %v445, %v447
    %v449 = vrot.slane %v441, %v448
    %v451 = vunpack.c.l.s4 1983009808
    %v452 = vunpack.c.0.s8 %v451
    %v453 = vlaneseq
    %v454 = vshrl.u32 %v453, 7
    %v455 = vsub.s32 %v452, %v454
    %v456 = vrot.slane %v442, %v455
    %v457 = vcombine.low %v449, %v456
    %v458 = vcombine.low %v152, %v153
    %v459 = vcombine.low %v154, %v155
    %v461 = vunpack.c.l.s4 1983009808
    %v462 = vunpack.c.0.s8 %v461
    %v463 = vlaneseq
    %v464 = vshrl.u32 %v463, 7
    %v465 = vsub.s32 %v462, %v464
    %v466 = vrot.slane %v458, %v465
    %v468 = vunpack.c.l.s4 1983009808
    %v469 = vunpack.c.0.s8 %v468
    %v470 = vlaneseq
    %v471 = vshrl.u32 %v470, 7
    %v472 = vsub.s32 %v469, %v471
    %v473 = vrot.slane %v459, %v472
    %v474 = vcombine.low %v466, %v473
    %v475 = vcombine.low %v156, %v157
    %v476 = vcombine.low %v158, %v159
    %v478 = vunpack.c.l.s4 1983009808
    %v479 = vunpack.c.0.s8 %v478
    %v480 = vlaneseq
    %v481 = vshrl.u32 %v480, 7
    %v482 = vsub.s32 %v479, %v481
    %v483 = vrot.slane %v475, %v482
    %v485 = vunpack.c.l.s4 1983009808
    %v486 = vunpack.c.0.s8 %v485
    %v487 = vlaneseq
    %v488 = vshrl.u32 %v487, 7
    %v489 = vsub.s32 %v486, %v488
    %v490 = vrot.slane %v476, %v489
    %v491 = vcombine.low %v483, %v490
    %v492 = vcombine.low %v160, %v161
    %v493 = vcombine.low %v162, %v163
    %v495 = vunpack.c.l.s4 1983009808
    %v496 = vunpack.c.0.s8 %v495
    %v497 = vlaneseq
    %v498 = vshrl.u32 %v497, 7
    %v499 = vsub.s32 %v496, %v498
    %v500 = vrot.slane %v492, %v499
    %v502 = vunpack.c.l.s4 1983009808
    %v503 = vunpack.c.0.s8 %v502
    %v504 = vlaneseq
    %v505 = vshrl.u32 %v504, 7
    %v506 = vsub.s32 %v503, %v505
    %v507 = vrot.slane %v493, %v506
    %v508 = vcombine.low %v500, %v507
    %v509 = vcombine.low %v164, %v165
    %v510 = vcombine.low %v166, %v167
    %v512 = vunpack.c.l.s4 1983009808
    %v513 = vunpack.c.0.s8 %v512
    %v514 = vlaneseq
    %v515 = vshrl.u32 %v514, 7
    %v516 = vsub.s32 %v513, %v515
    %v517 = vrot.slane %v509, %v516
    %v519 = vunpack.c.l.s4 1983009808
    %v520 = vunpack.c.0.s8 %v519
    %v521 = vlaneseq
    %v522 = vshrl.u32 %v521, 7
    %v523 = vsub.s32 %v520, %v522
    %v524 = vrot.slane %v510, %v523
    %v525 = vcombine.low %v517, %v524
    %v526 = vcombine.low %v168, %v169
    %v527 = vcombine.low %v170, %v171
    %v529 = vunpack.c.l.s4 1983009808
    %v530 = vunpack.c.0.s8 %v529
    %v531 = vlaneseq
    %v532 = vshrl.u32 %v531, 7
    %v533 = vsub.s32 %v530, %v532
    %v534 = vrot.slane %v526, %v533
    %v536 = vunpack.c.l.s4 1983009808
    %v537 = vunpack.c.0.s8 %v536
    %v538 = vlaneseq
    %v539 = vshrl.u32 %v538, 7
    %v540 = vsub.s32 %v537, %v539
    %v541 = vrot.slane %v527, %v540
    %v542 = vcombine.low %v534, %v541
    %v543 = vsel %vm319, %v457, 0
    %v545 = vsel %vm319, %v474, 0
    %v547 = vsel %vm319, %v491, 0
    %v549 = vsel %vm319, %v508, 0
    %v551 = vsel %vm319, %v525, 0
    %v553 = vsel %vm319, %v542, 0
    %v556 = vsel %vm332, %v182, 0
    %v559 = vsel %vm332, %v183, 0
    %561 = vmatprep.subr.mxu0 %v177
    %562 = vmatpush1.msra.mxu0 %v176
    %563 = vmatprep.subr.mxu0 %v179
    %564 = vmatpush1.msra.mxu0 %v178
    %565 = vmatprep.subr.mxu0 %v181
    %566 = vmatpush1.msra.mxu0 %v180
    %567 = vmatprep.subr.mxu0 %v559
    %568 = vmatpush1.msra.mxu0 %v556
    %569 = vmatprep.subr.mxu0 0.0
    %570 = vmatpush1.msra.mxu0 0.0
    %571 = vmatprep.subr.mxu0 0.0
    %572 = vmatpush1.msra.mxu0 0.0
    %573 = vmatprep.subr.mxu0 0.0
    %574 = vmatpush1.msra.mxu0 0.0
    %575 = vmatprep.subr.mxu0 0.0
    %576 = vmatpush1.msra.mxu0 0.0
    %577 = vmatprep.subr.mxu0 0.0
    %578 = vmatpush1.msra.mxu0 0.0
    %579 = vmatprep.subr.mxu0 0.0
    %580 = vmatpush1.msra.mxu0 0.0
    %581 = vmatprep.subr.mxu0 0.0
    %582 = vmatpush1.msra.mxu0 0.0
    %583 = vmatprep.subr.mxu0 0.0
    %584 = vmatpush1.msra.mxu0 0.0
    %585 = vmatprep.subr.mxu0 0.0
    %586 = vmatpush1.msra.mxu0 0.0
    %587 = vmatprep.subr.mxu0 0.0
    %588 = vmatpush1.msra.mxu0 0.0
    %589 = vmatprep.subr.mxu0 0.0
    %590 = vmatpush1.msra.mxu0 0.0
    %591 = vmatprep.subr.mxu0 0.0
    %592 = vmatpush1.msra.mxu0 0.0
    %593 = vmatprep.subr.mxu0 0.0
    %594 = vmatpush1.msra.mxu0 0.0
    %595 = vmatprep.subr.mxu0 0.0
    %596 = vmatpush1.msra.mxu0 0.0
    %597 = vmatprep.subr.mxu0 0.0
    %598 = vmatpush1.msra.mxu0 0.0
    %599 = vmatprep.subr.mxu0 0.0
    %600 = vmatpush1.msra.mxu0 0.0
    %601 = vmatprep.subr.mxu0 0.0
    %602 = vmatpush1.msra.mxu0 0.0
    %603 = vmatprep.subr.mxu0 0.0
    %604 = vmatpush1.msra.mxu0 0.0
    %605 = vmatprep.subr.mxu0 0.0
    %606 = vmatpush1.msra.mxu0 0.0
    %607 = vmatprep.subr.mxu0 0.0
    %608 = vmatpush1.msra.mxu0 0.0
    %609 = vmatprep.subr.mxu0 0.0
    %610 = vmatpush1.msra.mxu0 0.0
    %611 = vmatprep.subr.mxu0 0.0
    %612 = vmatpush1.msra.mxu0 0.0
    %613 = vmatprep.subr.mxu0 0.0
    %614 = vmatpush1.msra.mxu0 0.0
    %615 = vmatprep.subr.mxu0 0.0
    %616 = vmatpush1.msra.mxu0 0.0
    %617 = vmatprep.subr.mxu0 0.0
    %618 = vmatpush1.msra.mxu0 0.0
    %619 = vmatprep.subr.mxu0 0.0
    %620 = vmatpush1.msra.mxu0 0.0
    %621 = vmatprep.subr.mxu0 0.0
    %622 = vmatpush1.msra.mxu0 0.0
    %623 = vmatprep.subr.mxu0 0.0
    %624 = vmatpush1.msra.mxu0 0.0
    %625 = vmatprep.mubr.f32.mxu0 0.0
    %626 = vmatmul.mubr.f32.gmra.mrb[0].mxu0 %v543
    %v627 = vpop.f32.mrb[0].mxu0
    %v628 = vadd.f32 %v406, %v627
    %v629 = vpop.f32.mrb[0].mxu0
    %v630 = vadd.f32 %v408, %v629
    %631 = vmatprep.mubr.f32.mxu0 0.0
    %632 = vmatmul.mubr.f32.gmra.mrb[0].mxu0 %v545
    %v633 = vpop.f32.mrb[0].mxu0
    %v634 = vadd.f32 %v412, %v633
    %v635 = vpop.f32.mrb[0].mxu0
    %v636 = vadd.f32 %v414, %v635
    %637 = vmatprep.mubr.f32.mxu0 0.0
    %638 = vmatmul.mubr.f32.gmra.mrb[0].mxu0 %v547
    %v639 = vpop.f32.mrb[0].mxu0
    %v640 = vadd.f32 %v418, %v639
    %v641 = vpop.f32.mrb[0].mxu0
    %v642 = vadd.f32 %v420, %v641
    %643 = vmatprep.mubr.f32.mxu0 0.0
    %644 = vmatmul.mubr.f32.gmra.mrb[0].mxu0 %v549
    %v645 = vpop.f32.mrb[0].mxu0
    %v646 = vadd.f32 %v424, %v645
    %v647 = vpop.f32.mrb[0].mxu0
    %v648 = vadd.f32 %v426, %v647
    %649 = vmatprep.mubr.f32.mxu0 0.0
    %650 = vmatmul.mubr.f32.gmra.mrb[0].mxu0 %v551
    %v651 = vpop.f32.mrb[0].mxu0
    %v652 = vadd.f32 %v430, %v651
    %v653 = vpop.f32.mrb[0].mxu0
    %v654 = vadd.f32 %v432, %v653
    %655 = vmatprep.mubr.f32.mxu0 0.0
    %656 = vmatmul.mubr.f32.gmra.mrb[0].mxu0 %v553
    %v657 = vpop.f32.mrb[0].mxu0
    %v658 = vadd.f32 %v436, %v657
    %v659 = vpop.f32.mrb[0].mxu0
    %v660 = vadd.f32 %v438, %v659
    %661 = vdwg.mxu0
    %s662 = scalar_lea.vmem [#allocation2], 128
    %v663 = vld [vmem:[%s662] sm:$0xff]
    %v664 = vld [vmem:[%s662 + $0x8] sm:$0xff]
    %v665 = vld [vmem:[%s662 + $0x10] sm:$0xff]
    %v666 = vld [vmem:[%s662 + $0x18] sm:$0xff]
    %v667 = vld [vmem:[%s662 + $0x20] sm:$0xff]
    %v668 = vld [vmem:[%s662 + $0x28] sm:$0xff]
    %v669 = vld [vmem:[%s662 + $0x30] sm:$0xf]
    %v670 = vld [vmem:[%s662 + $0x38] sm:$0xf]
    %v672 = vcombine.low %v456, %v466
    %v673 = vcombine.low %v473, %v483
    %v674 = vcombine.low %v490, %v500
    %v675 = vcombine.low %v507, %v517
    %v676 = vcombine.low %v524, %v534
    %v677 = vcombine.low %v172, %v173
    %v679 = vunpack.c.l.s4 1983009808
    %v680 = vunpack.c.0.s8 %v679
    %v681 = vlaneseq
    %v682 = vshrl.u32 %v681, 7
    %v683 = vsub.s32 %v680, %v682
    %v684 = vrot.slane %v677, %v683
    %v685 = vcombine.low %v541, %v684
    %v686 = vsel %vm319, %v672, 0
    %v688 = vsel %vm319, %v673, 0
    %v690 = vsel %vm319, %v674, 0
    %v692 = vsel %vm319, %v675, 0
    %v694 = vsel %vm319, %v676, 0
    %v696 = vsel %vm319, %v685, 0
    %v699 = vsel %vm332, %v669, 0
    %v702 = vsel %vm332, %v670, 0
    %704 = vmatprep.subr.mxu0 %v664
    %705 = vmatpush1.msra.mxu0 %v663
    %706 = vmatprep.subr.mxu0 %v666
    %707 = vmatpush1.msra.mxu0 %v665
    %708 = vmatprep.subr.mxu0 %v668
    %709 = vmatpush1.msra.mxu0 %v667
    %710 = vmatprep.subr.mxu0 %v702
    %711 = vmatpush1.msra.mxu0 %v699
    %712 = vmatprep.subr.mxu0 0.0
    %713 = vmatpush1.msra.mxu0 0.0
    %714 = vmatprep.subr.mxu0 0.0
    %715 = vmatpush1.msra.mxu0 0.0
    %716 = vmatprep.subr.mxu0 0.0
    %717 = vmatpush1.msra.mxu0 0.0
    %718 = vmatprep.subr.mxu0 0.0
    %719 = vmatpush1.msra.mxu0 0.0
    %720 = vmatprep.subr.mxu0 0.0
    %721 = vmatpush1.msra.mxu0 0.0
    %722 = vmatprep.subr.mxu0 0.0
    %723 = vmatpush1.msra.mxu0 0.0
    %724 = vmatprep.subr.mxu0 0.0
    %725 = vmatpush1.msra.mxu0 0.0
    %726 = vmatprep.subr.mxu0 0.0
    %727 = vmatpush1.msra.mxu0 0.0
    %728 = vmatprep.subr.mxu0 0.0
    %729 = vmatpush1.msra.mxu0 0.0
    %730 = vmatprep.subr.mxu0 0.0
    %731 = vmatpush1.msra.mxu0 0.0
    %732 = vmatprep.subr.mxu0 0.0
    %733 = vmatpush1.msra.mxu0 0.0
    %734 = vmatprep.subr.mxu0 0.0
    %735 = vmatpush1.msra.mxu0 0.0
    %736 = vmatprep.subr.mxu0 0.0
    %737 = vmatpush1.msra.mxu0 0.0
    %738 = vmatprep.subr.mxu0 0.0
    %739 = vmatpush1.msra.mxu0 0.0
    %740 = vmatprep.subr.mxu0 0.0
    %741 = vmatpush1.msra.mxu0 0.0
    %742 = vmatprep.subr.mxu0 0.0
    %743 = vmatpush1.msra.mxu0 0.0
    %744 = vmatprep.subr.mxu0 0.0
    %745 = vmatpush1.msra.mxu0 0.0
    %746 = vmatprep.subr.mxu0 0.0
    %747 = vmatpush1.msra.mxu0 0.0
    %748 = vmatprep.subr.mxu0 0.0
    %749 = vmatpush1.msra.mxu0 0.0
    %750 = vmatprep.subr.mxu0 0.0
    %751 = vmatpush1.msra.mxu0 0.0
    %752 = vmatprep.subr.mxu0 0.0
    %753 = vmatpush1.msra.mxu0 0.0
    %754 = vmatprep.subr.mxu0 0.0
    %755 = vmatpush1.msra.mxu0 0.0
    %756 = vmatprep.subr.mxu0 0.0
    %757 = vmatpush1.msra.mxu0 0.0
    %758 = vmatprep.subr.mxu0 0.0
    %759 = vmatpush1.msra.mxu0 0.0
    %760 = vmatprep.subr.mxu0 0.0
    %761 = vmatpush1.msra.mxu0 0.0
    %762 = vmatprep.subr.mxu0 0.0
    %763 = vmatpush1.msra.mxu0 0.0
    %764 = vmatprep.subr.mxu0 0.0
    %765 = vmatpush1.msra.mxu0 0.0
    %766 = vmatprep.subr.mxu0 0.0
    %767 = vmatpush1.msra.mxu0 0.0
    %768 = vmatprep.mubr.f32.mxu0 0.0
    %769 = vmatmul.mubr.f32.gmra.mrb[0].mxu0 %v686
    %v770 = vpop.f32.mrb[0].mxu0
    %v771 = vadd.f32 0.0, %v770
    %v772 = vpop.f32.mrb[0].mxu0
    %v773 = vadd.f32 0.0, %v772
    %774 = vmatprep.mubr.f32.mxu0 0.0
    %775 = vmatmul.mubr.f32.gmra.mrb[0].mxu0 %v688
    %v776 = vpop.f32.mrb[0].mxu0
    %v777 = vadd.f32 0.0, %v776
    %v778 = vpop.f32.mrb[0].mxu0
    %v779 = vadd.f32 0.0, %v778
    %780 = vmatprep.mubr.f32.mxu0 0.0
    %781 = vmatmul.mubr.f32.gmra.mrb[0].mxu0 %v690
    %v782 = vpop.f32.mrb[0].mxu0
    %v783 = vadd.f32 0.0, %v782
    %v784 = vpop.f32.mrb[0].mxu0
    %v785 = vadd.f32 0.0, %v784
    %786 = vmatprep.mubr.f32.mxu0 0.0
    %787 = vmatmul.mubr.f32.gmra.mrb[0].mxu0 %v692
    %v788 = vpop.f32.mrb[0].mxu0
    %v789 = vadd.f32 0.0, %v788
    %v790 = vpop.f32.mrb[0].mxu0
    %v791 = vadd.f32 0.0, %v790
    %792 = vmatprep.mubr.f32.mxu0 0.0
    %793 = vmatmul.mubr.f32.gmra.mrb[0].mxu0 %v694
    %v794 = vpop.f32.mrb[0].mxu0
    %v795 = vadd.f32 0.0, %v794
    %v796 = vpop.f32.mrb[0].mxu0
    %v797 = vadd.f32 0.0, %v796
    %798 = vmatprep.mubr.f32.mxu0 0.0
    %799 = vmatmul.mubr.f32.gmra.mrb[0].mxu0 %v696
    %v800 = vpop.f32.mrb[0].mxu0
    %v801 = vadd.f32 0.0, %v800
    %v802 = vpop.f32.mrb[0].mxu0
    %v803 = vadd.f32 0.0, %v802
    %804 = vdwg.mxu0
    %v805 = vadd.f32 %v628, %v771
    %v806 = vadd.f32 %v630, %v773
    %v807 = vadd.f32 %v634, %v777
    %v808 = vadd.f32 %v636, %v779
    %v809 = vadd.f32 %v640, %v783
    %v810 = vadd.f32 %v642, %v785
    %v811 = vadd.f32 %v646, %v789
    %v812 = vadd.f32 %v648, %v791
    %v813 = vadd.f32 %v652, %v795
    %v814 = vadd.f32 %v654, %v797
    %v815 = vadd.f32 %v658, %v801
    %v816 = vadd.f32 %v660, %v803
    %s817 = scalar_lea.vmem [#allocation2], 192
    %v818 = vld [vmem:[%s817] sm:$0xff]
    %v819 = vld [vmem:[%s817 + $0x8] sm:$0xff]
    %v820 = vld [vmem:[%s817 + $0x10] sm:$0xff]
    %v821 = vld [vmem:[%s817 + $0x18] sm:$0xff]
    %v822 = vld [vmem:[%s817 + $0x20] sm:$0xff]
    %v823 = vld [vmem:[%s817 + $0x28] sm:$0xff]
    %v824 = vld [vmem:[%s817 + $0x30] sm:$0xf]
    %v825 = vld [vmem:[%s817 + $0x38] sm:$0xf]
    %v827 = vcombine.low %v232, %v242
    %v828 = vcombine.low %v249, %v259
    %v829 = vcombine.low %v266, %v276
    %v830 = vcombine.low %v283, %v293
    %v831 = vcombine.low %v300, %v310
    %v832 = vcombine.low %v173, %v174
    %v834 = vunpack.c.l.s4 1983009808
    %v835 = vunpack.c.0.s8 %v834
    %v836 = vlaneseq
    %v837 = vshrl.u32 %v836, 7
    %v838 = vsub.s32 %v835, %v837
    %v839 = vrot.slane %v832, %v838
    %v840 = vcombine.low %v317, %v839
    %v841 = vsel %vm319, %v827, 0
    %v843 = vsel %vm319, %v828, 0
    %v845 = vsel %vm319, %v829, 0
    %v847 = vsel %vm319, %v830, 0
    %v849 = vsel %vm319, %v831, 0
    %v851 = vsel %vm319, %v840, 0
    %v854 = vsel %vm332, %v824, 0
    %v857 = vsel %vm332, %v825, 0
    %859 = vmatprep.subr.mxu0 %v819
    %860 = vmatpush1.msra.mxu0 %v818
    %861 = vmatprep.subr.mxu0 %v821
    %862 = vmatpush1.msra.mxu0 %v820
    %863 = vmatprep.subr.mxu0 %v823
    %864 = vmatpush1.msra.mxu0 %v822
    %865 = vmatprep.subr.mxu0 %v857
    %866 = vmatpush1.msra.mxu0 %v854
    %867 = vmatprep.subr.mxu0 0.0
    %868 = vmatpush1.msra.mxu0 0.0
    %869 = vmatprep.subr.mxu0 0.0
    %870 = vmatpush1.msra.mxu0 0.0
    %871 = vmatprep.subr.mxu0 0.0
    %872 = vmatpush1.msra.mxu0 0.0
    %873 = vmatprep.subr.mxu0 0.0
    %874 = vmatpush1.msra.mxu0 0.0
    %875 = vmatprep.subr.mxu0 0.0
    %876 = vmatpush1.msra.mxu0 0.0
    %877 = vmatprep.subr.mxu0 0.0
    %878 = vmatpush1.msra.mxu0 0.0
    %879 = vmatprep.subr.mxu0 0.0
    %880 = vmatpush1.msra.mxu0 0.0
    %881 = vmatprep.subr.mxu0 0.0
    %882 = vmatpush1.msra.mxu0 0.0
    %883 = vmatprep.subr.mxu0 0.0
    %884 = vmatpush1.msra.mxu0 0.0
    %885 = vmatprep.subr.mxu0 0.0
    %886 = vmatpush1.msra.mxu0 0.0
    %887 = vmatprep.subr.mxu0 0.0
    %888 = vmatpush1.msra.mxu0 0.0
    %889 = vmatprep.subr.mxu0 0.0
    %890 = vmatpush1.msra.mxu0 0.0
    %891 = vmatprep.subr.mxu0 0.0
    %892 = vmatpush1.msra.mxu0 0.0
    %893 = vmatprep.subr.mxu0 0.0
    %894 = vmatpush1.msra.mxu0 0.0
    %895 = vmatprep.subr.mxu0 0.0
    %896 = vmatpush1.msra.mxu0 0.0
    %897 = vmatprep.subr.mxu0 0.0
    %898 = vmatpush1.msra.mxu0 0.0
    %899 = vmatprep.subr.mxu0 0.0
    %900 = vmatpush1.msra.mxu0 0.0
    %901 = vmatprep.subr.mxu0 0.0
    %902 = vmatpush1.msra.mxu0 0.0
    %903 = vmatprep.subr.mxu0 0.0
    %904 = vmatpush1.msra.mxu0 0.0
    %905 = vmatprep.subr.mxu0 0.0
    %906 = vmatpush1.msra.mxu0 0.0
    %907 = vmatprep.subr.mxu0 0.0
    %908 = vmatpush1.msra.mxu0 0.0
    %909 = vmatprep.subr.mxu0 0.0
    %910 = vmatpush1.msra.mxu0 0.0
    %911 = vmatprep.subr.mxu0 0.0
    %912 = vmatpush1.msra.mxu0 0.0
    %913 = vmatprep.subr.mxu0 0.0
    %914 = vmatpush1.msra.mxu0 0.0
    %915 = vmatprep.subr.mxu0 0.0
    %916 = vmatpush1.msra.mxu0 0.0
    %917 = vmatprep.subr.mxu0 0.0
    %918 = vmatpush1.msra.mxu0 0.0
    %919 = vmatprep.subr.mxu0 0.0
    %920 = vmatpush1.msra.mxu0 0.0
    %921 = vmatprep.subr.mxu0 0.0
    %922 = vmatpush1.msra.mxu0 0.0
    %923 = vmatprep.mubr.f32.mxu0 0.0
    %924 = vmatmul.mubr.f32.gmra.mrb[0].mxu0 %v841
    %v925 = vpop.f32.mrb[0].mxu0
    %v926 = vadd.f32 0.0, %v925
    %v927 = vpop.f32.mrb[0].mxu0
    %v928 = vadd.f32 0.0, %v927
    %929 = vmatprep.mubr.f32.mxu0 0.0
    %930 = vmatmul.mubr.f32.gmra.mrb[0].mxu0 %v843
    %v931 = vpop.f32.mrb[0].mxu0
    %v932 = vadd.f32 0.0, %v931
    %v933 = vpop.f32.mrb[0].mxu0
    %v934 = vadd.f32 0.0, %v933
    %935 = vmatprep.mubr.f32.mxu0 0.0
    %936 = vmatmul.mubr.f32.gmra.mrb[0].mxu0 %v845
    %v937 = vpop.f32.mrb[0].mxu0
    %v938 = vadd.f32 0.0, %v937
    %v939 = vpop.f32.mrb[0].mxu0
    %v940 = vadd.f32 0.0, %v939
    %941 = vmatprep.mubr.f32.mxu0 0.0
    %942 = vmatmul.mubr.f32.gmra.mrb[0].mxu0 %v847
    %v943 = vpop.f32.mrb[0].mxu0
    %v944 = vadd.f32 0.0, %v943
    %v945 = vpop.f32.mrb[0].mxu0
    %v946 = vadd.f32 0.0, %v945
    %947 = vmatprep.mubr.f32.mxu0 0.0
    %948 = vmatmul.mubr.f32.gmra.mrb[0].mxu0 %v849
    %v949 = vpop.f32.mrb[0].mxu0
    %v950 = vadd.f32 0.0, %v949
    %v951 = vpop.f32.mrb[0].mxu0
    %v952 = vadd.f32 0.0, %v951
    %953 = vmatprep.mubr.f32.mxu0 0.0
    %954 = vmatmul.mubr.f32.gmra.mrb[0].mxu0 %v851
    %v955 = vpop.f32.mrb[0].mxu0
    %v956 = vadd.f32 0.0, %v955
    %v957 = vpop.f32.mrb[0].mxu0
    %v958 = vadd.f32 0.0, %v957
    %959 = vdwg.mxu0
    %v960 = vadd.f32 %v805, %v926
    %v961 = vadd.f32 %v806, %v928
    %v962 = vadd.f32 %v807, %v932
    %v963 = vadd.f32 %v808, %v934
    %v964 = vadd.f32 %v809, %v938
    %v965 = vadd.f32 %v810, %v940
    %v966 = vadd.f32 %v811, %v944
    %v967 = vadd.f32 %v812, %v946
    %v968 = vadd.f32 %v813, %v950
    %v969 = vadd.f32 %v814, %v952
    %v970 = vadd.f32 %v815, %v956
    %v971 = vadd.f32 %v816, %v958
    %s972 = scalar_lea.vmem [#allocation2], 256
    %v973 = vld [vmem:[%s972] sm:$0xff]
    %v974 = vld [vmem:[%s972 + $0x8] sm:$0xff]
    %v975 = vld [vmem:[%s972 + $0x10] sm:$0xff]
    %v976 = vld [vmem:[%s972 + $0x18] sm:$0xff]
    %v977 = vld [vmem:[%s972 + $0x20] sm:$0xff]
    %v978 = vld [vmem:[%s972 + $0x28] sm:$0xff]
    %v979 = vld [vmem:[%s972 + $0x30] sm:$0xf]
    %v980 = vld [vmem:[%s972 + $0x38] sm:$0xf]
    %v982 = vcombine.low %v174, %v175
    %v984 = vunpack.c.l.s4 1983009808
    %v985 = vunpack.c.0.s8 %v984
    %v986 = vlaneseq
    %v987 = vshrl.u32 %v986, 7
    %v988 = vsub.s32 %v985, %v987
    %v989 = vrot.slane %v982, %v988
    %v990 = vcombine.low %v684, %v989
    %v991 = vsel %vm319, %v990, 0
    %v994 = vsel %vm332, %v979, 0
    %v997 = vsel %vm332, %v980, 0
    %999 = vmatprep.subr.mxu0 %v974
    %1000 = vmatpush1.msra.mxu0 %v973
    %1001 = vmatprep.subr.mxu0 %v976
    %1002 = vmatpush1.msra.mxu0 %v975
    %1003 = vmatprep.subr.mxu0 %v978
    %1004 = vmatpush1.msra.mxu0 %v977
    %1005 = vmatprep.subr.mxu0 %v997
    %1006 = vmatpush1.msra.mxu0 %v994
    %1007 = vmatprep.subr.mxu0 0.0
    %1008 = vmatpush1.msra.mxu0 0.0
    %1009 = vmatprep.subr.mxu0 0.0
    %1010 = vmatpush1.msra.mxu0 0.0
    %1011 = vmatprep.subr.mxu0 0.0
    %1012 = vmatpush1.msra.mxu0 0.0
    %1013 = vmatprep.subr.mxu0 0.0
    %1014 = vmatpush1.msra.mxu0 0.0
    %1015 = vmatprep.subr.mxu0 0.0
    %1016 = vmatpush1.msra.mxu0 0.0
    %1017 = vmatprep.subr.mxu0 0.0
    %1018 = vmatpush1.msra.mxu0 0.0
    %1019 = vmatprep.subr.mxu0 0.0
    %1020 = vmatpush1.msra.mxu0 0.0
    %1021 = vmatprep.subr.mxu0 0.0
    %1022 = vmatpush1.msra.mxu0 0.0
    %1023 = vmatprep.subr.mxu0 0.0
    %1024 = vmatpush1.msra.mxu0 0.0
    %1025 = vmatprep.subr.mxu0 0.0
    %1026 = vmatpush1.msra.mxu0 0.0
    %1027 = vmatprep.subr.mxu0 0.0
    %1028 = vmatpush1.msra.mxu0 0.0
    %1029 = vmatprep.subr.mxu0 0.0
    %1030 = vmatpush1.msra.mxu0 0.0
    %1031 = vmatprep.subr.mxu0 0.0
    %1032 = vmatpush1.msra.mxu0 0.0
    %1033 = vmatprep.subr.mxu0 0.0
    %1034 = vmatpush1.msra.mxu0 0.0
    %1035 = vmatprep.subr.mxu0 0.0
    %1036 = vmatpush1.msra.mxu0 0.0
    %1037 = vmatprep.subr.mxu0 0.0
    %1038 = vmatpush1.msra.mxu0 0.0
    %1039 = vmatprep.subr.mxu0 0.0
    %1040 = vmatpush1.msra.mxu0 0.0
    %1041 = vmatprep.subr.mxu0 0.0
    %1042 = vmatpush1.msra.mxu0 0.0
    %1043 = vmatprep.subr.mxu0 0.0
    %1044 = vmatpush1.msra.mxu0 0.0
    %1045 = vmatprep.subr.mxu0 0.0
    %1046 = vmatpush1.msra.mxu0 0.0
    %1047 = vmatprep.subr.mxu0 0.0
    %1048 = vmatpush1.msra.mxu0 0.0
    %1049 = vmatprep.subr.mxu0 0.0
    %1050 = vmatpush1.msra.mxu0 0.0
    %1051 = vmatprep.subr.mxu0 0.0
    %1052 = vmatpush1.msra.mxu0 0.0
    %1053 = vmatprep.subr.mxu0 0.0
    %1054 = vmatpush1.msra.mxu0 0.0
    %1055 = vmatprep.subr.mxu0 0.0
    %1056 = vmatpush1.msra.mxu0 0.0
    %1057 = vmatprep.subr.mxu0 0.0
    %1058 = vmatpush1.msra.mxu0 0.0
    %1059 = vmatprep.subr.mxu0 0.0
    %1060 = vmatpush1.msra.mxu0 0.0
    %1061 = vmatprep.subr.mxu0 0.0
    %1062 = vmatpush1.msra.mxu0 0.0
    %1063 = vmatprep.mubr.f32.mxu0 0.0
    %1064 = vmatmul.mubr.f32.gmra.mrb[0].mxu0 %v545
    %v1065 = vpop.f32.mrb[0].mxu0
    %v1066 = vadd.f32 0.0, %v1065
    %v1067 = vpop.f32.mrb[0].mxu0
    %v1068 = vadd.f32 0.0, %v1067
    %1069 = vmatprep.mubr.f32.mxu0 0.0
    %1070 = vmatmul.mubr.f32.gmra.mrb[0].mxu0 %v547
    %v1071 = vpop.f32.mrb[0].mxu0
    %v1072 = vadd.f32 0.0, %v1071
    %v1073 = vpop.f32.mrb[0].mxu0
    %v1074 = vadd.f32 0.0, %v1073
    %1075 = vmatprep.mubr.f32.mxu0 0.0
    %1076 = vmatmul.mubr.f32.gmra.mrb[0].mxu0 %v549
    %v1077 = vpop.f32.mrb[0].mxu0
    %v1078 = vadd.f32 0.0, %v1077
    %v1079 = vpop.f32.mrb[0].mxu0
    %v1080 = vadd.f32 0.0, %v1079
    %1081 = vmatprep.mubr.f32.mxu0 0.0
    %1082 = vmatmul.mubr.f32.gmra.mrb[0].mxu0 %v551
    %v1083 = vpop.f32.mrb[0].mxu0
    %v1084 = vadd.f32 0.0, %v1083
    %v1085 = vpop.f32.mrb[0].mxu0
    %v1086 = vadd.f32 0.0, %v1085
    %1087 = vmatprep.mubr.f32.mxu0 0.0
    %1088 = vmatmul.mubr.f32.gmra.mrb[0].mxu0 %v553
    %v1089 = vpop.f32.mrb[0].mxu0
    %v1090 = vadd.f32 0.0, %v1089
    %v1091 = vpop.f32.mrb[0].mxu0
    %v1092 = vadd.f32 0.0, %v1091
    %1093 = vmatprep.mubr.f32.mxu0 0.0
    %1094 = vmatmul.mubr.f32.gmra.mrb[0].mxu0 %v991
    %v1095 = vpop.f32.mrb[0].mxu0
    %v1096 = vadd.f32 0.0, %v1095
    %v1097 = vpop.f32.mrb[0].mxu0
    %v1098 = vadd.f32 0.0, %v1097
    %1099 = vdwg.mxu0
    %v1100 = vadd.f32 %v960, %v1066
    %v1101 = vadd.f32 %v961, %v1068
    %v1102 = vadd.f32 %v962, %v1072
    %v1103 = vadd.f32 %v963, %v1074
    %v1104 = vadd.f32 %v964, %v1078
    %v1105 = vadd.f32 %v965, %v1080
    %v1106 = vadd.f32 %v966, %v1084
    %v1107 = vadd.f32 %v967, %v1086
    %v1108 = vadd.f32 %v968, %v1090
    %v1109 = vadd.f32 %v969, %v1092
    %v1110 = vadd.f32 %v970, %v1096
    %v1111 = vadd.f32 %v971, %v1098
    %v1112 = vld [vmem:[#allocation5] sm:$0x3]
    %v1114 = vlaneseq
    %v1115 = vshrl.u32 %v1114, 7
    %v1116 = vsub.s32 0, %v1115
    %v1117 = vrot.slane %v1112, %v1116
    %v1118 = vlaneseq
    %v1119 = vshrl.u32 %v1118, 7
    %v1120 = vsub.s32 1, %v1119
    %v1121 = vrot.slane %v1112, %v1120
    %v1124 = vadd.f32 %v1100, %v1117
    %v1125 = vadd.f32 %v1101, %v1121
    %v1126 = vadd.f32 %v1102, %v1117
    %v1127 = vadd.f32 %v1103, %v1121
    %v1128 = vadd.f32 %v1104, %v1117
    %v1129 = vadd.f32 %v1105, %v1121
    %v1130 = vadd.f32 %v1106, %v1117
    %v1131 = vadd.f32 %v1107, %v1121
    %v1132 = vadd.f32 %v1108, %v1117
    %v1133 = vadd.f32 %v1109, %v1121
    %v1134 = vadd.f32 %v1110, %v1117
    %v1135 = vadd.f32 %v1111, %v1121
    %v1136 = vmax.f32 %v1124, 0.0
    %v1137 = vmax.f32 %v1125, 0.0
    %v1138 = vmax.f32 %v1126, 0.0
    %v1139 = vmax.f32 %v1127, 0.0
    %v1140 = vmax.f32 %v1128, 0.0
    %v1141 = vmax.f32 %v1129, 0.0
    %v1142 = vmax.f32 %v1130, 0.0
    %v1143 = vmax.f32 %v1131, 0.0
    %v1144 = vmax.f32 %v1132, 0.0
    %v1145 = vmax.f32 %v1133, 0.0
    %v1146 = vmax.f32 %v1134, 0.0
    %v1147 = vmax.f32 %v1135, 0.0
    %v1148 = vld [vmem:[%s3] sm:$0xff]
    %v1149 = vld [vmem:[%s3 + $0x8] sm:$0xff]
    %v1150 = vld [vmem:[%s3 + $0x10] sm:$0xff]
    %v1151 = vld [vmem:[%s3 + $0x18] sm:$0xff]
    %v1152 = vld [vmem:[%s3 + $0x20] sm:$0xff]
    %v1153 = vld [vmem:[%s3 + $0x28] sm:$0xff]
    %v1154 = vld [vmem:[%s3 + $0x30] sm:$0xff]
    %v1155 = vld [vmem:[%s3 + $0x38] sm:$0xff]
    %v1156 = vld [vmem:[%s3 + $0x40] sm:$0xff]
    %v1157 = vld [vmem:[%s3 + $0x48] sm:$0xff]
    %v1158 = vld [vmem:[%s3 + $0x50] sm:$0xff]
    %v1159 = vld [vmem:[%s3 + $0x58] sm:$0xff]
    %v1160 = vld [vmem:[%s3 + $0x60] sm:$0xff]
    %v1161 = vld [vmem:[%s3 + $0x68] sm:$0xff]
    %v1162 = vld [vmem:[%s3 + $0x70] sm:$0xff]
    %v1163 = vld [vmem:[%s3 + $0x78] sm:$0xff]
    %v1164 = vld [vmem:[%s3 + $0x80] sm:$0xff]
    %v1165 = vld [vmem:[%s3 + $0x88] sm:$0xff]
    %vm1166 = vcmask 130048
    %v1168 = vsel %vm1166, %v1137, 0
    %v1171 = vsel %vm1166, %v1139, 0
    %v1174 = vsel %vm1166, %v1141, 0
    %v1177 = vsel %vm1166, %v1143, 0
    %v1180 = vsel %vm1166, %v1145, 0
    %v1183 = vsel %vm1166, %v1147, 0
    %1185 = vmatprep.subr.mxu0 0.0
    %1186 = vmatpush1.msra.mxu0 %v1148
    %1187 = vmatprep.subr.mxu0 0.0
    %1188 = vmatpush1.msra.mxu0 %v1149
    %1189 = vmatprep.subr.mxu0 0.0
    %1190 = vmatpush1.msra.mxu0 %v1150
    %1191 = vmatprep.subr.mxu0 0.0
    %1192 = vmatpush1.msra.mxu0 %v1151
    %1193 = vmatprep.subr.mxu0 0.0
    %1194 = vmatpush1.msra.mxu0 %v1152
    %1195 = vmatprep.subr.mxu0 0.0
    %1196 = vmatpush1.msra.mxu0 %v1153
    %1197 = vmatprep.subr.mxu0 0.0
    %1198 = vmatpush1.msra.mxu0 %v1154
    %1199 = vmatprep.subr.mxu0 0.0
    %1200 = vmatpush1.msra.mxu0 %v1155
    %1201 = vmatprep.subr.mxu0 0.0
    %1202 = vmatpush1.msra.mxu0 %v1156
    %1203 = vmatprep.subr.mxu0 0.0
    %1204 = vmatpush1.msra.mxu0 %v1157
    %1205 = vmatprep.subr.mxu0 0.0
    %1206 = vmatpush1.msra.mxu0 %v1158
    %1207 = vmatprep.subr.mxu0 0.0
    %1208 = vmatpush1.msra.mxu0 %v1159
    %1209 = vmatprep.subr.mxu0 0.0
    %1210 = vmatpush1.msra.mxu0 %v1160
    %1211 = vmatprep.subr.mxu0 0.0
    %1212 = vmatpush1.msra.mxu0 %v1161
    %1213 = vmatprep.subr.mxu0 0.0
    %1214 = vmatpush1.msra.mxu0 %v1162
    %1215 = vmatprep.subr.mxu0 0.0
    %1216 = vmatpush1.msra.mxu0 %v1163
    %1217 = vmatprep.subr.mxu0 0.0
    %1218 = vmatpush1.msra.mxu0 %v1164
    %1219 = vmatprep.subr.mxu0 0.0
    %1220 = vmatpush1.msra.mxu0 %v1165
    %1221 = vmatprep.subr.mxu0 0.0
    %1222 = vmatpush1.msra.mxu0 0.0
    %1223 = vmatprep.subr.mxu0 0.0
    %1224 = vmatpush1.msra.mxu0 0.0
    %1225 = vmatprep.subr.mxu0 0.0
    %1226 = vmatpush1.msra.mxu0 0.0
    %1227 = vmatprep.subr.mxu0 0.0
    %1228 = vmatpush1.msra.mxu0 0.0
    %1229 = vmatprep.subr.mxu0 0.0
    %1230 = vmatpush1.msra.mxu0 0.0
    %1231 = vmatprep.subr.mxu0 0.0
    %1232 = vmatpush1.msra.mxu0 0.0
    %1233 = vmatprep.subr.mxu0 0.0
    %1234 = vmatpush1.msra.mxu0 0.0
    %1235 = vmatprep.subr.mxu0 0.0
    %1236 = vmatpush1.msra.mxu0 0.0
    %1237 = vmatprep.subr.mxu0 0.0
    %1238 = vmatpush1.msra.mxu0 0.0
    %1239 = vmatprep.subr.mxu0 0.0
    %1240 = vmatpush1.msra.mxu0 0.0
    %1241 = vmatprep.subr.mxu0 0.0
    %1242 = vmatpush1.msra.mxu0 0.0
    %1243 = vmatprep.subr.mxu0 0.0
    %1244 = vmatpush1.msra.mxu0 0.0
    %1245 = vmatprep.subr.mxu0 0.0
    %1246 = vmatpush1.msra.mxu0 0.0
    %1247 = vmatprep.subr.mxu0 0.0
    %1248 = vmatpush1.msra.mxu0 0.0
    %1249 = vmatprep.mubr.f32.mxu0 %v1168
    %1250 = vmatmul.mubr.f32.gmra.mrb[0].mxu0 %v1136
    %v1251 = vpop.f32.mrb[0].mxu0
    %v1252 = vadd.f32 0.0, %v1251
    %v1253 = vpop.f32.mrb[0].mxu0
    %1254 = vmatprep.mubr.f32.mxu0 %v1171
    %1255 = vmatmul.mubr.f32.gmra.mrb[0].mxu0 %v1138
    %v1256 = vpop.f32.mrb[0].mxu0
    %v1257 = vadd.f32 0.0, %v1256
    %v1258 = vpop.f32.mrb[0].mxu0
    %1259 = vmatprep.mubr.f32.mxu0 %v1174
    %1260 = vmatmul.mubr.f32.gmra.mrb[0].mxu0 %v1140
    %v1261 = vpop.f32.mrb[0].mxu0
    %v1262 = vadd.f32 0.0, %v1261
    %v1263 = vpop.f32.mrb[0].mxu0
    %1264 = vmatprep.mubr.f32.mxu0 %v1177
    %1265 = vmatmul.mubr.f32.gmra.mrb[0].mxu0 %v1142
    %v1266 = vpop.f32.mrb[0].mxu0
    %v1267 = vadd.f32 0.0, %v1266
    %v1268 = vpop.f32.mrb[0].mxu0
    %1269 = vmatprep.mubr.f32.mxu0 %v1180
    %1270 = vmatmul.mubr.f32.gmra.mrb[0].mxu0 %v1144
    %v1271 = vpop.f32.mrb[0].mxu0
    %v1272 = vadd.f32 0.0, %v1271
    %v1273 = vpop.f32.mrb[0].mxu0
    %1274 = vmatprep.mubr.f32.mxu0 %v1183
    %1275 = vmatmul.mubr.f32.gmra.mrb[0].mxu0 %v1146
    %v1276 = vpop.f32.mrb[0].mxu0
    %v1277 = vadd.f32 0.0, %v1276
    %v1278 = vpop.f32.mrb[0].mxu0
    %1279 = vdwg.mxu0
    %v1280 = vld [vmem:[%s4] sm:$0xff]
    %v1281 = vld [vmem:[%s4 + $0x8] sm:$0xff]
    %v1282 = vld [vmem:[%s4 + $0x10] sm:$0xff]
    %v1283 = vld [vmem:[%s4 + $0x18] sm:$0xff]
    %v1284 = vld [vmem:[%s4 + $0x20] sm:$0xff]
    %v1285 = vld [vmem:[%s4 + $0x28] sm:$0xff]
    %v1286 = vld [vmem:[%s4 + $0x30] sm:$0xff]
    %v1287 = vld [vmem:[%s4 + $0x38] sm:$0xff]
    %v1288 = vld [vmem:[%s4 + $0x40] sm:$0xff]
    %v1289 = vld [vmem:[%s4 + $0x48] sm:$0xff]
    %v1290 = vld [vmem:[%s4 + $0x50] sm:$0xff]
    %v1291 = vld [vmem:[%s4 + $0x58] sm:$0xff]
    %v1292 = vld [vmem:[%s4 + $0x60] sm:$0xff]
    %v1293 = vld [vmem:[%s4 + $0x68] sm:$0xff]
    %v1294 = vld [vmem:[%s4 + $0x70] sm:$0xff]
    %v1295 = vld [vmem:[%s4 + $0x78] sm:$0xff]
    %v1296 = vld [vmem:[%s4 + $0x80] sm:$0xff]
    %v1297 = vld [vmem:[%s4 + $0x88] sm:$0xff]
    %1298 = vmatprep.subr.mxu0 0.0
    %1299 = vmatpush1.msra.mxu0 %v1280
    %1300 = vmatprep.subr.mxu0 0.0
    %1301 = vmatpush1.msra.mxu0 %v1281
    %1302 = vmatprep.subr.mxu0 0.0
    %1303 = vmatpush1.msra.mxu0 %v1282
    %1304 = vmatprep.subr.mxu0 0.0
    %1305 = vmatpush1.msra.mxu0 %v1283
    %1306 = vmatprep.subr.mxu0 0.0
    %1307 = vmatpush1.msra.mxu0 %v1284
    %1308 = vmatprep.subr.mxu0 0.0
    %1309 = vmatpush1.msra.mxu0 %v1285
    %1310 = vmatprep.subr.mxu0 0.0
    %1311 = vmatpush1.msra.mxu0 %v1286
    %1312 = vmatprep.subr.mxu0 0.0
    %1313 = vmatpush1.msra.mxu0 %v1287
    %1314 = vmatprep.subr.mxu0 0.0
    %1315 = vmatpush1.msra.mxu0 %v1288
    %1316 = vmatprep.subr.mxu0 0.0
    %1317 = vmatpush1.msra.mxu0 %v1289
    %1318 = vmatprep.subr.mxu0 0.0
    %1319 = vmatpush1.msra.mxu0 %v1290
    %1320 = vmatprep.subr.mxu0 0.0
    %1321 = vmatpush1.msra.mxu0 %v1291
    %1322 = vmatprep.subr.mxu0 0.0
    %1323 = vmatpush1.msra.mxu0 %v1292
    %1324 = vmatprep.subr.mxu0 0.0
    %1325 = vmatpush1.msra.mxu0 %v1293
    %1326 = vmatprep.subr.mxu0 0.0
    %1327 = vmatpush1.msra.mxu0 %v1294
    %1328 = vmatprep.subr.mxu0 0.0
    %1329 = vmatpush1.msra.mxu0 %v1295
    %1330 = vmatprep.subr.mxu0 0.0
    %1331 = vmatpush1.msra.mxu0 %v1296
    %1332 = vmatprep.subr.mxu0 0.0
    %1333 = vmatpush1.msra.mxu0 %v1297
    %1334 = vmatprep.subr.mxu0 0.0
    %1335 = vmatpush1.msra.mxu0 0.0
    %1336 = vmatprep.subr.mxu0 0.0
    %1337 = vmatpush1.msra.mxu0 0.0
    %1338 = vmatprep.subr.mxu0 0.0
    %1339 = vmatpush1.msra.mxu0 0.0
    %1340 = vmatprep.subr.mxu0 0.0
    %1341 = vmatpush1.msra.mxu0 0.0
    %1342 = vmatprep.subr.mxu0 0.0
    %1343 = vmatpush1.msra.mxu0 0.0
    %1344 = vmatprep.subr.mxu0 0.0
    %1345 = vmatpush1.msra.mxu0 0.0
    %1346 = vmatprep.subr.mxu0 0.0
    %1347 = vmatpush1.msra.mxu0 0.0
    %1348 = vmatprep.subr.mxu0 0.0
    %1349 = vmatpush1.msra.mxu0 0.0
    %1350 = vmatprep.subr.mxu0 0.0
    %1351 = vmatpush1.msra.mxu0 0.0
    %1352 = vmatprep.subr.mxu0 0.0
    %1353 = vmatpush1.msra.mxu0 0.0
    %1354 = vmatprep.subr.mxu0 0.0
    %1355 = vmatpush1.msra.mxu0 0.0
    %1356 = vmatprep.subr.mxu0 0.0
    %1357 = vmatpush1.msra.mxu0 0.0
    %1358 = vmatprep.subr.mxu0 0.0
    %1359 = vmatpush1.msra.mxu0 0.0
    %1360 = vmatprep.subr.mxu0 0.0
    %1361 = vmatpush1.msra.mxu0 0.0
    %1362 = vmatprep.mubr.f32.mxu0 %v1168
    %1363 = vmatmul.mubr.f32.gmra.mrb[0].mxu0 %v1136
    %v1364 = vpop.f32.mrb[0].mxu0
    %v1365 = vadd.f32 0.0, %v1364
    %v1366 = vpop.f32.mrb[0].mxu0
    %1367 = vmatprep.mubr.f32.mxu0 %v1171
    %1368 = vmatmul.mubr.f32.gmra.mrb[0].mxu0 %v1138
    %v1369 = vpop.f32.mrb[0].mxu0
    %v1370 = vadd.f32 0.0, %v1369
    %v1371 = vpop.f32.mrb[0].mxu0
    %1372 = vmatprep.mubr.f32.mxu0 %v1174
    %1373 = vmatmul.mubr.f32.gmra.mrb[0].mxu0 %v1140
    %v1374 = vpop.f32.mrb[0].mxu0
    %v1375 = vadd.f32 0.0, %v1374
    %v1376 = vpop.f32.mrb[0].mxu0
    %1377 = vmatprep.mubr.f32.mxu0 %v1177
    %1378 = vmatmul.mubr.f32.gmra.mrb[0].mxu0 %v1142
    %v1379 = vpop.f32.mrb[0].mxu0
    %v1380 = vadd.f32 0.0, %v1379
    %v1381 = vpop.f32.mrb[0].mxu0
    %1382 = vmatprep.mubr.f32.mxu0 %v1180
    %1383 = vmatmul.mubr.f32.gmra.mrb[0].mxu0 %v1144
    %v1384 = vpop.f32.mrb[0].mxu0
    %v1385 = vadd.f32 0.0, %v1384
    %v1386 = vpop.f32.mrb[0].mxu0
    %1387 = vmatprep.mubr.f32.mxu0 %v1183
    %1388 = vmatmul.mubr.f32.gmra.mrb[0].mxu0 %v1146
    %v1389 = vpop.f32.mrb[0].mxu0
    %v1390 = vadd.f32 0.0, %v1389
    %v1391 = vpop.f32.mrb[0].mxu0
    %1392 = vdwg.mxu0
    %v1393 = vmax.f32 %v1252, %v1365
    %v1394 = vmax.f32 %v1257, %v1370
    %v1395 = vmax.f32 %v1262, %v1375
    %v1396 = vmax.f32 %v1267, %v1380
    %v1397 = vmax.f32 %v1272, %v1385
    %v1398 = vmax.f32 %v1277, %v1390
    %v1405 = vcombine.high %v1393, %v1393
    %v1407 = vunpack.c.l.s4 1983009808
    %v1408 = vunpack.c.0.s8 %v1407
    %v1409 = vlaneseq
    %v1410 = vshrl.u32 %v1409, 7
    %v1411 = vsub.s32 %v1408, %v1410
    %v1412 = vrot.slane %v1393, %v1411
    %v1414 = vunpack.c.l.s4 1983009808
    %v1415 = vunpack.c.0.s8 %v1414
    %v1416 = vlaneseq
    %v1417 = vshrl.u32 %v1416, 7
    %v1418 = vsub.s32 %v1415, %v1417
    %v1419 = vrot.slane %v1405, %v1418
    %v1420 = vcombine.high %v1412, %v1412
    %v1421 = vcombine.high %v1419, %v1419
    %v1422 = vcombine.high %v1394, %v1394
    %v1424 = vunpack.c.l.s4 1983009808
    %v1425 = vunpack.c.0.s8 %v1424
    %v1426 = vlaneseq
    %v1427 = vshrl.u32 %v1426, 7
    %v1428 = vsub.s32 %v1425, %v1427
    %v1429 = vrot.slane %v1394, %v1428
    %v1431 = vunpack.c.l.s4 1983009808
    %v1432 = vunpack.c.0.s8 %v1431
    %v1433 = vlaneseq
    %v1434 = vshrl.u32 %v1433, 7
    %v1435 = vsub.s32 %v1432, %v1434
    %v1436 = vrot.slane %v1422, %v1435
    %v1437 = vcombine.high %v1429, %v1429
    %v1438 = vcombine.high %v1436, %v1436
    %v1439 = vcombine.high %v1395, %v1395
    %v1441 = vunpack.c.l.s4 1983009808
    %v1442 = vunpack.c.0.s8 %v1441
    %v1443 = vlaneseq
    %v1444 = vshrl.u32 %v1443, 7
    %v1445 = vsub.s32 %v1442, %v1444
    %v1446 = vrot.slane %v1395, %v1445
    %v1448 = vunpack.c.l.s4 1983009808
    %v1449 = vunpack.c.0.s8 %v1448
    %v1450 = vlaneseq
    %v1451 = vshrl.u32 %v1450, 7
    %v1452 = vsub.s32 %v1449, %v1451
    %v1453 = vrot.slane %v1439, %v1452
    %v1454 = vcombine.high %v1446, %v1446
    %v1455 = vcombine.high %v1453, %v1453
    %v1456 = vcombine.high %v1396, %v1396
    %v1458 = vunpack.c.l.s4 1983009808
    %v1459 = vunpack.c.0.s8 %v1458
    %v1460 = vlaneseq
    %v1461 = vshrl.u32 %v1460, 7
    %v1462 = vsub.s32 %v1459, %v1461
    %v1463 = vrot.slane %v1396, %v1462
    %v1465 = vunpack.c.l.s4 1983009808
    %v1466 = vunpack.c.0.s8 %v1465
    %v1467 = vlaneseq
    %v1468 = vshrl.u32 %v1467, 7
    %v1469 = vsub.s32 %v1466, %v1468
    %v1470 = vrot.slane %v1456, %v1469
    %v1471 = vcombine.high %v1463, %v1463
    %v1472 = vcombine.high %v1470, %v1470
    %v1473 = vcombine.high %v1397, %v1397
    %v1475 = vunpack.c.l.s4 1983009808
    %v1476 = vunpack.c.0.s8 %v1475
    %v1477 = vlaneseq
    %v1478 = vshrl.u32 %v1477, 7
    %v1479 = vsub.s32 %v1476, %v1478
    %v1480 = vrot.slane %v1397, %v1479
    %v1482 = vunpack.c.l.s4 1983009808
    %v1483 = vunpack.c.0.s8 %v1482
    %v1484 = vlaneseq
    %v1485 = vshrl.u32 %v1484, 7
    %v1486 = vsub.s32 %v1483, %v1485
    %v1487 = vrot.slane %v1473, %v1486
    %v1488 = vcombine.high %v1480, %v1480
    %v1489 = vcombine.high %v1487, %v1487
    %v1490 = vcombine.high %v1398, %v1398
    %v1492 = vunpack.c.l.s4 1983009808
    %v1493 = vunpack.c.0.s8 %v1492
    %v1494 = vlaneseq
    %v1495 = vshrl.u32 %v1494, 7
    %v1496 = vsub.s32 %v1493, %v1495
    %v1497 = vrot.slane %v1398, %v1496
    %v1499 = vunpack.c.l.s4 1983009808
    %v1500 = vunpack.c.0.s8 %v1499
    %v1501 = vlaneseq
    %v1502 = vshrl.u32 %v1501, 7
    %v1503 = vsub.s32 %v1500, %v1502
    %v1504 = vrot.slane %v1490, %v1503
    %v1505 = vcombine.high %v1497, %v1497
    %v1506 = vcombine.high %v1504, %v1504
    %vm1531 = vcmask 582656
    %v1532 = vsel %vm1531, %v1412, -inf
    %v1533 = vsel %vm1531, %v1420, -inf
    %v1534 = vmax.f32 %v1532, %v1533
    %v1535 = vsel %vm1531, %v1419, -inf
    %v1536 = vsel %vm1531, %v1421, -inf
    %v1537 = vmax.f32 %v1535, %v1536
    %v1538 = vsel %vm1531, %v1429, -inf
    %v1539 = vsel %vm1531, %v1437, -inf
    %v1540 = vmax.f32 %v1538, %v1539
    %v1541 = vsel %vm1531, %v1436, -inf
    %v1542 = vsel %vm1531, %v1438, -inf
    %v1543 = vmax.f32 %v1541, %v1542
    %v1544 = vsel %vm1531, %v1446, -inf
    %v1545 = vsel %vm1531, %v1454, -inf
    %v1546 = vmax.f32 %v1544, %v1545
    %v1547 = vsel %vm1531, %v1453, -inf
    %v1548 = vsel %vm1531, %v1455, -inf
    %v1549 = vmax.f32 %v1547, %v1548
    %v1550 = vsel %vm1531, %v1463, -inf
    %v1551 = vsel %vm1531, %v1471, -inf
    %v1552 = vmax.f32 %v1550, %v1551
    %v1553 = vsel %vm1531, %v1470, -inf
    %v1554 = vsel %vm1531, %v1472, -inf
    %v1555 = vmax.f32 %v1553, %v1554
    %v1556 = vsel %vm1531, %v1480, -inf
    %v1557 = vsel %vm1531, %v1488, -inf
    %v1558 = vmax.f32 %v1556, %v1557
    %v1559 = vsel %vm1531, %v1487, -inf
    %v1560 = vsel %vm1531, %v1489, -inf
    %v1561 = vmax.f32 %v1559, %v1560
    %v1562 = vsel %vm1531, %v1497, -inf
    %v1563 = vsel %vm1531, %v1505, -inf
    %v1564 = vmax.f32 %v1562, %v1563
    %v1565 = vsel %vm1531, %v1504, -inf
    %v1566 = vsel %vm1531, %v1506, -inf
    %v1567 = vmax.f32 %v1565, %v1566
    %v1568 = vld [vmem:[#allocation7] sm:$0xff]
    %v1569 = vld [vmem:[#allocation7 + $0x8] sm:$0xff]
    %v1570 = vld [vmem:[#allocation7 + $0x10] sm:$0xff]
    %v1571 = vld [vmem:[#allocation7 + $0x18] sm:$0xff]
    %v1572 = vld [vmem:[#allocation7 + $0x20] sm:$0xff]
    %v1573 = vld [vmem:[#allocation7 + $0x28] sm:$0xff]
    %v1574 = vld [vmem:[#allocation7 + $0x30] sm:$0xff]
    %v1575 = vld [vmem:[#allocation7 + $0x38] sm:$0xff]
    %v1576 = vld [vmem:[#allocation7 + $0x40] sm:$0xff]
    %v1577 = vld [vmem:[#allocation7 + $0x48] sm:$0xff]
    %v1578 = vld [vmem:[#allocation7 + $0x50] sm:$0xff]
    %v1579 = vld [vmem:[#allocation7 + $0x58] sm:$0xff]
    %v1580 = vld [vmem:[#allocation7 + $0x60] sm:$0xff]
    %v1581 = vld [vmem:[#allocation7 + $0x68] sm:$0xff]
    %v1582 = vld [vmem:[#allocation7 + $0x70] sm:$0xff]
    %v1583 = vld [vmem:[#allocation7 + $0x78] sm:$0xff]
    %v1584 = vld [vmem:[#allocation7 + $0x80] sm:$0xff]
    %v1585 = vld [vmem:[#allocation7 + $0x88] sm:$0xff]
    %s1586 = scalar_lea.vmem [#allocation7], 144
    %v1587 = vld [vmem:[%s1586] sm:$0xff]
    %v1588 = vld [vmem:[%s1586 + $0x8] sm:$0xff]
    %v1589 = vld [vmem:[%s1586 + $0x10] sm:$0xff]
    %v1590 = vld [vmem:[%s1586 + $0x18] sm:$0xff]
    %v1591 = vld [vmem:[%s1586 + $0x20] sm:$0xff]
    %v1592 = vld [vmem:[%s1586 + $0x28] sm:$0xff]
    %v1593 = vld [vmem:[%s1586 + $0x30] sm:$0xff]
    %v1594 = vld [vmem:[%s1586 + $0x38] sm:$0xff]
    %v1595 = vld [vmem:[%s1586 + $0x40] sm:$0xff]
    %v1596 = vld [vmem:[%s1586 + $0x48] sm:$0xff]
    %v1597 = vld [vmem:[%s1586 + $0x50] sm:$0xff]
    %v1598 = vld [vmem:[%s1586 + $0x58] sm:$0xff]
    %v1599 = vld [vmem:[%s1586 + $0x60] sm:$0xff]
    %v1600 = vld [vmem:[%s1586 + $0x68] sm:$0xff]
    %v1601 = vld [vmem:[%s1586 + $0x70] sm:$0xff]
    %v1602 = vld [vmem:[%s1586 + $0x78] sm:$0xff]
    %v1603 = vld [vmem:[%s1586 + $0x80] sm:$0xff]
    %v1604 = vld [vmem:[%s1586 + $0x88] sm:$0xff]
    %v1617 = vcombine.low %v1534, %v1537
    %v1618 = vcombine.low %v1540, %v1543
    %v1620 = vunpack.c.l.s4 1983009808
    %v1621 = vunpack.c.0.s8 %v1620
    %v1622 = vlaneseq
    %v1623 = vshrl.u32 %v1622, 7
    %v1624 = vsub.s32 %v1621, %v1623
    %v1625 = vrot.slane %v1617, %v1624
    %v1627 = vunpack.c.l.s4 1983009808
    %v1628 = vunpack.c.0.s8 %v1627
    %v1629 = vlaneseq
    %v1630 = vshrl.u32 %v1629, 7
    %v1631 = vsub.s32 %v1628, %v1630
    %v1632 = vrot.slane %v1618, %v1631
    %v1633 = vcombine.low %v1625, %v1632
    %v1634 = vcombine.low %v1546, %v1549
    %v1635 = vcombine.low %v1552, %v1555
    %v1637 = vunpack.c.l.s4 1983009808
    %v1638 = vunpack.c.0.s8 %v1637
    %v1639 = vlaneseq
    %v1640 = vshrl.u32 %v1639, 7
    %v1641 = vsub.s32 %v1638, %v1640
    %v1642 = vrot.slane %v1634, %v1641
    %v1644 = vunpack.c.l.s4 1983009808
    %v1645 = vunpack.c.0.s8 %v1644
    %v1646 = vlaneseq
    %v1647 = vshrl.u32 %v1646, 7
    %v1648 = vsub.s32 %v1645, %v1647
    %v1649 = vrot.slane %v1635, %v1648
    %v1650 = vcombine.low %v1642, %v1649
    %v1651 = vcombine.low %v1558, %v1561
    %v1652 = vcombine.low %v1564, %v1567
    %v1654 = vunpack.c.l.s4 1983009808
    %v1655 = vunpack.c.0.s8 %v1654
    %v1656 = vlaneseq
    %v1657 = vshrl.u32 %v1656, 7
    %v1658 = vsub.s32 %v1655, %v1657
    %v1659 = vrot.slane %v1651, %v1658
    %v1661 = vunpack.c.l.s4 1983009808
    %v1662 = vunpack.c.0.s8 %v1661
    %v1663 = vlaneseq
    %v1664 = vshrl.u32 %v1663, 7
    %v1665 = vsub.s32 %v1662, %v1664
    %v1666 = vrot.slane %v1652, %v1665
    %v1667 = vcombine.low %v1659, %v1666
    %vm1668 = vcmask 588800
    %v1669 = vsel %vm1668, %v1633, 0
    %v1671 = vsel %vm1668, %v1650, 0
    %v1673 = vsel %vm1668, %v1667, 0
    %1675 = vmatprep.subr.mxu0 %v1588
    %1676 = vmatpush1.msra.mxu0 %v1587
    %1677 = vmatprep.subr.mxu0 %v1590
    %1678 = vmatpush1.msra.mxu0 %v1589
    %1679 = vmatprep.subr.mxu0 %v1592
    %1680 = vmatpush1.msra.mxu0 %v1591
    %1681 = vmatprep.subr.mxu0 %v1594
    %1682 = vmatpush1.msra.mxu0 %v1593
    %1683 = vmatprep.subr.mxu0 %v1596
    %1684 = vmatpush1.msra.mxu0 %v1595
    %1685 = vmatprep.subr.mxu0 %v1598
    %1686 = vmatpush1.msra.mxu0 %v1597
    %1687 = vmatprep.subr.mxu0 %v1600
    %1688 = vmatpush1.msra.mxu0 %v1599
    %1689 = vmatprep.subr.mxu0 %v1602
    %1690 = vmatpush1.msra.mxu0 %v1601
    %1691 = vmatprep.subr.mxu0 %v1604
    %1692 = vmatpush1.msra.mxu0 %v1603
    %1693 = vmatprep.subr.mxu0 0.0
    %1694 = vmatpush1.msra.mxu0 0.0
    %1695 = vmatprep.subr.mxu0 0.0
    %1696 = vmatpush1.msra.mxu0 0.0
    %1697 = vmatprep.subr.mxu0 0.0
    %1698 = vmatpush1.msra.mxu0 0.0
    %1699 = vmatprep.subr.mxu0 0.0
    %1700 = vmatpush1.msra.mxu0 0.0
    %1701 = vmatprep.subr.mxu0 0.0
    %1702 = vmatpush1.msra.mxu0 0.0
    %1703 = vmatprep.subr.mxu0 0.0
    %1704 = vmatpush1.msra.mxu0 0.0
    %1705 = vmatprep.subr.mxu0 0.0
    %1706 = vmatpush1.msra.mxu0 0.0
    %1707 = vmatprep.subr.mxu0 0.0
    %1708 = vmatpush1.msra.mxu0 0.0
    %1709 = vmatprep.subr.mxu0 0.0
    %1710 = vmatpush1.msra.mxu0 0.0
    %1711 = vmatprep.subr.mxu0 0.0
    %1712 = vmatpush1.msra.mxu0 0.0
    %1713 = vmatprep.subr.mxu0 0.0
    %1714 = vmatpush1.msra.mxu0 0.0
    %1715 = vmatprep.subr.mxu0 0.0
    %1716 = vmatpush1.msra.mxu0 0.0
    %1717 = vmatprep.subr.mxu0 0.0
    %1718 = vmatpush1.msra.mxu0 0.0
    %1719 = vmatprep.subr.mxu0 0.0
    %1720 = vmatpush1.msra.mxu0 0.0
    %1721 = vmatprep.subr.mxu0 0.0
    %1722 = vmatpush1.msra.mxu0 0.0
    %1723 = vmatprep.subr.mxu0 0.0
    %1724 = vmatpush1.msra.mxu0 0.0
    %1725 = vmatprep.subr.mxu0 0.0
    %1726 = vmatpush1.msra.mxu0 0.0
    %1727 = vmatprep.subr.mxu0 0.0
    %1728 = vmatpush1.msra.mxu0 0.0
    %1729 = vmatprep.subr.mxu0 0.0
    %1730 = vmatpush1.msra.mxu0 0.0
    %1731 = vmatprep.subr.mxu0 0.0
    %1732 = vmatpush1.msra.mxu0 0.0
    %1733 = vmatprep.subr.mxu0 0.0
    %1734 = vmatpush1.msra.mxu0 0.0
    %1735 = vmatprep.subr.mxu0 0.0
    %1736 = vmatpush1.msra.mxu0 0.0
    %1737 = vmatprep.subr.mxu0 0.0
    %1738 = vmatpush1.msra.mxu0 0.0
    %1739 = vmatprep.mubr.f32.mxu0 0.0
    %1740 = vmatmul.mubr.f32.gmra.mrb[0].mxu0 %v1669
    %v1741 = vpop.f32.mrb[0].mxu0
    %v1742 = vadd.f32 0.0, %v1741
    %v1743 = vpop.f32.mrb[0].mxu0
    %v1744 = vadd.f32 0.0, %v1743
    %1745 = vmatprep.mubr.f32.mxu0 0.0
    %1746 = vmatmul.mubr.f32.gmra.mrb[0].mxu0 %v1671
    %v1747 = vpop.f32.mrb[0].mxu0
    %v1748 = vadd.f32 0.0, %v1747
    %v1749 = vpop.f32.mrb[0].mxu0
    %v1750 = vadd.f32 0.0, %v1749
    %1751 = vmatprep.mubr.f32.mxu0 0.0
    %1752 = vmatmul.mubr.f32.gmra.mrb[0].mxu0 %v1673
    %v1753 = vpop.f32.mrb[0].mxu0
    %v1754 = vadd.f32 0.0, %v1753
    %v1755 = vpop.f32.mrb[0].mxu0
    %v1756 = vadd.f32 0.0, %v1755
    %1757 = vdwg.mxu0
    %v1759 = vcombine.low 0.0, %v1534
    %v1760 = vcombine.low %v1537, %v1540
    %v1762 = vunpack.c.l.s4 1983009808
    %v1763 = vunpack.c.0.s8 %v1762
    %v1764 = vlaneseq
    %v1765 = vshrl.u32 %v1764, 7
    %v1766 = vsub.s32 %v1763, %v1765
    %v1767 = vrot.slane %v1759, %v1766
    %v1769 = vunpack.c.l.s4 1983009808
    %v1770 = vunpack.c.0.s8 %v1769
    %v1771 = vlaneseq
    %v1772 = vshrl.u32 %v1771, 7
    %v1773 = vsub.s32 %v1770, %v1772
    %v1774 = vrot.slane %v1760, %v1773
    %v1775 = vcombine.low %v1767, %v1774
    %v1776 = vcombine.low %v1543, %v1546
    %v1777 = vcombine.low %v1549, %v1552
    %v1779 = vunpack.c.l.s4 1983009808
    %v1780 = vunpack.c.0.s8 %v1779
    %v1781 = vlaneseq
    %v1782 = vshrl.u32 %v1781, 7
    %v1783 = vsub.s32 %v1780, %v1782
    %v1784 = vrot.slane %v1776, %v1783
    %v1786 = vunpack.c.l.s4 1983009808
    %v1787 = vunpack.c.0.s8 %v1786
    %v1788 = vlaneseq
    %v1789 = vshrl.u32 %v1788, 7
    %v1790 = vsub.s32 %v1787, %v1789
    %v1791 = vrot.slane %v1777, %v1790
    %v1792 = vcombine.low %v1784, %v1791
    %v1793 = vcombine.low %v1555, %v1558
    %v1794 = vcombine.low %v1561, %v1564
    %v1796 = vunpack.c.l.s4 1983009808
    %v1797 = vunpack.c.0.s8 %v1796
    %v1798 = vlaneseq
    %v1799 = vshrl.u32 %v1798, 7
    %v1800 = vsub.s32 %v1797, %v1799
    %v1801 = vrot.slane %v1793, %v1800
    %v1803 = vunpack.c.l.s4 1983009808
    %v1804 = vunpack.c.0.s8 %v1803
    %v1805 = vlaneseq
    %v1806 = vshrl.u32 %v1805, 7
    %v1807 = vsub.s32 %v1804, %v1806
    %v1808 = vrot.slane %v1794, %v1807
    %v1809 = vcombine.low %v1801, %v1808
    %v1810 = vsel %vm1668, %v1775, 0
    %v1812 = vsel %vm1668, %v1792, 0
    %v1814 = vsel %vm1668, %v1809, 0
    %1816 = vmatprep.subr.mxu0 %v1569
    %1817 = vmatpush1.msra.mxu0 %v1568
    %1818 = vmatprep.subr.mxu0 %v1571
    %1819 = vmatpush1.msra.mxu0 %v1570
    %1820 = vmatprep.subr.mxu0 %v1573
    %1821 = vmatpush1.msra.mxu0 %v1572
    %1822 = vmatprep.subr.mxu0 %v1575
    %1823 = vmatpush1.msra.mxu0 %v1574
    %1824 = vmatprep.subr.mxu0 %v1577
    %1825 = vmatpush1.msra.mxu0 %v1576
    %1826 = vmatprep.subr.mxu0 %v1579
    %1827 = vmatpush1.msra.mxu0 %v1578
    %1828 = vmatprep.subr.mxu0 %v1581
    %1829 = vmatpush1.msra.mxu0 %v1580
    %1830 = vmatprep.subr.mxu0 %v1583
    %1831 = vmatpush1.msra.mxu0 %v1582
    %1832 = vmatprep.subr.mxu0 %v1585
    %1833 = vmatpush1.msra.mxu0 %v1584
    %1834 = vmatprep.subr.mxu0 0.0
    %1835 = vmatpush1.msra.mxu0 0.0
    %1836 = vmatprep.subr.mxu0 0.0
    %1837 = vmatpush1.msra.mxu0 0.0
    %1838 = vmatprep.subr.mxu0 0.0
    %1839 = vmatpush1.msra.mxu0 0.0
    %1840 = vmatprep.subr.mxu0 0.0
    %1841 = vmatpush1.msra.mxu0 0.0
    %1842 = vmatprep.subr.mxu0 0.0
    %1843 = vmatpush1.msra.mxu0 0.0
    %1844 = vmatprep.subr.mxu0 0.0
    %1845 = vmatpush1.msra.mxu0 0.0
    %1846 = vmatprep.subr.mxu0 0.0
    %1847 = vmatpush1.msra.mxu0 0.0
    %1848 = vmatprep.subr.mxu0 0.0
    %1849 = vmatpush1.msra.mxu0 0.0
    %1850 = vmatprep.subr.mxu0 0.0
    %1851 = vmatpush1.msra.mxu0 0.0
    %1852 = vmatprep.subr.mxu0 0.0
    %1853 = vmatpush1.msra.mxu0 0.0
    %1854 = vmatprep.subr.mxu0 0.0
    %1855 = vmatpush1.msra.mxu0 0.0
    %1856 = vmatprep.subr.mxu0 0.0
    %1857 = vmatpush1.msra.mxu0 0.0
    %1858 = vmatprep.subr.mxu0 0.0
    %1859 = vmatpush1.msra.mxu0 0.0
    %1860 = vmatprep.subr.mxu0 0.0
    %1861 = vmatpush1.msra.mxu0 0.0
    %1862 = vmatprep.subr.mxu0 0.0
    %1863 = vmatpush1.msra.mxu0 0.0
    %1864 = vmatprep.subr.mxu0 0.0
    %1865 = vmatpush1.msra.mxu0 0.0
    %1866 = vmatprep.subr.mxu0 0.0
    %1867 = vmatpush1.msra.mxu0 0.0
    %1868 = vmatprep.subr.mxu0 0.0
    %1869 = vmatpush1.msra.mxu0 0.0
    %1870 = vmatprep.subr.mxu0 0.0
    %1871 = vmatpush1.msra.mxu0 0.0
    %1872 = vmatprep.subr.mxu0 0.0
    %1873 = vmatpush1.msra.mxu0 0.0
    %1874 = vmatprep.subr.mxu0 0.0
    %1875 = vmatpush1.msra.mxu0 0.0
    %1876 = vmatprep.subr.mxu0 0.0
    %1877 = vmatpush1.msra.mxu0 0.0
    %1878 = vmatprep.subr.mxu0 0.0
    %1879 = vmatpush1.msra.mxu0 0.0
    %1880 = vmatprep.mubr.f32.mxu0 0.0
    %1881 = vmatmul.mubr.f32.gmra.mrb[0].mxu0 %v1810
    %v1882 = vpop.f32.mrb[0].mxu0
    %v1883 = vadd.f32 %v1742, %v1882
    %v1884 = vpop.f32.mrb[0].mxu0
    %v1885 = vadd.f32 %v1744, %v1884
    %1886 = vmatprep.mubr.f32.mxu0 0.0
    %1887 = vmatmul.mubr.f32.gmra.mrb[0].mxu0 %v1812
    %v1888 = vpop.f32.mrb[0].mxu0
    %v1889 = vadd.f32 %v1748, %v1888
    %v1890 = vpop.f32.mrb[0].mxu0
    %v1891 = vadd.f32 %v1750, %v1890
    %1892 = vmatprep.mubr.f32.mxu0 0.0
    %1893 = vmatmul.mubr.f32.gmra.mrb[0].mxu0 %v1814
    %v1894 = vpop.f32.mrb[0].mxu0
    %v1895 = vadd.f32 %v1754, %v1894
    %v1896 = vpop.f32.mrb[0].mxu0
    %v1897 = vadd.f32 %v1756, %v1896
    %1898 = vdwg.mxu0
    %s1899 = scalar_lea.vmem [#allocation7], 288
    %v1900 = vld [vmem:[%s1899] sm:$0xff]
    %v1901 = vld [vmem:[%s1899 + $0x8] sm:$0xff]
    %v1902 = vld [vmem:[%s1899 + $0x10] sm:$0xff]
    %v1903 = vld [vmem:[%s1899 + $0x18] sm:$0xff]
    %v1904 = vld [vmem:[%s1899 + $0x20] sm:$0xff]
    %v1905 = vld [vmem:[%s1899 + $0x28] sm:$0xff]
    %v1906 = vld [vmem:[%s1899 + $0x30] sm:$0xff]
    %v1907 = vld [vmem:[%s1899 + $0x38] sm:$0xff]
    %v1908 = vld [vmem:[%s1899 + $0x40] sm:$0xff]
    %v1909 = vld [vmem:[%s1899 + $0x48] sm:$0xff]
    %v1910 = vld [vmem:[%s1899 + $0x50] sm:$0xff]
    %v1911 = vld [vmem:[%s1899 + $0x58] sm:$0xff]
    %v1912 = vld [vmem:[%s1899 + $0x60] sm:$0xff]
    %v1913 = vld [vmem:[%s1899 + $0x68] sm:$0xff]
    %v1914 = vld [vmem:[%s1899 + $0x70] sm:$0xff]
    %v1915 = vld [vmem:[%s1899 + $0x78] sm:$0xff]
    %v1916 = vld [vmem:[%s1899 + $0x80] sm:$0xff]
    %v1917 = vld [vmem:[%s1899 + $0x88] sm:$0xff]
    %v1918 = vcombine.low %v1774, %v1784
    %v1919 = vcombine.low %v1791, %v1801
    %v1920 = vcombine.low %v1567, 0.0
    %v1922 = vunpack.c.l.s4 1983009808
    %v1923 = vunpack.c.0.s8 %v1922
    %v1924 = vlaneseq
    %v1925 = vshrl.u32 %v1924, 7
    %v1926 = vsub.s32 %v1923, %v1925
    %v1927 = vrot.slane %v1920, %v1926
    %v1928 = vcombine.low %v1808, %v1927
    %v1929 = vsel %vm1668, %v1918, 0
    %v1931 = vsel %vm1668, %v1919, 0
    %v1933 = vsel %vm1668, %v1928, 0
    %1935 = vmatprep.subr.mxu0 %v1901
    %1936 = vmatpush1.msra.mxu0 %v1900
    %1937 = vmatprep.subr.mxu0 %v1903
    %1938 = vmatpush1.msra.mxu0 %v1902
    %1939 = vmatprep.subr.mxu0 %v1905
    %1940 = vmatpush1.msra.mxu0 %v1904
    %1941 = vmatprep.subr.mxu0 %v1907
    %1942 = vmatpush1.msra.mxu0 %v1906
    %1943 = vmatprep.subr.mxu0 %v1909
    %1944 = vmatpush1.msra.mxu0 %v1908
    %1945 = vmatprep.subr.mxu0 %v1911
    %1946 = vmatpush1.msra.mxu0 %v1910
    %1947 = vmatprep.subr.mxu0 %v1913
    %1948 = vmatpush1.msra.mxu0 %v1912
    %1949 = vmatprep.subr.mxu0 %v1915
    %1950 = vmatpush1.msra.mxu0 %v1914
    %1951 = vmatprep.subr.mxu0 %v1917
    %1952 = vmatpush1.msra.mxu0 %v1916
    %1953 = vmatprep.subr.mxu0 0.0
    %1954 = vmatpush1.msra.mxu0 0.0
    %1955 = vmatprep.subr.mxu0 0.0
    %1956 = vmatpush1.msra.mxu0 0.0
    %1957 = vmatprep.subr.mxu0 0.0
    %1958 = vmatpush1.msra.mxu0 0.0
    %1959 = vmatprep.subr.mxu0 0.0
    %1960 = vmatpush1.msra.mxu0 0.0
    %1961 = vmatprep.subr.mxu0 0.0
    %1962 = vmatpush1.msra.mxu0 0.0
    %1963 = vmatprep.subr.mxu0 0.0
    %1964 = vmatpush1.msra.mxu0 0.0
    %1965 = vmatprep.subr.mxu0 0.0
    %1966 = vmatpush1.msra.mxu0 0.0
    %1967 = vmatprep.subr.mxu0 0.0
    %1968 = vmatpush1.msra.mxu0 0.0
    %1969 = vmatprep.subr.mxu0 0.0
    %1970 = vmatpush1.msra.mxu0 0.0
    %1971 = vmatprep.subr.mxu0 0.0
    %1972 = vmatpush1.msra.mxu0 0.0
    %1973 = vmatprep.subr.mxu0 0.0
    %1974 = vmatpush1.msra.mxu0 0.0
    %1975 = vmatprep.subr.mxu0 0.0
    %1976 = vmatpush1.msra.mxu0 0.0
    %1977 = vmatprep.subr.mxu0 0.0
    %1978 = vmatpush1.msra.mxu0 0.0
    %1979 = vmatprep.subr.mxu0 0.0
    %1980 = vmatpush1.msra.mxu0 0.0
    %1981 = vmatprep.subr.mxu0 0.0
    %1982 = vmatpush1.msra.mxu0 0.0
    %1983 = vmatprep.subr.mxu0 0.0
    %1984 = vmatpush1.msra.mxu0 0.0
    %1985 = vmatprep.subr.mxu0 0.0
    %1986 = vmatpush1.msra.mxu0 0.0
    %1987 = vmatprep.subr.mxu0 0.0
    %1988 = vmatpush1.msra.mxu0 0.0
    %1989 = vmatprep.subr.mxu0 0.0
    %1990 = vmatpush1.msra.mxu0 0.0
    %1991 = vmatprep.subr.mxu0 0.0
    %1992 = vmatpush1.msra.mxu0 0.0
    %1993 = vmatprep.subr.mxu0 0.0
    %1994 = vmatpush1.msra.mxu0 0.0
    %1995 = vmatprep.subr.mxu0 0.0
    %1996 = vmatpush1.msra.mxu0 0.0
    %1997 = vmatprep.subr.mxu0 0.0
    %1998 = vmatpush1.msra.mxu0 0.0
    %1999 = vmatprep.mubr.f32.mxu0 0.0
    %2000 = vmatmul.mubr.f32.gmra.mrb[0].mxu0 %v1929
    %v2001 = vpop.f32.mrb[0].mxu0
    %v2002 = vadd.f32 0.0, %v2001
    %v2003 = vpop.f32.mrb[0].mxu0
    %v2004 = vadd.f32 0.0, %v2003
    %2005 = vmatprep.mubr.f32.mxu0 0.0
    %2006 = vmatmul.mubr.f32.gmra.mrb[0].mxu0 %v1931
    %v2007 = vpop.f32.mrb[0].mxu0
    %v2008 = vadd.f32 0.0, %v2007
    %v2009 = vpop.f32.mrb[0].mxu0
    %v2010 = vadd.f32 0.0, %v2009
    %2011 = vmatprep.mubr.f32.mxu0 0.0
    %2012 = vmatmul.mubr.f32.gmra.mrb[0].mxu0 %v1933
    %v2013 = vpop.f32.mrb[0].mxu0
    %v2014 = vadd.f32 0.0, %v2013
    %v2015 = vpop.f32.mrb[0].mxu0
    %v2016 = vadd.f32 0.0, %v2015
    %2017 = vdwg.mxu0
    %v2018 = vadd.f32 %v1883, %v2002
    %v2019 = vadd.f32 %v1885, %v2004
    %v2020 = vadd.f32 %v1889, %v2008
    %v2021 = vadd.f32 %v1891, %v2010
    %v2022 = vadd.f32 %v1895, %v2014
    %v2023 = vadd.f32 %v1897, %v2016
    %v2024 = vld [vmem:[#allocation8] sm:$0x3]
    %v2026 = vlaneseq
    %v2027 = vshrl.u32 %v2026, 7
    %v2028 = vsub.s32 0, %v2027
    %v2029 = vrot.slane %v2024, %v2028
    %v2030 = vlaneseq
    %v2031 = vshrl.u32 %v2030, 7
    %v2032 = vsub.s32 1, %v2031
    %v2033 = vrot.slane %v2024, %v2032
    %v2036 = vadd.f32 %v2018, %v2029
    %v2037 = vadd.f32 %v2019, %v2033
    %v2038 = vadd.f32 %v2020, %v2029
    %v2039 = vadd.f32 %v2021, %v2033
    %v2040 = vadd.f32 %v2022, %v2029
    %v2041 = vadd.f32 %v2023, %v2033
    %v2042 = vmax.f32 %v2036, 0.0
    %v2043 = vmax.f32 %v2037, 0.0
    %v2044 = vmax.f32 %v2038, 0.0
    %v2045 = vmax.f32 %v2039, 0.0
    %v2046 = vmax.f32 %v2040, 0.0
    %v2047 = vmax.f32 %v2041, 0.0
    %v2048 = vld [vmem:[#allocation10] sm:$0xff]
    %v2049 = vld [vmem:[#allocation10 + $0x8] sm:$0xff]
    %v2050 = vld [vmem:[#allocation10 + $0x10] sm:$0xff]
    %v2051 = vld [vmem:[#allocation10 + $0x18] sm:$0xff]
    %v2052 = vld [vmem:[#allocation10 + $0x20] sm:$0xff]
    %v2053 = vld [vmem:[#allocation10 + $0x28] sm:$0xff]
    %v2054 = vld [vmem:[#allocation10 + $0x30] sm:$0xff]
    %v2055 = vld [vmem:[#allocation10 + $0x38] sm:$0xff]
    %v2056 = vld [vmem:[#allocation10 + $0x40] sm:$0xff]
    %v2057 = vld [vmem:[#allocation10 + $0x48] sm:$0xff]
    %v2058 = vld [vmem:[#allocation10 + $0x50] sm:$0xff]
    %v2059 = vld [vmem:[#allocation10 + $0x58] sm:$0xff]
    %v2060 = vld [vmem:[#allocation10 + $0x60] sm:$0xff]
    %v2061 = vld [vmem:[#allocation10 + $0x68] sm:$0xff]
    %v2062 = vld [vmem:[#allocation10 + $0x70] sm:$0xff]
    %v2063 = vld [vmem:[#allocation10 + $0x78] sm:$0xff]
    %v2064 = vld [vmem:[#allocation10 + $0x80] sm:$0xff]
    %v2065 = vld [vmem:[#allocation10 + $0x88] sm:$0xff]
    %v2067 = vsel %vm1166, %v2043, 0
    %v2070 = vsel %vm1166, %v2045, 0
    %v2073 = vsel %vm1166, %v2047, 0
    %2075 = vmatprep.subr.mxu0 0.0
    %2076 = vmatpush1.msra.mxu0 %v2048
    %2077 = vmatprep.subr.mxu0 0.0
    %2078 = vmatpush1.msra.mxu0 %v2049
    %2079 = vmatprep.subr.mxu0 0.0
    %2080 = vmatpush1.msra.mxu0 %v2050
    %2081 = vmatprep.subr.mxu0 0.0
    %2082 = vmatpush1.msra.mxu0 %v2051
    %2083 = vmatprep.subr.mxu0 0.0
    %2084 = vmatpush1.msra.mxu0 %v2052
    %2085 = vmatprep.subr.mxu0 0.0
    %2086 = vmatpush1.msra.mxu0 %v2053
    %2087 = vmatprep.subr.mxu0 0.0
    %2088 = vmatpush1.msra.mxu0 %v2054
    %2089 = vmatprep.subr.mxu0 0.0
    %2090 = vmatpush1.msra.mxu0 %v2055
    %2091 = vmatprep.subr.mxu0 0.0
    %2092 = vmatpush1.msra.mxu0 %v2056
    %2093 = vmatprep.subr.mxu0 0.0
    %2094 = vmatpush1.msra.mxu0 %v2057
    %2095 = vmatprep.subr.mxu0 0.0
    %2096 = vmatpush1.msra.mxu0 %v2058
    %2097 = vmatprep.subr.mxu0 0.0
    %2098 = vmatpush1.msra.mxu0 %v2059
    %2099 = vmatprep.subr.mxu0 0.0
    %2100 = vmatpush1.msra.mxu0 %v2060
    %2101 = vmatprep.subr.mxu0 0.0
    %2102 = vmatpush1.msra.mxu0 %v2061
    %2103 = vmatprep.subr.mxu0 0.0
    %2104 = vmatpush1.msra.mxu0 %v2062
    %2105 = vmatprep.subr.mxu0 0.0
    %2106 = vmatpush1.msra.mxu0 %v2063
    %2107 = vmatprep.subr.mxu0 0.0
    %2108 = vmatpush1.msra.mxu0 %v2064
    %2109 = vmatprep.subr.mxu0 0.0
    %2110 = vmatpush1.msra.mxu0 %v2065
    %2111 = vmatprep.subr.mxu0 0.0
    %2112 = vmatpush1.msra.mxu0 0.0
    %2113 = vmatprep.subr.mxu0 0.0
    %2114 = vmatpush1.msra.mxu0 0.0
    %2115 = vmatprep.subr.mxu0 0.0
    %2116 = vmatpush1.msra.mxu0 0.0
    %2117 = vmatprep.subr.mxu0 0.0
    %2118 = vmatpush1.msra.mxu0 0.0
    %2119 = vmatprep.subr.mxu0 0.0
    %2120 = vmatpush1.msra.mxu0 0.0
    %2121 = vmatprep.subr.mxu0 0.0
    %2122 = vmatpush1.msra.mxu0 0.0
    %2123 = vmatprep.subr.mxu0 0.0
    %2124 = vmatpush1.msra.mxu0 0.0
    %2125 = vmatprep.subr.mxu0 0.0
    %2126 = vmatpush1.msra.mxu0 0.0
    %2127 = vmatprep.subr.mxu0 0.0
    %2128 = vmatpush1.msra.mxu0 0.0
    %2129 = vmatprep.subr.mxu0 0.0
    %2130 = vmatpush1.msra.mxu0 0.0
    %2131 = vmatprep.subr.mxu0 0.0
    %2132 = vmatpush1.msra.mxu0 0.0
    %2133 = vmatprep.subr.mxu0 0.0
    %2134 = vmatpush1.msra.mxu0 0.0
    %2135 = vmatprep.subr.mxu0 0.0
    %2136 = vmatpush1.msra.mxu0 0.0
    %2137 = vmatprep.subr.mxu0 0.0
    %2138 = vmatpush1.msra.mxu0 0.0
    %2139 = vmatprep.mubr.f32.mxu0 %v2067
    %2140 = vmatmul.mubr.f32.gmra.mrb[0].mxu0 %v2042
    %v2141 = vpop.f32.mrb[0].mxu0
    %v2142 = vadd.f32 0.0, %v2141
    %v2143 = vpop.f32.mrb[0].mxu0
    %2144 = vmatprep.mubr.f32.mxu0 %v2070
    %2145 = vmatmul.mubr.f32.gmra.mrb[0].mxu0 %v2044
    %v2146 = vpop.f32.mrb[0].mxu0
    %v2147 = vadd.f32 0.0, %v2146
    %v2148 = vpop.f32.mrb[0].mxu0
    %2149 = vmatprep.mubr.f32.mxu0 %v2073
    %2150 = vmatmul.mubr.f32.gmra.mrb[0].mxu0 %v2046
    %v2151 = vpop.f32.mrb[0].mxu0
    %v2152 = vadd.f32 0.0, %v2151
    %v2153 = vpop.f32.mrb[0].mxu0
    %2154 = vdwg.mxu0
    %v2155 = vld [vmem:[#allocation11] sm:$0xff]
    %v2156 = vld [vmem:[#allocation11 + $0x8] sm:$0xff]
    %v2157 = vld [vmem:[#allocation11 + $0x10] sm:$0xff]
    %v2158 = vld [vmem:[#allocation11 + $0x18] sm:$0xff]
    %v2159 = vld [vmem:[#allocation11 + $0x20] sm:$0xff]
    %v2160 = vld [vmem:[#allocation11 + $0x28] sm:$0xff]
    %v2161 = vld [vmem:[#allocation11 + $0x30] sm:$0xff]
    %v2162 = vld [vmem:[#allocation11 + $0x38] sm:$0xff]
    %v2163 = vld [vmem:[#allocation11 + $0x40] sm:$0xff]
    %v2164 = vld [vmem:[#allocation11 + $0x48] sm:$0xff]
    %v2165 = vld [vmem:[#allocation11 + $0x50] sm:$0xff]
    %v2166 = vld [vmem:[#allocation11 + $0x58] sm:$0xff]
    %v2167 = vld [vmem:[#allocation11 + $0x60] sm:$0xff]
    %v2168 = vld [vmem:[#allocation11 + $0x68] sm:$0xff]
    %v2169 = vld [vmem:[#allocation11 + $0x70] sm:$0xff]
    %v2170 = vld [vmem:[#allocation11 + $0x78] sm:$0xff]
    %v2171 = vld [vmem:[#allocation11 + $0x80] sm:$0xff]
    %v2172 = vld [vmem:[#allocation11 + $0x88] sm:$0xff]
    %2173 = vmatprep.subr.mxu0 0.0
    %2174 = vmatpush1.msra.mxu0 %v2155
    %2175 = vmatprep.subr.mxu0 0.0
    %2176 = vmatpush1.msra.mxu0 %v2156
    %2177 = vmatprep.subr.mxu0 0.0
    %2178 = vmatpush1.msra.mxu0 %v2157
    %2179 = vmatprep.subr.mxu0 0.0
    %2180 = vmatpush1.msra.mxu0 %v2158
    %2181 = vmatprep.subr.mxu0 0.0
    %2182 = vmatpush1.msra.mxu0 %v2159
    %2183 = vmatprep.subr.mxu0 0.0
    %2184 = vmatpush1.msra.mxu0 %v2160
    %2185 = vmatprep.subr.mxu0 0.0
    %2186 = vmatpush1.msra.mxu0 %v2161
    %2187 = vmatprep.subr.mxu0 0.0
    %2188 = vmatpush1.msra.mxu0 %v2162
    %2189 = vmatprep.subr.mxu0 0.0
    %2190 = vmatpush1.msra.mxu0 %v2163
    %2191 = vmatprep.subr.mxu0 0.0
    %2192 = vmatpush1.msra.mxu0 %v2164
    %2193 = vmatprep.subr.mxu0 0.0
    %2194 = vmatpush1.msra.mxu0 %v2165
    %2195 = vmatprep.subr.mxu0 0.0
    %2196 = vmatpush1.msra.mxu0 %v2166
    %2197 = vmatprep.subr.mxu0 0.0
    %2198 = vmatpush1.msra.mxu0 %v2167
    %2199 = vmatprep.subr.mxu0 0.0
    %2200 = vmatpush1.msra.mxu0 %v2168
    %2201 = vmatprep.subr.mxu0 0.0
    %2202 = vmatpush1.msra.mxu0 %v2169
    %2203 = vmatprep.subr.mxu0 0.0
    %2204 = vmatpush1.msra.mxu0 %v2170
    %2205 = vmatprep.subr.mxu0 0.0
    %2206 = vmatpush1.msra.mxu0 %v2171
    %2207 = vmatprep.subr.mxu0 0.0
    %2208 = vmatpush1.msra.mxu0 %v2172
    %2209 = vmatprep.subr.mxu0 0.0
    %2210 = vmatpush1.msra.mxu0 0.0
    %2211 = vmatprep.subr.mxu0 0.0
    %2212 = vmatpush1.msra.mxu0 0.0
    %2213 = vmatprep.subr.mxu0 0.0
    %2214 = vmatpush1.msra.mxu0 0.0
    %2215 = vmatprep.subr.mxu0 0.0
    %2216 = vmatpush1.msra.mxu0 0.0
    %2217 = vmatprep.subr.mxu0 0.0
    %2218 = vmatpush1.msra.mxu0 0.0
    %2219 = vmatprep.subr.mxu0 0.0
    %2220 = vmatpush1.msra.mxu0 0.0
    %2221 = vmatprep.subr.mxu0 0.0
    %2222 = vmatpush1.msra.mxu0 0.0
    %2223 = vmatprep.subr.mxu0 0.0
    %2224 = vmatpush1.msra.mxu0 0.0
    %2225 = vmatprep.subr.mxu0 0.0
    %2226 = vmatpush1.msra.mxu0 0.0
    %2227 = vmatprep.subr.mxu0 0.0
    %2228 = vmatpush1.msra.mxu0 0.0
    %2229 = vmatprep.subr.mxu0 0.0
    %2230 = vmatpush1.msra.mxu0 0.0
    %2231 = vmatprep.subr.mxu0 0.0
    %2232 = vmatpush1.msra.mxu0 0.0
    %2233 = vmatprep.subr.mxu0 0.0
    %2234 = vmatpush1.msra.mxu0 0.0
    %2235 = vmatprep.subr.mxu0 0.0
    %2236 = vmatpush1.msra.mxu0 0.0
    %2237 = vmatprep.mubr.f32.mxu0 %v2067
    %2238 = vmatmul.mubr.f32.gmra.mrb[0].mxu0 %v2042
    %v2239 = vpop.f32.mrb[0].mxu0
    %v2240 = vadd.f32 0.0, %v2239
    %v2241 = vpop.f32.mrb[0].mxu0
    %2242 = vmatprep.mubr.f32.mxu0 %v2070
    %2243 = vmatmul.mubr.f32.gmra.mrb[0].mxu0 %v2044
    %v2244 = vpop.f32.mrb[0].mxu0
    %v2245 = vadd.f32 0.0, %v2244
    %v2246 = vpop.f32.mrb[0].mxu0
    %2247 = vmatprep.mubr.f32.mxu0 %v2073
    %2248 = vmatmul.mubr.f32.gmra.mrb[0].mxu0 %v2046
    %v2249 = vpop.f32.mrb[0].mxu0
    %v2250 = vadd.f32 0.0, %v2249
    %v2251 = vpop.f32.mrb[0].mxu0
    %2252 = vdwg.mxu0
    %v2253 = vmax.f32 %v2142, %v2240
    %v2254 = vmax.f32 %v2147, %v2245
    %v2255 = vmax.f32 %v2152, %v2250
    %v2259 = vcombine.high %v2253, %v2253
    %v2261 = vunpack.c.l.s4 1983009808
    %v2262 = vunpack.c.0.s8 %v2261
    %v2263 = vlaneseq
    %v2264 = vshrl.u32 %v2263, 7
    %v2265 = vsub.s32 %v2262, %v2264
    %v2266 = vrot.slane %v2253, %v2265
    %v2268 = vunpack.c.l.s4 1983009808
    %v2269 = vunpack.c.0.s8 %v2268
    %v2270 = vlaneseq
    %v2271 = vshrl.u32 %v2270, 7
    %v2272 = vsub.s32 %v2269, %v2271
    %v2273 = vrot.slane %v2259, %v2272
    %v2274 = vcombine.high %v2266, %v2266
    %v2275 = vcombine.high %v2273, %v2273
    %v2276 = vcombine.high %v2254, %v2254
    %v2278 = vunpack.c.l.s4 1983009808
    %v2279 = vunpack.c.0.s8 %v2278
    %v2280 = vlaneseq
    %v2281 = vshrl.u32 %v2280, 7
    %v2282 = vsub.s32 %v2279, %v2281
    %v2283 = vrot.slane %v2254, %v2282
    %v2285 = vunpack.c.l.s4 1983009808
    %v2286 = vunpack.c.0.s8 %v2285
    %v2287 = vlaneseq
    %v2288 = vshrl.u32 %v2287, 7
    %v2289 = vsub.s32 %v2286, %v2288
    %v2290 = vrot.slane %v2276, %v2289
    %v2291 = vcombine.high %v2283, %v2283
    %v2292 = vcombine.high %v2290, %v2290
    %v2293 = vcombine.high %v2255, %v2255
    %v2295 = vunpack.c.l.s4 1983009808
    %v2296 = vunpack.c.0.s8 %v2295
    %v2297 = vlaneseq
    %v2298 = vshrl.u32 %v2297, 7
    %v2299 = vsub.s32 %v2296, %v2298
    %v2300 = vrot.slane %v2255, %v2299
    %v2302 = vunpack.c.l.s4 1983009808
    %v2303 = vunpack.c.0.s8 %v2302
    %v2304 = vlaneseq
    %v2305 = vshrl.u32 %v2304, 7
    %v2306 = vsub.s32 %v2303, %v2305
    %v2307 = vrot.slane %v2293, %v2306
    %v2308 = vcombine.high %v2300, %v2300
    %v2309 = vcombine.high %v2307, %v2307
    %v2322 = vsel %vm1531, %v2266, -inf
    %v2323 = vsel %vm1531, %v2274, -inf
    %v2324 = vmax.f32 %v2322, %v2323
    %v2325 = vsel %vm1531, %v2273, -inf
    %v2326 = vsel %vm1531, %v2275, -inf
    %v2327 = vmax.f32 %v2325, %v2326
    %v2328 = vsel %vm1531, %v2283, -inf
    %v2329 = vsel %vm1531, %v2291, -inf
    %v2330 = vmax.f32 %v2328, %v2329
    %v2331 = vsel %vm1531, %v2290, -inf
    %v2332 = vsel %vm1531, %v2292, -inf
    %v2333 = vmax.f32 %v2331, %v2332
    %v2334 = vsel %vm1531, %v2300, -inf
    %v2335 = vsel %vm1531, %v2308, -inf
    %v2336 = vmax.f32 %v2334, %v2335
    %v2337 = vsel %vm1531, %v2307, -inf
    %v2338 = vsel %vm1531, %v2309, -inf
    %v2339 = vmax.f32 %v2337, %v2338
    %v2340 = vld [vmem:[#allocation13] sm:$0xff]
    %v2341 = vld [vmem:[#allocation13 + $0x8] sm:$0xff]
    %v2342 = vld [vmem:[#allocation13 + $0x10] sm:$0xff]
    %v2343 = vld [vmem:[#allocation13 + $0x18] sm:$0xff]
    %v2344 = vld [vmem:[#allocation13 + $0x20] sm:$0xff]
    %v2345 = vld [vmem:[#allocation13 + $0x28] sm:$0xff]
    %v2346 = vld [vmem:[#allocation13 + $0x30] sm:$0xff]
    %v2347 = vld [vmem:[#allocation13 + $0x38] sm:$0xff]
    %v2348 = vld [vmem:[#allocation13 + $0x40] sm:$0xff]
    %s2349 = scalar_lea.vmem [#allocation13], 72
    %v2350 = vld [vmem:[%s2349] sm:$0xff]
    %v2351 = vld [vmem:[%s2349 + $0x8] sm:$0xff]
    %v2352 = vld [vmem:[%s2349 + $0x10] sm:$0xff]
    %v2353 = vld [vmem:[%s2349 + $0x18] sm:$0xff]
    %v2354 = vld [vmem:[%s2349 + $0x20] sm:$0xff]
    %v2355 = vld [vmem:[%s2349 + $0x28] sm:$0xff]
    %v2356 = vld [vmem:[%s2349 + $0x30] sm:$0xff]
    %v2357 = vld [vmem:[%s2349 + $0x38] sm:$0xff]
    %v2358 = vld [vmem:[%s2349 + $0x40] sm:$0xff]
    %v2360 = vsel %vm1668, %v2327, 0
    %2362 = vmatprep.subr.mxu0 0.0
    %2363 = vmatpush1.msra.mxu0 %v2350
    %2364 = vmatprep.subr.mxu0 0.0
    %2365 = vmatpush1.msra.mxu0 %v2351
    %2366 = vmatprep.subr.mxu0 0.0
    %2367 = vmatpush1.msra.mxu0 %v2352
    %2368 = vmatprep.subr.mxu0 0.0
    %2369 = vmatpush1.msra.mxu0 %v2353
    %2370 = vmatprep.subr.mxu0 0.0
    %2371 = vmatpush1.msra.mxu0 %v2354
    %2372 = vmatprep.subr.mxu0 0.0
    %2373 = vmatpush1.msra.mxu0 %v2355
    %2374 = vmatprep.subr.mxu0 0.0
    %2375 = vmatpush1.msra.mxu0 %v2356
    %2376 = vmatprep.subr.mxu0 0.0
    %2377 = vmatpush1.msra.mxu0 %v2357
    %2378 = vmatprep.subr.mxu0 0.0
    %2379 = vmatpush1.msra.mxu0 %v2358
    %2380 = vmatprep.subr.mxu0 0.0
    %2381 = vmatpush1.msra.mxu0 0.0
    %2382 = vmatprep.subr.mxu0 0.0
    %2383 = vmatpush1.msra.mxu0 0.0
    %2384 = vmatprep.subr.mxu0 0.0
    %2385 = vmatpush1.msra.mxu0 0.0
    %2386 = vmatprep.subr.mxu0 0.0
    %2387 = vmatpush1.msra.mxu0 0.0
    %2388 = vmatprep.subr.mxu0 0.0
    %2389 = vmatpush1.msra.mxu0 0.0
    %2390 = vmatprep.subr.mxu0 0.0
    %2391 = vmatpush1.msra.mxu0 0.0
    %2392 = vmatprep.subr.mxu0 0.0
    %2393 = vmatpush1.msra.mxu0 0.0
    %2394 = vmatprep.subr.mxu0 0.0
    %2395 = vmatpush1.msra.mxu0 0.0
    %2396 = vmatprep.subr.mxu0 0.0
    %2397 = vmatpush1.msra.mxu0 0.0
    %2398 = vmatprep.subr.mxu0 0.0
    %2399 = vmatpush1.msra.mxu0 0.0
    %2400 = vmatprep.subr.mxu0 0.0
    %2401 = vmatpush1.msra.mxu0 0.0
    %2402 = vmatprep.subr.mxu0 0.0
    %2403 = vmatpush1.msra.mxu0 0.0
    %2404 = vmatprep.subr.mxu0 0.0
    %2405 = vmatpush1.msra.mxu0 0.0
    %2406 = vmatprep.subr.mxu0 0.0
    %2407 = vmatpush1.msra.mxu0 0.0
    %2408 = vmatprep.subr.mxu0 0.0
    %2409 = vmatpush1.msra.mxu0 0.0
    %2410 = vmatprep.subr.mxu0 0.0
    %2411 = vmatpush1.msra.mxu0 0.0
    %2412 = vmatprep.subr.mxu0 0.0
    %2413 = vmatpush1.msra.mxu0 0.0
    %2414 = vmatprep.subr.mxu0 0.0
    %2415 = vmatpush1.msra.mxu0 0.0
    %2416 = vmatprep.subr.mxu0 0.0
    %2417 = vmatpush1.msra.mxu0 0.0
    %2418 = vmatprep.subr.mxu0 0.0
    %2419 = vmatpush1.msra.mxu0 0.0
    %2420 = vmatprep.subr.mxu0 0.0
    %2421 = vmatpush1.msra.mxu0 0.0
    %2422 = vmatprep.subr.mxu0 0.0
    %2423 = vmatpush1.msra.mxu0 0.0
    %2424 = vmatprep.subr.mxu0 0.0
    %2425 = vmatpush1.msra.mxu0 0.0
    %2426 = vmatprep.mubr.f32.mxu0 0.0
    %2427 = vmatmul.mubr.f32.gmra.mrb[0].mxu0 %v2360
    %v2428 = vpop.f32.mrb[0].mxu0
    %v2429 = vadd.f32 0.0, %v2428
    %v2430 = vpop.f32.mrb[0].mxu0
    %2431 = vdwg.mxu0
    %v2433 = vsel %vm1668, %v2324, 0
    %2435 = vmatprep.subr.mxu0 0.0
    %2436 = vmatpush1.msra.mxu0 %v2340
    %2437 = vmatprep.subr.mxu0 0.0
    %2438 = vmatpush1.msra.mxu0 %v2341
    %2439 = vmatprep.subr.mxu0 0.0
    %2440 = vmatpush1.msra.mxu0 %v2342
    %2441 = vmatprep.subr.mxu0 0.0
    %2442 = vmatpush1.msra.mxu0 %v2343
    %2443 = vmatprep.subr.mxu0 0.0
    %2444 = vmatpush1.msra.mxu0 %v2344
    %2445 = vmatprep.subr.mxu0 0.0
    %2446 = vmatpush1.msra.mxu0 %v2345
    %2447 = vmatprep.subr.mxu0 0.0
    %2448 = vmatpush1.msra.mxu0 %v2346
    %2449 = vmatprep.subr.mxu0 0.0
    %2450 = vmatpush1.msra.mxu0 %v2347
    %2451 = vmatprep.subr.mxu0 0.0
    %2452 = vmatpush1.msra.mxu0 %v2348
    %2453 = vmatprep.subr.mxu0 0.0
    %2454 = vmatpush1.msra.mxu0 0.0
    %2455 = vmatprep.subr.mxu0 0.0
    %2456 = vmatpush1.msra.mxu0 0.0
    %2457 = vmatprep.subr.mxu0 0.0
    %2458 = vmatpush1.msra.mxu0 0.0
    %2459 = vmatprep.subr.mxu0 0.0
    %2460 = vmatpush1.msra.mxu0 0.0
    %2461 = vmatprep.subr.mxu0 0.0
    %2462 = vmatpush1.msra.mxu0 0.0
    %2463 = vmatprep.subr.mxu0 0.0
    %2464 = vmatpush1.msra.mxu0 0.0
    %2465 = vmatprep.subr.mxu0 0.0
    %2466 = vmatpush1.msra.mxu0 0.0
    %2467 = vmatprep.subr.mxu0 0.0
    %2468 = vmatpush1.msra.mxu0 0.0
    %2469 = vmatprep.subr.mxu0 0.0
    %2470 = vmatpush1.msra.mxu0 0.0
    %2471 = vmatprep.subr.mxu0 0.0
    %2472 = vmatpush1.msra.mxu0 0.0
    %2473 = vmatprep.subr.mxu0 0.0
    %2474 = vmatpush1.msra.mxu0 0.0
    %2475 = vmatprep.subr.mxu0 0.0
    %2476 = vmatpush1.msra.mxu0 0.0
    %2477 = vmatprep.subr.mxu0 0.0
    %2478 = vmatpush1.msra.mxu0 0.0
    %2479 = vmatprep.subr.mxu0 0.0
    %2480 = vmatpush1.msra.mxu0 0.0
    %2481 = vmatprep.subr.mxu0 0.0
    %2482 = vmatpush1.msra.mxu0 0.0
    %2483 = vmatprep.subr.mxu0 0.0
    %2484 = vmatpush1.msra.mxu0 0.0
    %2485 = vmatprep.subr.mxu0 0.0
    %2486 = vmatpush1.msra.mxu0 0.0
    %2487 = vmatprep.subr.mxu0 0.0
    %2488 = vmatpush1.msra.mxu0 0.0
    %2489 = vmatprep.subr.mxu0 0.0
    %2490 = vmatpush1.msra.mxu0 0.0
    %2491 = vmatprep.subr.mxu0 0.0
    %2492 = vmatpush1.msra.mxu0 0.0
    %2493 = vmatprep.subr.mxu0 0.0
    %2494 = vmatpush1.msra.mxu0 0.0
    %2495 = vmatprep.subr.mxu0 0.0
    %2496 = vmatpush1.msra.mxu0 0.0
    %2497 = vmatprep.subr.mxu0 0.0
    %2498 = vmatpush1.msra.mxu0 0.0
    %2499 = vmatprep.mubr.f32.mxu0 0.0
    %2500 = vmatmul.mubr.f32.gmra.mrb[0].mxu0 %v2433
    %v2501 = vpop.f32.mrb[0].mxu0
    %v2502 = vadd.f32 %v2429, %v2501
    %v2503 = vpop.f32.mrb[0].mxu0
    %2504 = vdwg.mxu0
    %s2505 = scalar_lea.vmem [#allocation13], 144
    %v2506 = vld [vmem:[%s2505] sm:$0xff]
    %v2507 = vld [vmem:[%s2505 + $0x8] sm:$0xff]
    %v2508 = vld [vmem:[%s2505 + $0x10] sm:$0xff]
    %v2509 = vld [vmem:[%s2505 + $0x18] sm:$0xff]
    %v2510 = vld [vmem:[%s2505 + $0x20] sm:$0xff]
    %v2511 = vld [vmem:[%s2505 + $0x28] sm:$0xff]
    %v2512 = vld [vmem:[%s2505 + $0x30] sm:$0xff]
    %v2513 = vld [vmem:[%s2505 + $0x38] sm:$0xff]
    %v2514 = vld [vmem:[%s2505 + $0x40] sm:$0xff]
    %v2516 = vsel %vm1668, %v2330, 0
    %2518 = vmatprep.subr.mxu0 0.0
    %2519 = vmatpush1.msra.mxu0 %v2506
    %2520 = vmatprep.subr.mxu0 0.0
    %2521 = vmatpush1.msra.mxu0 %v2507
    %2522 = vmatprep.subr.mxu0 0.0
    %2523 = vmatpush1.msra.mxu0 %v2508
    %2524 = vmatprep.subr.mxu0 0.0
    %2525 = vmatpush1.msra.mxu0 %v2509
    %2526 = vmatprep.subr.mxu0 0.0
    %2527 = vmatpush1.msra.mxu0 %v2510
    %2528 = vmatprep.subr.mxu0 0.0
    %2529 = vmatpush1.msra.mxu0 %v2511
    %2530 = vmatprep.subr.mxu0 0.0
    %2531 = vmatpush1.msra.mxu0 %v2512
    %2532 = vmatprep.subr.mxu0 0.0
    %2533 = vmatpush1.msra.mxu0 %v2513
    %2534 = vmatprep.subr.mxu0 0.0
    %2535 = vmatpush1.msra.mxu0 %v2514
    %2536 = vmatprep.subr.mxu0 0.0
    %2537 = vmatpush1.msra.mxu0 0.0
    %2538 = vmatprep.subr.mxu0 0.0
    %2539 = vmatpush1.msra.mxu0 0.0
    %2540 = vmatprep.subr.mxu0 0.0
    %2541 = vmatpush1.msra.mxu0 0.0
    %2542 = vmatprep.subr.mxu0 0.0
    %2543 = vmatpush1.msra.mxu0 0.0
    %2544 = vmatprep.subr.mxu0 0.0
    %2545 = vmatpush1.msra.mxu0 0.0
    %2546 = vmatprep.subr.mxu0 0.0
    %2547 = vmatpush1.msra.mxu0 0.0
    %2548 = vmatprep.subr.mxu0 0.0
    %2549 = vmatpush1.msra.mxu0 0.0
    %2550 = vmatprep.subr.mxu0 0.0
    %2551 = vmatpush1.msra.mxu0 0.0
    %2552 = vmatprep.subr.mxu0 0.0
    %2553 = vmatpush1.msra.mxu0 0.0
    %2554 = vmatprep.subr.mxu0 0.0
    %2555 = vmatpush1.msra.mxu0 0.0
    %2556 = vmatprep.subr.mxu0 0.0
    %2557 = vmatpush1.msra.mxu0 0.0
    %2558 = vmatprep.subr.mxu0 0.0
    %2559 = vmatpush1.msra.mxu0 0.0
    %2560 = vmatprep.subr.mxu0 0.0
    %2561 = vmatpush1.msra.mxu0 0.0
    %2562 = vmatprep.subr.mxu0 0.0
    %2563 = vmatpush1.msra.mxu0 0.0
    %2564 = vmatprep.subr.mxu0 0.0
    %2565 = vmatpush1.msra.mxu0 0.0
    %2566 = vmatprep.subr.mxu0 0.0
    %2567 = vmatpush1.msra.mxu0 0.0
    %2568 = vmatprep.subr.mxu0 0.0
    %2569 = vmatpush1.msra.mxu0 0.0
    %2570 = vmatprep.subr.mxu0 0.0
    %2571 = vmatpush1.msra.mxu0 0.0
    %2572 = vmatprep.subr.mxu0 0.0
    %2573 = vmatpush1.msra.mxu0 0.0
    %2574 = vmatprep.subr.mxu0 0.0
    %2575 = vmatpush1.msra.mxu0 0.0
    %2576 = vmatprep.subr.mxu0 0.0
    %2577 = vmatpush1.msra.mxu0 0.0
    %2578 = vmatprep.subr.mxu0 0.0
    %2579 = vmatpush1.msra.mxu0 0.0
    %2580 = vmatprep.subr.mxu0 0.0
    %2581 = vmatpush1.msra.mxu0 0.0
    %2582 = vmatprep.mubr.f32.mxu0 0.0
    %2583 = vmatmul.mubr.f32.gmra.mrb[0].mxu0 %v2516
    %v2584 = vpop.f32.mrb[0].mxu0
    %v2585 = vadd.f32 0.0, %v2584
    %v2586 = vpop.f32.mrb[0].mxu0
    %2587 = vdwg.mxu0
    %v2588 = vadd.f32 %v2502, %v2585
    %s2589 = scalar_lea.vmem [#allocation13], 216
    %v2590 = vld [vmem:[%s2589] sm:$0xff]
    %v2591 = vld [vmem:[%s2589 + $0x8] sm:$0xff]
    %v2592 = vld [vmem:[%s2589 + $0x10] sm:$0xff]
    %v2593 = vld [vmem:[%s2589 + $0x18] sm:$0xff]
    %v2594 = vld [vmem:[%s2589 + $0x20] sm:$0xff]
    %v2595 = vld [vmem:[%s2589 + $0x28] sm:$0xff]
    %v2596 = vld [vmem:[%s2589 + $0x30] sm:$0xff]
    %v2597 = vld [vmem:[%s2589 + $0x38] sm:$0xff]
    %v2598 = vld [vmem:[%s2589 + $0x40] sm:$0xff]
    %v2600 = vsel %vm1668, %v2333, 0
    %2602 = vmatprep.subr.mxu0 0.0
    %2603 = vmatpush1.msra.mxu0 %v2590
    %2604 = vmatprep.subr.mxu0 0.0
    %2605 = vmatpush1.msra.mxu0 %v2591
    %2606 = vmatprep.subr.mxu0 0.0
    %2607 = vmatpush1.msra.mxu0 %v2592
    %2608 = vmatprep.subr.mxu0 0.0
    %2609 = vmatpush1.msra.mxu0 %v2593
    %2610 = vmatprep.subr.mxu0 0.0
    %2611 = vmatpush1.msra.mxu0 %v2594
    %2612 = vmatprep.subr.mxu0 0.0
    %2613 = vmatpush1.msra.mxu0 %v2595
    %2614 = vmatprep.subr.mxu0 0.0
    %2615 = vmatpush1.msra.mxu0 %v2596
    %2616 = vmatprep.subr.mxu0 0.0
    %2617 = vmatpush1.msra.mxu0 %v2597
    %2618 = vmatprep.subr.mxu0 0.0
    %2619 = vmatpush1.msra.mxu0 %v2598
    %2620 = vmatprep.subr.mxu0 0.0
    %2621 = vmatpush1.msra.mxu0 0.0
    %2622 = vmatprep.subr.mxu0 0.0
    %2623 = vmatpush1.msra.mxu0 0.0
    %2624 = vmatprep.subr.mxu0 0.0
    %2625 = vmatpush1.msra.mxu0 0.0
    %2626 = vmatprep.subr.mxu0 0.0
    %2627 = vmatpush1.msra.mxu0 0.0
    %2628 = vmatprep.subr.mxu0 0.0
    %2629 = vmatpush1.msra.mxu0 0.0
    %2630 = vmatprep.subr.mxu0 0.0
    %2631 = vmatpush1.msra.mxu0 0.0
    %2632 = vmatprep.subr.mxu0 0.0
    %2633 = vmatpush1.msra.mxu0 0.0
    %2634 = vmatprep.subr.mxu0 0.0
    %2635 = vmatpush1.msra.mxu0 0.0
    %2636 = vmatprep.subr.mxu0 0.0
    %2637 = vmatpush1.msra.mxu0 0.0
    %2638 = vmatprep.subr.mxu0 0.0
    %2639 = vmatpush1.msra.mxu0 0.0
    %2640 = vmatprep.subr.mxu0 0.0
    %2641 = vmatpush1.msra.mxu0 0.0
    %2642 = vmatprep.subr.mxu0 0.0
    %2643 = vmatpush1.msra.mxu0 0.0
    %2644 = vmatprep.subr.mxu0 0.0
    %2645 = vmatpush1.msra.mxu0 0.0
    %2646 = vmatprep.subr.mxu0 0.0
    %2647 = vmatpush1.msra.mxu0 0.0
    %2648 = vmatprep.subr.mxu0 0.0
    %2649 = vmatpush1.msra.mxu0 0.0
    %2650 = vmatprep.subr.mxu0 0.0
    %2651 = vmatpush1.msra.mxu0 0.0
    %2652 = vmatprep.subr.mxu0 0.0
    %2653 = vmatpush1.msra.mxu0 0.0
    %2654 = vmatprep.subr.mxu0 0.0
    %2655 = vmatpush1.msra.mxu0 0.0
    %2656 = vmatprep.subr.mxu0 0.0
    %2657 = vmatpush1.msra.mxu0 0.0
    %2658 = vmatprep.subr.mxu0 0.0
    %2659 = vmatpush1.msra.mxu0 0.0
    %2660 = vmatprep.subr.mxu0 0.0
    %2661 = vmatpush1.msra.mxu0 0.0
    %2662 = vmatprep.subr.mxu0 0.0
    %2663 = vmatpush1.msra.mxu0 0.0
    %2664 = vmatprep.subr.mxu0 0.0
    %2665 = vmatpush1.msra.mxu0 0.0
    %2666 = vmatprep.mubr.f32.mxu0 0.0
    %2667 = vmatmul.mubr.f32.gmra.mrb[0].mxu0 %v2600
    %v2668 = vpop.f32.mrb[0].mxu0
    %v2669 = vadd.f32 0.0, %v2668
    %v2670 = vpop.f32.mrb[0].mxu0
    %2671 = vdwg.mxu0
    %v2672 = vadd.f32 %v2588, %v2669
    %s2673 = scalar_lea.vmem [#allocation13], 288
    %v2674 = vld [vmem:[%s2673] sm:$0xff]
    %v2675 = vld [vmem:[%s2673 + $0x8] sm:$0xff]
    %v2676 = vld [vmem:[%s2673 + $0x10] sm:$0xff]
    %v2677 = vld [vmem:[%s2673 + $0x18] sm:$0xff]
    %v2678 = vld [vmem:[%s2673 + $0x20] sm:$0xff]
    %v2679 = vld [vmem:[%s2673 + $0x28] sm:$0xff]
    %v2680 = vld [vmem:[%s2673 + $0x30] sm:$0xff]
    %v2681 = vld [vmem:[%s2673 + $0x38] sm:$0xff]
    %v2682 = vld [vmem:[%s2673 + $0x40] sm:$0xff]
    %v2684 = vsel %vm1668, %v2336, 0
    %2686 = vmatprep.subr.mxu0 0.0
    %2687 = vmatpush1.msra.mxu0 %v2674
    %2688 = vmatprep.subr.mxu0 0.0
    %2689 = vmatpush1.msra.mxu0 %v2675
    %2690 = vmatprep.subr.mxu0 0.0
    %2691 = vmatpush1.msra.mxu0 %v2676
    %2692 = vmatprep.subr.mxu0 0.0
    %2693 = vmatpush1.msra.mxu0 %v2677
    %2694 = vmatprep.subr.mxu0 0.0
    %2695 = vmatpush1.msra.mxu0 %v2678
    %2696 = vmatprep.subr.mxu0 0.0
    %2697 = vmatpush1.msra.mxu0 %v2679
    %2698 = vmatprep.subr.mxu0 0.0
    %2699 = vmatpush1.msra.mxu0 %v2680
    %2700 = vmatprep.subr.mxu0 0.0
    %2701 = vmatpush1.msra.mxu0 %v2681
    %2702 = vmatprep.subr.mxu0 0.0
    %2703 = vmatpush1.msra.mxu0 %v2682
    %2704 = vmatprep.subr.mxu0 0.0
    %2705 = vmatpush1.msra.mxu0 0.0
    %2706 = vmatprep.subr.mxu0 0.0
    %2707 = vmatpush1.msra.mxu0 0.0
    %2708 = vmatprep.subr.mxu0 0.0
    %2709 = vmatpush1.msra.mxu0 0.0
    %2710 = vmatprep.subr.mxu0 0.0
    %2711 = vmatpush1.msra.mxu0 0.0
    %2712 = vmatprep.subr.mxu0 0.0
    %2713 = vmatpush1.msra.mxu0 0.0
    %2714 = vmatprep.subr.mxu0 0.0
    %2715 = vmatpush1.msra.mxu0 0.0
    %2716 = vmatprep.subr.mxu0 0.0
    %2717 = vmatpush1.msra.mxu0 0.0
    %2718 = vmatprep.subr.mxu0 0.0
    %2719 = vmatpush1.msra.mxu0 0.0
    %2720 = vmatprep.subr.mxu0 0.0
    %2721 = vmatpush1.msra.mxu0 0.0
    %2722 = vmatprep.subr.mxu0 0.0
    %2723 = vmatpush1.msra.mxu0 0.0
    %2724 = vmatprep.subr.mxu0 0.0
    %2725 = vmatpush1.msra.mxu0 0.0
    %2726 = vmatprep.subr.mxu0 0.0
    %2727 = vmatpush1.msra.mxu0 0.0
    %2728 = vmatprep.subr.mxu0 0.0
    %2729 = vmatpush1.msra.mxu0 0.0
    %2730 = vmatprep.subr.mxu0 0.0
    %2731 = vmatpush1.msra.mxu0 0.0
    %2732 = vmatprep.subr.mxu0 0.0
    %2733 = vmatpush1.msra.mxu0 0.0
    %2734 = vmatprep.subr.mxu0 0.0
    %2735 = vmatpush1.msra.mxu0 0.0
    %2736 = vmatprep.subr.mxu0 0.0
    %2737 = vmatpush1.msra.mxu0 0.0
    %2738 = vmatprep.subr.mxu0 0.0
    %2739 = vmatpush1.msra.mxu0 0.0
    %2740 = vmatprep.subr.mxu0 0.0
    %2741 = vmatpush1.msra.mxu0 0.0
    %2742 = vmatprep.subr.mxu0 0.0
    %2743 = vmatpush1.msra.mxu0 0.0
    %2744 = vmatprep.subr.mxu0 0.0
    %2745 = vmatpush1.msra.mxu0 0.0
    %2746 = vmatprep.subr.mxu0 0.0
    %2747 = vmatpush1.msra.mxu0 0.0
    %2748 = vmatprep.subr.mxu0 0.0
    %2749 = vmatpush1.msra.mxu0 0.0
    %2750 = vmatprep.mubr.f32.mxu0 0.0
    %2751 = vmatmul.mubr.f32.gmra.mrb[0].mxu0 %v2684
    %v2752 = vpop.f32.mrb[0].mxu0
    %v2753 = vadd.f32 0.0, %v2752
    %v2754 = vpop.f32.mrb[0].mxu0
    %2755 = vdwg.mxu0
    %v2756 = vadd.f32 %v2672, %v2753
    %s2757 = scalar_lea.vmem [#allocation13], 360
    %v2758 = vld [vmem:[%s2757] sm:$0xff]
    %v2759 = vld [vmem:[%s2757 + $0x8] sm:$0xff]
    %v2760 = vld [vmem:[%s2757 + $0x10] sm:$0xff]
    %v2761 = vld [vmem:[%s2757 + $0x18] sm:$0xff]
    %v2762 = vld [vmem:[%s2757 + $0x20] sm:$0xff]
    %v2763 = vld [vmem:[%s2757 + $0x28] sm:$0xff]
    %v2764 = vld [vmem:[%s2757 + $0x30] sm:$0xff]
    %v2765 = vld [vmem:[%s2757 + $0x38] sm:$0xff]
    %v2766 = vld [vmem:[%s2757 + $0x40] sm:$0xff]
    %v2768 = vsel %vm1668, %v2339, 0
    %2770 = vmatprep.subr.mxu0 0.0
    %2771 = vmatpush1.msra.mxu0 %v2758
    %2772 = vmatprep.subr.mxu0 0.0
    %2773 = vmatpush1.msra.mxu0 %v2759
    %2774 = vmatprep.subr.mxu0 0.0
    %2775 = vmatpush1.msra.mxu0 %v2760
    %2776 = vmatprep.subr.mxu0 0.0
    %2777 = vmatpush1.msra.mxu0 %v2761
    %2778 = vmatprep.subr.mxu0 0.0
    %2779 = vmatpush1.msra.mxu0 %v2762
    %2780 = vmatprep.subr.mxu0 0.0
    %2781 = vmatpush1.msra.mxu0 %v2763
    %2782 = vmatprep.subr.mxu0 0.0
    %2783 = vmatpush1.msra.mxu0 %v2764
    %2784 = vmatprep.subr.mxu0 0.0
    %2785 = vmatpush1.msra.mxu0 %v2765
    %2786 = vmatprep.subr.mxu0 0.0
    %2787 = vmatpush1.msra.mxu0 %v2766
    %2788 = vmatprep.subr.mxu0 0.0
    %2789 = vmatpush1.msra.mxu0 0.0
    %2790 = vmatprep.subr.mxu0 0.0
    %2791 = vmatpush1.msra.mxu0 0.0
    %2792 = vmatprep.subr.mxu0 0.0
    %2793 = vmatpush1.msra.mxu0 0.0
    %2794 = vmatprep.subr.mxu0 0.0
    %2795 = vmatpush1.msra.mxu0 0.0
    %2796 = vmatprep.subr.mxu0 0.0
    %2797 = vmatpush1.msra.mxu0 0.0
    %2798 = vmatprep.subr.mxu0 0.0
    %2799 = vmatpush1.msra.mxu0 0.0
    %2800 = vmatprep.subr.mxu0 0.0
    %2801 = vmatpush1.msra.mxu0 0.0
    %2802 = vmatprep.subr.mxu0 0.0
    %2803 = vmatpush1.msra.mxu0 0.0
    %2804 = vmatprep.subr.mxu0 0.0
    %2805 = vmatpush1.msra.mxu0 0.0
    %2806 = vmatprep.subr.mxu0 0.0
    %2807 = vmatpush1.msra.mxu0 0.0
    %2808 = vmatprep.subr.mxu0 0.0
    %2809 = vmatpush1.msra.mxu0 0.0
    %2810 = vmatprep.subr.mxu0 0.0
    %2811 = vmatpush1.msra.mxu0 0.0
    %2812 = vmatprep.subr.mxu0 0.0
    %2813 = vmatpush1.msra.mxu0 0.0
    %2814 = vmatprep.subr.mxu0 0.0
    %2815 = vmatpush1.msra.mxu0 0.0
    %2816 = vmatprep.subr.mxu0 0.0
    %2817 = vmatpush1.msra.mxu0 0.0
    %2818 = vmatprep.subr.mxu0 0.0
    %2819 = vmatpush1.msra.mxu0 0.0
    %2820 = vmatprep.subr.mxu0 0.0
    %2821 = vmatpush1.msra.mxu0 0.0
    %2822 = vmatprep.subr.mxu0 0.0
    %2823 = vmatpush1.msra.mxu0 0.0
    %2824 = vmatprep.subr.mxu0 0.0
    %2825 = vmatpush1.msra.mxu0 0.0
    %2826 = vmatprep.subr.mxu0 0.0
    %2827 = vmatpush1.msra.mxu0 0.0
    %2828 = vmatprep.subr.mxu0 0.0
    %2829 = vmatpush1.msra.mxu0 0.0
    %2830 = vmatprep.subr.mxu0 0.0
    %2831 = vmatpush1.msra.mxu0 0.0
    %2832 = vmatprep.subr.mxu0 0.0
    %2833 = vmatpush1.msra.mxu0 0.0
    %2834 = vmatprep.mubr.f32.mxu0 0.0
    %2835 = vmatmul.mubr.f32.gmra.mrb[0].mxu0 %v2768
    %v2836 = vpop.f32.mrb[0].mxu0
    %v2837 = vadd.f32 0.0, %v2836
    %v2838 = vpop.f32.mrb[0].mxu0
    %2839 = vdwg.mxu0
    %v2840 = vadd.f32 %v2756, %v2837
    %v2841 = vld [vmem:[%s10] sm:$0x1]
    %v2843 = vlaneseq
    %v2844 = vshrl.u32 %v2843, 7
    %v2845 = vsub.s32 0, %v2844
    %v2846 = vrot.slane %v2841, %v2845
    %v2848 = vadd.f32 %v2840, %v2846
    %v2849 = vmax.f32 %v2848, 0.0
    %v2850 = vld [vmem:[%s11] sm:$0xff]
    %v2851 = vld [vmem:[%s11 + $0x8] sm:$0xff]
    %v2852 = vld [vmem:[%s11 + $0x10] sm:$0xff]
    %v2853 = vld [vmem:[%s11 + $0x18] sm:$0xff]
    %v2854 = vld [vmem:[%s11 + $0x20] sm:$0xff]
    %v2855 = vld [vmem:[%s11 + $0x28] sm:$0xff]
    %v2856 = vld [vmem:[%s11 + $0x30] sm:$0xff]
    %v2857 = vld [vmem:[%s11 + $0x38] sm:$0xff]
    %v2858 = vld [vmem:[%s11 + $0x40] sm:$0xff]
    %v2859 = vld [vmem:[%s11 + $0x48] sm:$0xff]
    %v2860 = vld [vmem:[%s11 + $0x50] sm:$0xff]
    %v2861 = vld [vmem:[%s11 + $0x58] sm:$0xff]
    %v2862 = vld [vmem:[%s11 + $0x60] sm:$0xff]
    %v2863 = vld [vmem:[%s11 + $0x68] sm:$0xff]
    %v2864 = vld [vmem:[%s11 + $0x70] sm:$0xff]
    %v2865 = vld [vmem:[#allocation14] sm:$0x1]
    %v2867 = vlaneseq
    %v2868 = vshrl.u32 %v2867, 7
    %v2869 = vsub.s32 0, %v2868
    %v2870 = vrot.slane %v2865, %v2869
    %vm2872 = vcmask 982016
    %v2874 = vsel %vm2872, %v2849, 0
    %2876 = vmatprep.subr.mxu0 0.0
    %2877 = vmatpush1.msra.mxu0 %v2850
    %2878 = vmatprep.subr.mxu0 0.0
    %2879 = vmatpush1.msra.mxu0 %v2851
    %2880 = vmatprep.subr.mxu0 0.0
    %2881 = vmatpush1.msra.mxu0 %v2852
    %2882 = vmatprep.subr.mxu0 0.0
    %2883 = vmatpush1.msra.mxu0 %v2853
    %2884 = vmatprep.subr.mxu0 0.0
    %2885 = vmatpush1.msra.mxu0 %v2854
    %2886 = vmatprep.subr.mxu0 0.0
    %2887 = vmatpush1.msra.mxu0 %v2855
    %2888 = vmatprep.subr.mxu0 0.0
    %2889 = vmatpush1.msra.mxu0 %v2856
    %2890 = vmatprep.subr.mxu0 0.0
    %2891 = vmatpush1.msra.mxu0 %v2857
    %2892 = vmatprep.subr.mxu0 0.0
    %2893 = vmatpush1.msra.mxu0 %v2858
    %2894 = vmatprep.subr.mxu0 0.0
    %2895 = vmatpush1.msra.mxu0 %v2859
    %2896 = vmatprep.subr.mxu0 0.0
    %2897 = vmatpush1.msra.mxu0 %v2860
    %2898 = vmatprep.subr.mxu0 0.0
    %2899 = vmatpush1.msra.mxu0 %v2861
    %2900 = vmatprep.subr.mxu0 0.0
    %2901 = vmatpush1.msra.mxu0 %v2862
    %2902 = vmatprep.subr.mxu0 0.0
    %2903 = vmatpush1.msra.mxu0 %v2863
    %2904 = vmatprep.subr.mxu0 0.0
    %2905 = vmatpush1.msra.mxu0 %v2864
    %2906 = vmatprep.subr.mxu0 0.0
    %2907 = vmatpush1.msra.mxu0 0.0
    %2908 = vmatprep.subr.mxu0 0.0
    %2909 = vmatpush1.msra.mxu0 0.0
    %2910 = vmatprep.subr.mxu0 0.0
    %2911 = vmatpush1.msra.mxu0 0.0
    %2912 = vmatprep.subr.mxu0 0.0
    %2913 = vmatpush1.msra.mxu0 0.0
    %2914 = vmatprep.subr.mxu0 0.0
    %2915 = vmatpush1.msra.mxu0 0.0
    %2916 = vmatprep.subr.mxu0 0.0
    %2917 = vmatpush1.msra.mxu0 0.0
    %2918 = vmatprep.subr.mxu0 0.0
    %2919 = vmatpush1.msra.mxu0 0.0
    %2920 = vmatprep.subr.mxu0 0.0
    %2921 = vmatpush1.msra.mxu0 0.0
    %2922 = vmatprep.subr.mxu0 0.0
    %2923 = vmatpush1.msra.mxu0 0.0
    %2924 = vmatprep.subr.mxu0 0.0
    %2925 = vmatpush1.msra.mxu0 0.0
    %2926 = vmatprep.subr.mxu0 0.0
    %2927 = vmatpush1.msra.mxu0 0.0
    %2928 = vmatprep.subr.mxu0 0.0
    %2929 = vmatpush1.msra.mxu0 0.0
    %2930 = vmatprep.subr.mxu0 0.0
    %2931 = vmatpush1.msra.mxu0 0.0
    %2932 = vmatprep.subr.mxu0 0.0
    %2933 = vmatpush1.msra.mxu0 0.0
    %2934 = vmatprep.subr.mxu0 0.0
    %2935 = vmatpush1.msra.mxu0 0.0
    %2936 = vmatprep.subr.mxu0 0.0
    %2937 = vmatpush1.msra.mxu0 0.0
    %2938 = vmatprep.subr.mxu0 0.0
    %2939 = vmatpush1.msra.mxu0 0.0
    %2940 = vmatprep.mubr.f32.mxu0 0.0
    %2941 = vmatmul.mubr.f32.gmra.mrb[0].mxu0 %v2874
    %v2942 = vpop.f32.mrb[0].mxu0
    %v2943 = vadd.f32 %v2870, %v2942
    %v2944 = vpop.f32.mrb[0].mxu0
    %2945 = vdwg.mxu0
    %vm2946 = vcmask 74752
    %2947 = vst.msk [vmem:[#allocation16] sm:$0x3] %vm2946, %v2943
    // Predicated region
    $region86: #{convnetwork_forward.1} parent=1 // pred_check
      _
    $region87: #{convnetwork_forward.1} parent=1 // pred_check_branch
      %2949 = sbr.rel (0) target = $region89
    $region88: #{convnetwork_forward.1} parent=1 // pred_region
      %s2951 = ssub.s32 32, 32
      %2952 = vsyncadd [#allocation4], %s2951
      %s2954 = sshll.u32 [#allocation16], 4
      %s2955 = int_to_ptr.vmem [resolvable:$true] %s2954
      %2957 = dma.vmem_to_hbm [thread:$0]  %s2955, 32, %s13, [#allocation4]
    $region89: #{convnetwork_forward.1} parent=1 // pred_fallthru
      _
    // Predicated region
    $region90: #{convnetwork_forward.1} parent=1 // pred_check
      _
    $region91: #{convnetwork_forward.1} parent=1 // pred_check_branch
      %2959 = sbr.rel (0) target = $region93
    $region92: #{convnetwork_forward.1} parent=1 // pred_region
      %2960 = dma.done [#allocation4], 32
    $region93: #{convnetwork_forward.1} parent=1 // pred_fallthru
      _
    %2961 = vsyncpa [#allocation3], 1
    %2962 = vsyncpa [#allocation6], 1
    %2963 = vsyncpa [#allocation9], 1
    %2964 = vsyncpa [#allocation12], 1
    %2965 = vsyncpa [#allocation15], 1
    %2966 = vsyncpa [#allocation4], 1

</llo_original>
